<compile_context>
chip_gen: v7x
topology: tpu7x:2x2x1
jax: 0.10.0
libtpu: 0.0.40
codegen_flags: <defaults>
</compile_context>

<pallas_src>
import jax
import jax.numpy as jnp
from jax import lax
from jax.experimental import pallas as pl
from jax.experimental.pallas import tpu as pltpu


def _chatbot_kernel(idx_ref, emb_ref,
                    wih_r_ref, wih_z_ref, wih_n_ref,
                    whh_r_ref, whh_z_ref, whh_n_ref,
                    b_r_ref, b_z_ref, b_in_ref, b_hn_ref,
                    wout_ref, bout_ref,
                    out_ref, hid_ref,
                    x_scr, hs_scr):
    S, B = idx_ref.shape
    H = emb_ref.shape[1]

    # ---- embedding gather: scalar indices in SMEM, table resident in VMEM ----
    for t in range(S):
        for b in range(B):
            tok = idx_ref[t, b]                                   # SMEM scalar
            x_scr[pl.ds(t * B + b, 1), :] = emb_ref[pl.ds(tok, 1), :]
    x_all = x_scr[...]                                            # (S*B, H), t-major

    # ---- hoisted input projection: one batched matmul per gate ----
    gi_r = jnp.dot(x_all, wih_r_ref[...], preferred_element_type=jnp.float32) + b_r_ref[...]
    gi_z = jnp.dot(x_all, wih_z_ref[...], preferred_element_type=jnp.float32) + b_z_ref[...]
    gi_n = jnp.dot(x_all, wih_n_ref[...], preferred_element_type=jnp.float32) + b_in_ref[...]

    whh_r = whh_r_ref[...]
    whh_z = whh_z_ref[...]
    whh_n = whh_n_ref[...]
    b_hn = b_hn_ref[...]

    # ---- GRU recurrence: statically unrolled, only h-dependent work inside ----
    h = jnp.zeros((B, H), jnp.float32)
    for t in range(S):
        lo, hi = t * B, (t + 1) * B
        gh_r = jnp.dot(h, whh_r, preferred_element_type=jnp.float32)
        gh_z = jnp.dot(h, whh_z, preferred_element_type=jnp.float32)
        gh_n = jnp.dot(h, whh_n, preferred_element_type=jnp.float32) + b_hn
        r = jax.nn.sigmoid(gi_r[lo:hi] + gh_r)
        z = jax.nn.sigmoid(gi_z[lo:hi] + gh_z)
        n = jnp.tanh(gi_n[lo:hi] + r * gh_n)
        h = (1.0 - z) * n + z * h
        hs_scr[pl.ds(lo, B), :] = h

    # ---- batched output projection, single lane-dense store ----
    hs_all = hs_scr[...]                                          # (S*B, H)
    logits = jnp.dot(hs_all, wout_ref[...], preferred_element_type=jnp.float32) + bout_ref[...]
    out_ref[...] = logits.astype(out_ref.dtype)
    hid_ref[...] = h.astype(hid_ref.dtype)                        # written once


def simple_chatbot_forward(indices, params):
    """indices: (seq, batch) int32.  Returns (output, hidden) like PyTorch:
    output (seq, batch, output_size), hidden (1, batch, hidden_size)."""
    emb_table = params["embedding"]                   # (V, H)
    w_ih, w_hh = params["w_ih"], params["w_hh"]       # (3H, H) each, PyTorch layout
    b_ih, b_hh = params["b_ih"], params["b_hh"]       # (3H,) each
    w_out, b_out = params["w_out"], params["b_out"]   # (O, H), (O,)

    S, B = indices.shape
    H = emb_table.shape[1]
    O = w_out.shape[0]
    O_pad = ((O + 127) // 128) * 128                  # lane-dense logits slab
    f32 = jnp.float32

    # Gate-split, pre-transposed weights (PyTorch GRU gate order: r, z, n).
    wih_r, wih_z, wih_n = w_ih[0:H].T, w_ih[H:2 * H].T, w_ih[2 * H:3 * H].T
    whh_r, whh_z, whh_n = w_hh[0:H].T, w_hh[H:2 * H].T, w_hh[2 * H:3 * H].T
    # Fold biases: r/z biases can be pre-summed; b_hn must stay inside r*(...).
    bias_r = (b_ih[0:H] + b_hh[0:H]).reshape(1, H)
    bias_z = (b_ih[H:2 * H] + b_hh[H:2 * H]).reshape(1, H)
    bias_in = b_ih[2 * H:3 * H].reshape(1, H)
    bias_hn = b_hh[2 * H:3 * H].reshape(1, H)
    # Pad the output projection to a multiple of 128 lanes (single unmasked store).
    wout_t = jnp.zeros((H, O_pad), f32).at[:, :O].set(w_out.T.astype(f32))
    bout = jnp.zeros((1, O_pad), f32).at[:, :O].set(b_out.astype(f32))

    vmem = pl.BlockSpec(memory_space=pltpu.MemorySpace.VMEM)
    smem = pl.BlockSpec(memory_space=pltpu.MemorySpace.SMEM)

    logits_flat, hidden = pl.pallas_call(
        _chatbot_kernel,
        out_shape=(
            jax.ShapeDtypeStruct((S * B, O_pad), f32),
            jax.ShapeDtypeStruct((B, H), f32),
        ),
        in_specs=[smem] + [vmem] * 13,
        out_specs=(vmem, vmem),
        scratch_shapes=[
            pltpu.VMEM((S * B, H), jnp.float32),      # gathered embeddings
            pltpu.VMEM((S * B, H), jnp.float32),      # all hidden states
        ],
    )(indices.astype(jnp.int32), emb_table.astype(f32),
      wih_r, wih_z, wih_n, whh_r, whh_z, whh_n,
      bias_r, bias_z, bias_in, bias_hn, wout_t, bout)

    out = logits_flat.reshape(S, B, O_pad)[:, :, :O]
    return out, hidden.reshape(1, B, H)


def _reference_forward(indices, params):
    """Pure-JAX reference of the PyTorch forward pass (for verification)."""
    emb = jnp.take(params["embedding"], indices, axis=0)   # (S, B, H)
    H = emb.shape[-1]
    w_ih, w_hh = params["w_ih"], params["w_hh"]
    b_ih, b_hh = params["b_ih"], params["b_hh"]

    def step(h, x_t):
        gi = x_t @ w_ih.T + b_ih
        gh = h @ w_hh.T + b_hh
        i_r, i_z, i_n = gi[:, :H], gi[:, H:2 * H], gi[:, 2 * H:]
        h_r, h_z, h_n = gh[:, :H], gh[:, H:2 * H], gh[:, 2 * H:]
        r = jax.nn.sigmoid(i_r + h_r)
        z = jax.nn.sigmoid(i_z + h_z)
        n = jnp.tanh(i_n + r * h_n)
        h_new = (1.0 - z) * n + z * h
        return h_new, h_new

    B = indices.shape[1]
    h0 = jnp.zeros((B, H), jnp.float32)
    h_last, outs = lax.scan(step, h0, emb)
    logits = outs @ params["w_out"].T + params["b_out"]
    return logits, h_last[None]


def make_params(vocab_size, hidden_size, output_size, key):
    ks = jax.random.split(key, 7)
    s = 0.1
    return {
        "embedding": s * jax.random.normal(ks[0], (vocab_size, hidden_size), jnp.float32),
        "w_ih": s * jax.random.normal(ks[1], (3 * hidden_size, hidden_size), jnp.float32),
        "w_hh": s * jax.random.normal(ks[2], (3 * hidden_size, hidden_size), jnp.float32),
        "b_ih": s * jax.random.normal(ks[3], (3 * hidden_size,), jnp.float32),
        "b_hh": s * jax.random.normal(ks[4], (3 * hidden_size,), jnp.float32),
        "w_out": s * jax.random.normal(ks[5], (output_size, hidden_size), jnp.float32),
        "b_out": s * jax.random.normal(ks[6], (output_size,), jnp.float32),
    }


if __name__ == "__main__":
    vocab_size = 20      # input_size
    hidden_size = 32
    output_size = 16
    seq_len = 8
    batch = 2

    key = jax.random.PRNGKey(0)
    k_par, k_idx = jax.random.split(key)
    params = make_params(vocab_size, hidden_size, output_size, k_par)
    indices = jax.random.randint(k_idx, (seq_len, batch), 0, vocab_size, jnp.int32)

    out, hidden = simple_chatbot_forward(indices, params)
    out = jax.block_until_ready(out)
    hidden = jax.block_until_ready(hidden)

    ref_out, ref_hidden = _reference_forward(indices, params)
    assert out.shape == (seq_len, batch, output_size)
    assert hidden.shape == (1, batch, hidden_size)
    assert jnp.allclose(out, ref_out, atol=1e-4, rtol=1e-4)
    assert jnp.allclose(hidden, ref_hidden, atol=1e-4, rtol=1e-4)

    print("KERNEL_OK")
</pallas_src>

<mosaic_0001>
module attributes {stable_mosaic.version = 11 : i64} {
  func.func @_chatbot_kernel(%arg0: memref<8x2xi32, #tpu.memory_space<smem>>, %arg1: memref<20x32xf32, #tpu.memory_space<vmem>>, %arg2: memref<32x32xf32, #tpu.memory_space<vmem>>, %arg3: memref<32x32xf32, #tpu.memory_space<vmem>>, %arg4: memref<32x32xf32, #tpu.memory_space<vmem>>, %arg5: memref<32x32xf32, #tpu.memory_space<vmem>>, %arg6: memref<32x32xf32, #tpu.memory_space<vmem>>, %arg7: memref<32x32xf32, #tpu.memory_space<vmem>>, %arg8: memref<1x32xf32, #tpu.memory_space<vmem>>, %arg9: memref<1x32xf32, #tpu.memory_space<vmem>>, %arg10: memref<1x32xf32, #tpu.memory_space<vmem>>, %arg11: memref<1x32xf32, #tpu.memory_space<vmem>>, %arg12: memref<32x128xf32, #tpu.memory_space<vmem>>, %arg13: memref<1x128xf32, #tpu.memory_space<vmem>>, %arg14: memref<16x128xf32, #tpu.memory_space<vmem>>, %arg15: memref<2x32xf32, #tpu.memory_space<vmem>>, %arg16: memref<16x32xf32, #tpu.memory_space<vmem>>, %arg17: memref<16x32xf32, #tpu.memory_space<vmem>>) attributes {dimension_semantics = [], scalar_prefetch = 0 : i64, scratch_operands = 2 : i64, tpu.core_type = #tpu.core_type<tc>} {
    %c0 = arith.constant 0 : index
    %c0_0 = arith.constant 0 : index
    %0 = memref.load %arg0[%c0, %c0_0] : memref<8x2xi32, #tpu.memory_space<smem>>
    %1 = arith.index_cast %0 : i32 to index
    %c0_1 = arith.constant 0 : index
    %2 = vector.load %arg1[%1, %c0_1] : memref<20x32xf32, #tpu.memory_space<vmem>>, vector<1x32xf32>
    %c0_2 = arith.constant 0 : index
    %c0_3 = arith.constant 0 : index
    %3 = vector.load %arg16[%c0_2, %c0_3] : memref<16x32xf32, #tpu.memory_space<vmem>>, vector<1x32xf32>
    tpu.vector_store %arg16[%c0_2, %c0_3], %2 {strides = array<i32>} : memref<16x32xf32, #tpu.memory_space<vmem>>, vector<1x32xf32>,
    %c0_4 = arith.constant 0 : index
    %c1 = arith.constant 1 : index
    %4 = memref.load %arg0[%c0_4, %c1] : memref<8x2xi32, #tpu.memory_space<smem>>
    %5 = arith.index_cast %4 : i32 to index
    %c0_5 = arith.constant 0 : index
    %6 = vector.load %arg1[%5, %c0_5] : memref<20x32xf32, #tpu.memory_space<vmem>>, vector<1x32xf32>
    %c1_6 = arith.constant 1 : index
    %c0_7 = arith.constant 0 : index
    %7 = vector.load %arg16[%c1_6, %c0_7] : memref<16x32xf32, #tpu.memory_space<vmem>>, vector<1x32xf32>
    tpu.vector_store %arg16[%c1_6, %c0_7], %6 {strides = array<i32>} : memref<16x32xf32, #tpu.memory_space<vmem>>, vector<1x32xf32>,
    %c1_8 = arith.constant 1 : index
    %c0_9 = arith.constant 0 : index
    %8 = memref.load %arg0[%c1_8, %c0_9] : memref<8x2xi32, #tpu.memory_space<smem>>
    %9 = arith.index_cast %8 : i32 to index
    %c0_10 = arith.constant 0 : index
    %10 = vector.load %arg1[%9, %c0_10] : memref<20x32xf32, #tpu.memory_space<vmem>>, vector<1x32xf32>
    %c2 = arith.constant 2 : index
    %c0_11 = arith.constant 0 : index
    %11 = vector.load %arg16[%c2, %c0_11] : memref<16x32xf32, #tpu.memory_space<vmem>>, vector<1x32xf32>
    tpu.vector_store %arg16[%c2, %c0_11], %10 {strides = array<i32>} : memref<16x32xf32, #tpu.memory_space<vmem>>, vector<1x32xf32>,
    %c1_12 = arith.constant 1 : index
    %c1_13 = arith.constant 1 : index
    %12 = memref.load %arg0[%c1_12, %c1_13] : memref<8x2xi32, #tpu.memory_space<smem>>
    %13 = arith.index_cast %12 : i32 to index
    %c0_14 = arith.constant 0 : index
    %14 = vector.load %arg1[%13, %c0_14] : memref<20x32xf32, #tpu.memory_space<vmem>>, vector<1x32xf32>
    %c3 = arith.constant 3 : index
    %c0_15 = arith.constant 0 : index
    %15 = vector.load %arg16[%c3, %c0_15] : memref<16x32xf32, #tpu.memory_space<vmem>>, vector<1x32xf32>
    tpu.vector_store %arg16[%c3, %c0_15], %14 {strides = array<i32>} : memref<16x32xf32, #tpu.memory_space<vmem>>, vector<1x32xf32>,
    %c2_16 = arith.constant 2 : index
    %c0_17 = arith.constant 0 : index
    %16 = memref.load %arg0[%c2_16, %c0_17] : memref<8x2xi32, #tpu.memory_space<smem>>
    %17 = arith.index_cast %16 : i32 to index
    %c0_18 = arith.constant 0 : index
    %18 = vector.load %arg1[%17, %c0_18] : memref<20x32xf32, #tpu.memory_space<vmem>>, vector<1x32xf32>
    %c4 = arith.constant 4 : index
    %c0_19 = arith.constant 0 : index
    %19 = vector.load %arg16[%c4, %c0_19] : memref<16x32xf32, #tpu.memory_space<vmem>>, vector<1x32xf32>
    tpu.vector_store %arg16[%c4, %c0_19], %18 {strides = array<i32>} : memref<16x32xf32, #tpu.memory_space<vmem>>, vector<1x32xf32>,
    %c2_20 = arith.constant 2 : index
    %c1_21 = arith.constant 1 : index
    %20 = memref.load %arg0[%c2_20, %c1_21] : memref<8x2xi32, #tpu.memory_space<smem>>
    %21 = arith.index_cast %20 : i32 to index
    %c0_22 = arith.constant 0 : index
    %22 = vector.load %arg1[%21, %c0_22] : memref<20x32xf32, #tpu.memory_space<vmem>>, vector<1x32xf32>
    %c5 = arith.constant 5 : index
    %c0_23 = arith.constant 0 : index
    %23 = vector.load %arg16[%c5, %c0_23] : memref<16x32xf32, #tpu.memory_space<vmem>>, vector<1x32xf32>
    tpu.vector_store %arg16[%c5, %c0_23], %22 {strides = array<i32>} : memref<16x32xf32, #tpu.memory_space<vmem>>, vector<1x32xf32>,
    %c3_24 = arith.constant 3 : index
    %c0_25 = arith.constant 0 : index
    %24 = memref.load %arg0[%c3_24, %c0_25] : memref<8x2xi32, #tpu.memory_space<smem>>
    %25 = arith.index_cast %24 : i32 to index
    %c0_26 = arith.constant 0 : index
    %26 = vector.load %arg1[%25, %c0_26] : memref<20x32xf32, #tpu.memory_space<vmem>>, vector<1x32xf32>
    %c6 = arith.constant 6 : index
    %c0_27 = arith.constant 0 : index
    %27 = vector.load %arg16[%c6, %c0_27] : memref<16x32xf32, #tpu.memory_space<vmem>>, vector<1x32xf32>
    tpu.vector_store %arg16[%c6, %c0_27], %26 {strides = array<i32>} : memref<16x32xf32, #tpu.memory_space<vmem>>, vector<1x32xf32>,
    %c3_28 = arith.constant 3 : index
    %c1_29 = arith.constant 1 : index
    %28 = memref.load %arg0[%c3_28, %c1_29] : memref<8x2xi32, #tpu.memory_space<smem>>
    %29 = arith.index_cast %28 : i32 to index
    %c0_30 = arith.constant 0 : index
    %30 = vector.load %arg1[%29, %c0_30] : memref<20x32xf32, #tpu.memory_space<vmem>>, vector<1x32xf32>
    %c7 = arith.constant 7 : index
    %c0_31 = arith.constant 0 : index
    %31 = vector.load %arg16[%c7, %c0_31] : memref<16x32xf32, #tpu.memory_space<vmem>>, vector<1x32xf32>
    tpu.vector_store %arg16[%c7, %c0_31], %30 {strides = array<i32>} : memref<16x32xf32, #tpu.memory_space<vmem>>, vector<1x32xf32>,
    %c4_32 = arith.constant 4 : index
    %c0_33 = arith.constant 0 : index
    %32 = memref.load %arg0[%c4_32, %c0_33] : memref<8x2xi32, #tpu.memory_space<smem>>
    %33 = arith.index_cast %32 : i32 to index
    %c0_34 = arith.constant 0 : index
    %34 = vector.load %arg1[%33, %c0_34] : memref<20x32xf32, #tpu.memory_space<vmem>>, vector<1x32xf32>
    %c8 = arith.constant 8 : index
    %c0_35 = arith.constant 0 : index
    %35 = vector.load %arg16[%c8, %c0_35] : memref<16x32xf32, #tpu.memory_space<vmem>>, vector<1x32xf32>
    tpu.vector_store %arg16[%c8, %c0_35], %34 {strides = array<i32>} : memref<16x32xf32, #tpu.memory_space<vmem>>, vector<1x32xf32>,
    %c4_36 = arith.constant 4 : index
    %c1_37 = arith.constant 1 : index
    %36 = memref.load %arg0[%c4_36, %c1_37] : memref<8x2xi32, #tpu.memory_space<smem>>
    %37 = arith.index_cast %36 : i32 to index
    %c0_38 = arith.constant 0 : index
    %38 = vector.load %arg1[%37, %c0_38] : memref<20x32xf32, #tpu.memory_space<vmem>>, vector<1x32xf32>
    %c9 = arith.constant 9 : index
    %c0_39 = arith.constant 0 : index
    %39 = vector.load %arg16[%c9, %c0_39] : memref<16x32xf32, #tpu.memory_space<vmem>>, vector<1x32xf32>
    tpu.vector_store %arg16[%c9, %c0_39], %38 {strides = array<i32>} : memref<16x32xf32, #tpu.memory_space<vmem>>, vector<1x32xf32>,
    %c5_40 = arith.constant 5 : index
    %c0_41 = arith.constant 0 : index
    %40 = memref.load %arg0[%c5_40, %c0_41] : memref<8x2xi32, #tpu.memory_space<smem>>
    %41 = arith.index_cast %40 : i32 to index
    %c0_42 = arith.constant 0 : index
    %42 = vector.load %arg1[%41, %c0_42] : memref<20x32xf32, #tpu.memory_space<vmem>>, vector<1x32xf32>
    %c10 = arith.constant 10 : index
    %c0_43 = arith.constant 0 : index
    %43 = vector.load %arg16[%c10, %c0_43] : memref<16x32xf32, #tpu.memory_space<vmem>>, vector<1x32xf32>
    tpu.vector_store %arg16[%c10, %c0_43], %42 {strides = array<i32>} : memref<16x32xf32, #tpu.memory_space<vmem>>, vector<1x32xf32>,
    %c5_44 = arith.constant 5 : index
    %c1_45 = arith.constant 1 : index
    %44 = memref.load %arg0[%c5_44, %c1_45] : memref<8x2xi32, #tpu.memory_space<smem>>
    %45 = arith.index_cast %44 : i32 to index
    %c0_46 = arith.constant 0 : index
    %46 = vector.load %arg1[%45, %c0_46] : memref<20x32xf32, #tpu.memory_space<vmem>>, vector<1x32xf32>
    %c11 = arith.constant 11 : index
    %c0_47 = arith.constant 0 : index
    %47 = vector.load %arg16[%c11, %c0_47] : memref<16x32xf32, #tpu.memory_space<vmem>>, vector<1x32xf32>
    tpu.vector_store %arg16[%c11, %c0_47], %46 {strides = array<i32>} : memref<16x32xf32, #tpu.memory_space<vmem>>, vector<1x32xf32>,
    %c6_48 = arith.constant 6 : index
    %c0_49 = arith.constant 0 : index
    %48 = memref.load %arg0[%c6_48, %c0_49] : memref<8x2xi32, #tpu.memory_space<smem>>
    %49 = arith.index_cast %48 : i32 to index
    %c0_50 = arith.constant 0 : index
    %50 = vector.load %arg1[%49, %c0_50] : memref<20x32xf32, #tpu.memory_space<vmem>>, vector<1x32xf32>
    %c12 = arith.constant 12 : index
    %c0_51 = arith.constant 0 : index
    %51 = vector.load %arg16[%c12, %c0_51] : memref<16x32xf32, #tpu.memory_space<vmem>>, vector<1x32xf32>
    tpu.vector_store %arg16[%c12, %c0_51], %50 {strides = array<i32>} : memref<16x32xf32, #tpu.memory_space<vmem>>, vector<1x32xf32>,
    %c6_52 = arith.constant 6 : index
    %c1_53 = arith.constant 1 : index
    %52 = memref.load %arg0[%c6_52, %c1_53] : memref<8x2xi32, #tpu.memory_space<smem>>
    %53 = arith.index_cast %52 : i32 to index
    %c0_54 = arith.constant 0 : index
    %54 = vector.load %arg1[%53, %c0_54] : memref<20x32xf32, #tpu.memory_space<vmem>>, vector<1x32xf32>
    %c13 = arith.constant 13 : index
    %c0_55 = arith.constant 0 : index
    %55 = vector.load %arg16[%c13, %c0_55] : memref<16x32xf32, #tpu.memory_space<vmem>>, vector<1x32xf32>
    tpu.vector_store %arg16[%c13, %c0_55], %54 {strides = array<i32>} : memref<16x32xf32, #tpu.memory_space<vmem>>, vector<1x32xf32>,
    %c7_56 = arith.constant 7 : index
    %c0_57 = arith.constant 0 : index
    %56 = memref.load %arg0[%c7_56, %c0_57] : memref<8x2xi32, #tpu.memory_space<smem>>
    %57 = arith.index_cast %56 : i32 to index
    %c0_58 = arith.constant 0 : index
    %58 = vector.load %arg1[%57, %c0_58] : memref<20x32xf32, #tpu.memory_space<vmem>>, vector<1x32xf32>
    %c14 = arith.constant 14 : index
    %c0_59 = arith.constant 0 : index
    %59 = vector.load %arg16[%c14, %c0_59] : memref<16x32xf32, #tpu.memory_space<vmem>>, vector<1x32xf32>
    tpu.vector_store %arg16[%c14, %c0_59], %58 {strides = array<i32>} : memref<16x32xf32, #tpu.memory_space<vmem>>, vector<1x32xf32>,
    %c7_60 = arith.constant 7 : index
    %c1_61 = arith.constant 1 : index
    %60 = memref.load %arg0[%c7_60, %c1_61] : memref<8x2xi32, #tpu.memory_space<smem>>
    %61 = arith.index_cast %60 : i32 to index
    %c0_62 = arith.constant 0 : index
    %62 = vector.load %arg1[%61, %c0_62] : memref<20x32xf32, #tpu.memory_space<vmem>>, vector<1x32xf32>
    %c15 = arith.constant 15 : index
    %c0_63 = arith.constant 0 : index
    %63 = vector.load %arg16[%c15, %c0_63] : memref<16x32xf32, #tpu.memory_space<vmem>>, vector<1x32xf32>
    tpu.vector_store %arg16[%c15, %c0_63], %62 {strides = array<i32>} : memref<16x32xf32, #tpu.memory_space<vmem>>, vector<1x32xf32>,
    %c0_64 = arith.constant 0 : index
    %c0_65 = arith.constant 0 : index
    %64 = vector.load %arg16[%c0_64, %c0_65] : memref<16x32xf32, #tpu.memory_space<vmem>>, vector<16x32xf32>
    %c0_66 = arith.constant 0 : index
    %c0_67 = arith.constant 0 : index
    %65 = vector.load %arg2[%c0_66, %c0_67] : memref<32x32xf32, #tpu.memory_space<vmem>>, vector<32x32xf32>
    %cst = arith.constant dense<0.000000e+00> : vector<16x32xf32>
    %66 = tpu.matmul %64, %65, %cst {dimension_numbers = #tpu.dot_dimension_numbers<[1], [0], [0], [1], [0, 0, 1, 1], [], []>} : vector<16x32xf32>, vector<32x32xf32>, vector<16x32xf32> -> vector<16x32xf32>
    %c0_68 = arith.constant 0 : index
    %c0_69 = arith.constant 0 : index
    %67 = vector.load %arg8[%c0_68, %c0_69] : memref<1x32xf32, #tpu.memory_space<vmem>>, vector<1x32xf32>
    %68 = vector.broadcast %67 : vector<1x32xf32> to vector<16x32xf32>
    %69 = arith.addf %66, %68 : vector<16x32xf32>
    %c0_70 = arith.constant 0 : index
    %c0_71 = arith.constant 0 : index
    %70 = vector.load %arg3[%c0_70, %c0_71] : memref<32x32xf32, #tpu.memory_space<vmem>>, vector<32x32xf32>
    %cst_72 = arith.constant dense<0.000000e+00> : vector<16x32xf32>
    %71 = tpu.matmul %64, %70, %cst_72 {dimension_numbers = #tpu.dot_dimension_numbers<[1], [0], [0], [1], [0, 0, 1, 1], [], []>} : vector<16x32xf32>, vector<32x32xf32>, vector<16x32xf32> -> vector<16x32xf32>
    %c0_73 = arith.constant 0 : index
    %c0_74 = arith.constant 0 : index
    %72 = vector.load %arg9[%c0_73, %c0_74] : memref<1x32xf32, #tpu.memory_space<vmem>>, vector<1x32xf32>
    %73 = vector.broadcast %72 : vector<1x32xf32> to vector<16x32xf32>
    %74 = arith.addf %71, %73 : vector<16x32xf32>
    %c0_75 = arith.constant 0 : index
    %c0_76 = arith.constant 0 : index
    %75 = vector.load %arg4[%c0_75, %c0_76] : memref<32x32xf32, #tpu.memory_space<vmem>>, vector<32x32xf32>
    %cst_77 = arith.constant dense<0.000000e+00> : vector<16x32xf32>
    %76 = tpu.matmul %64, %75, %cst_77 {dimension_numbers = #tpu.dot_dimension_numbers<[1], [0], [0], [1], [0, 0, 1, 1], [], []>} : vector<16x32xf32>, vector<32x32xf32>, vector<16x32xf32> -> vector<16x32xf32>
    %c0_78 = arith.constant 0 : index
    %c0_79 = arith.constant 0 : index
    %77 = vector.load %arg10[%c0_78, %c0_79] : memref<1x32xf32, #tpu.memory_space<vmem>>, vector<1x32xf32>
    %78 = vector.broadcast %77 : vector<1x32xf32> to vector<16x32xf32>
    %79 = arith.addf %76, %78 : vector<16x32xf32>
    %c0_80 = arith.constant 0 : index
    %c0_81 = arith.constant 0 : index
    %80 = vector.load %arg5[%c0_80, %c0_81] : memref<32x32xf32, #tpu.memory_space<vmem>>, vector<32x32xf32>
    %c0_82 = arith.constant 0 : index
    %c0_83 = arith.constant 0 : index
    %81 = vector.load %arg6[%c0_82, %c0_83] : memref<32x32xf32, #tpu.memory_space<vmem>>, vector<32x32xf32>
    %c0_84 = arith.constant 0 : index
    %c0_85 = arith.constant 0 : index
    %82 = vector.load %arg7[%c0_84, %c0_85] : memref<32x32xf32, #tpu.memory_space<vmem>>, vector<32x32xf32>
    %c0_86 = arith.constant 0 : index
    %c0_87 = arith.constant 0 : index
    %83 = vector.load %arg11[%c0_86, %c0_87] : memref<1x32xf32, #tpu.memory_space<vmem>>, vector<1x32xf32>
    %cst_88 = arith.constant 0.000000e+00 : f32
    %84 = vector.broadcast %cst_88 : f32 to vector<2x32xf32>
    %cst_89 = arith.constant dense<0.000000e+00> : vector<2x32xf32>
    %85 = tpu.matmul %84, %80, %cst_89 {dimension_numbers = #tpu.dot_dimension_numbers<[1], [0], [0], [1], [0, 0, 1, 1], [], []>} : vector<2x32xf32>, vector<32x32xf32>, vector<2x32xf32> -> vector<2x32xf32>
    %cst_90 = arith.constant dense<0.000000e+00> : vector<2x32xf32>
    %86 = tpu.matmul %84, %81, %cst_90 {dimension_numbers = #tpu.dot_dimension_numbers<[1], [0], [0], [1], [0, 0, 1, 1], [], []>} : vector<2x32xf32>, vector<32x32xf32>, vector<2x32xf32> -> vector<2x32xf32>
    %cst_91 = arith.constant dense<0.000000e+00> : vector<2x32xf32>
    %87 = tpu.matmul %84, %82, %cst_91 {dimension_numbers = #tpu.dot_dimension_numbers<[1], [0], [0], [1], [0, 0, 1, 1], [], []>} : vector<2x32xf32>, vector<32x32xf32>, vector<2x32xf32> -> vector<2x32xf32>
    %88 = vector.broadcast %83 : vector<1x32xf32> to vector<2x32xf32>
    %89 = arith.addf %87, %88 : vector<2x32xf32>
    %90 = vector.extract_strided_slice %69 {offsets = [0, 0], sizes = [2, 32], strides = [1, 1]} : vector<16x32xf32> to vector<2x32xf32>
    %91 = arith.addf %90, %85 : vector<2x32xf32>
    %92 = arith.negf %91 : vector<2x32xf32>
    %93 = math.exp %92 : vector<2x32xf32>
    %cst_92 = arith.constant 1.000000e+00 : f32
    %94 = vector.broadcast %cst_92 : f32 to vector<2x32xf32>
    %95 = arith.addf %94, %93 : vector<2x32xf32>
    %96 = arith.divf %94, %95 : vector<2x32xf32>
    %97 = vector.extract_strided_slice %74 {offsets = [0, 0], sizes = [2, 32], strides = [1, 1]} : vector<16x32xf32> to vector<2x32xf32>
    %98 = arith.addf %97, %86 : vector<2x32xf32>
    %99 = arith.negf %98 : vector<2x32xf32>
    %100 = math.exp %99 : vector<2x32xf32>
    %cst_93 = arith.constant 1.000000e+00 : f32
    %101 = vector.broadcast %cst_93 : f32 to vector<2x32xf32>
    %102 = arith.addf %101, %100 : vector<2x32xf32>
    %103 = arith.divf %101, %102 : vector<2x32xf32>
    %104 = vector.extract_strided_slice %79 {offsets = [0, 0], sizes = [2, 32], strides = [1, 1]} : vector<16x32xf32> to vector<2x32xf32>
    %105 = arith.mulf %96, %89 : vector<2x32xf32>
    %106 = arith.addf %104, %105 : vector<2x32xf32>
    %107 = math.tanh %106 : vector<2x32xf32>
    %cst_94 = arith.constant 1.000000e+00 : f32
    %108 = vector.broadcast %cst_94 : f32 to vector<2x32xf32>
    %109 = arith.subf %108, %103 : vector<2x32xf32>
    %110 = arith.mulf %109, %107 : vector<2x32xf32>
    %111 = arith.mulf %103, %84 : vector<2x32xf32>
    %112 = arith.addf %110, %111 : vector<2x32xf32>
    %c0_95 = arith.constant 0 : index
    %c0_96 = arith.constant 0 : index
    %113 = vector.load %arg17[%c0_95, %c0_96] : memref<16x32xf32, #tpu.memory_space<vmem>>, vector<2x32xf32>
    tpu.vector_store %arg17[%c0_95, %c0_96], %112 {strides = array<i32>} : memref<16x32xf32, #tpu.memory_space<vmem>>, vector<2x32xf32>,
    %cst_97 = arith.constant dense<0.000000e+00> : vector<2x32xf32>
    %114 = tpu.matmul %112, %80, %cst_97 {dimension_numbers = #tpu.dot_dimension_numbers<[1], [0], [0], [1], [0, 0, 1, 1], [], []>} : vector<2x32xf32>, vector<32x32xf32>, vector<2x32xf32> -> vector<2x32xf32>
    %cst_98 = arith.constant dense<0.000000e+00> : vector<2x32xf32>
    %115 = tpu.matmul %112, %81, %cst_98 {dimension_numbers = #tpu.dot_dimension_numbers<[1], [0], [0], [1], [0, 0, 1, 1], [], []>} : vector<2x32xf32>, vector<32x32xf32>, vector<2x32xf32> -> vector<2x32xf32>
    %cst_99 = arith.constant dense<0.000000e+00> : vector<2x32xf32>
    %116 = tpu.matmul %112, %82, %cst_99 {dimension_numbers = #tpu.dot_dimension_numbers<[1], [0], [0], [1], [0, 0, 1, 1], [], []>} : vector<2x32xf32>, vector<32x32xf32>, vector<2x32xf32> -> vector<2x32xf32>
    %117 = vector.broadcast %83 : vector<1x32xf32> to vector<2x32xf32>
    %118 = arith.addf %116, %117 : vector<2x32xf32>
    %119 = vector.extract_strided_slice %69 {offsets = [2, 0], sizes = [2, 32], strides = [1, 1]} : vector<16x32xf32> to vector<2x32xf32>
    %120 = arith.addf %119, %114 : vector<2x32xf32>
    %121 = arith.negf %120 : vector<2x32xf32>
    %122 = math.exp %121 : vector<2x32xf32>
    %cst_100 = arith.constant 1.000000e+00 : f32
    %123 = vector.broadcast %cst_100 : f32 to vector<2x32xf32>
    %124 = arith.addf %123, %122 : vector<2x32xf32>
    %125 = arith.divf %123, %124 : vector<2x32xf32>
    %126 = vector.extract_strided_slice %74 {offsets = [2, 0], sizes = [2, 32], strides = [1, 1]} : vector<16x32xf32> to vector<2x32xf32>
    %127 = arith.addf %126, %115 : vector<2x32xf32>
    %128 = arith.negf %127 : vector<2x32xf32>
    %129 = math.exp %128 : vector<2x32xf32>
    %cst_101 = arith.constant 1.000000e+00 : f32
    %130 = vector.broadcast %cst_101 : f32 to vector<2x32xf32>
    %131 = arith.addf %130, %129 : vector<2x32xf32>
    %132 = arith.divf %130, %131 : vector<2x32xf32>
    %133 = vector.extract_strided_slice %79 {offsets = [2, 0], sizes = [2, 32], strides = [1, 1]} : vector<16x32xf32> to vector<2x32xf32>
    %134 = arith.mulf %125, %118 : vector<2x32xf32>
    %135 = arith.addf %133, %134 : vector<2x32xf32>
    %136 = math.tanh %135 : vector<2x32xf32>
    %cst_102 = arith.constant 1.000000e+00 : f32
    %137 = vector.broadcast %cst_102 : f32 to vector<2x32xf32>
    %138 = arith.subf %137, %132 : vector<2x32xf32>
    %139 = arith.mulf %138, %136 : vector<2x32xf32>
    %140 = arith.mulf %132, %112 : vector<2x32xf32>
    %141 = arith.addf %139, %140 : vector<2x32xf32>
    %c2_103 = arith.constant 2 : index
    %c0_104 = arith.constant 0 : index
    %142 = vector.load %arg17[%c2_103, %c0_104] : memref<16x32xf32, #tpu.memory_space<vmem>>, vector<2x32xf32>
    tpu.vector_store %arg17[%c2_103, %c0_104], %141 {strides = array<i32>} : memref<16x32xf32, #tpu.memory_space<vmem>>, vector<2x32xf32>,
    %cst_105 = arith.constant dense<0.000000e+00> : vector<2x32xf32>
    %143 = tpu.matmul %141, %80, %cst_105 {dimension_numbers = #tpu.dot_dimension_numbers<[1], [0], [0], [1], [0, 0, 1, 1], [], []>} : vector<2x32xf32>, vector<32x32xf32>, vector<2x32xf32> -> vector<2x32xf32>
    %cst_106 = arith.constant dense<0.000000e+00> : vector<2x32xf32>
    %144 = tpu.matmul %141, %81, %cst_106 {dimension_numbers = #tpu.dot_dimension_numbers<[1], [0], [0], [1], [0, 0, 1, 1], [], []>} : vector<2x32xf32>, vector<32x32xf32>, vector<2x32xf32> -> vector<2x32xf32>
    %cst_107 = arith.constant dense<0.000000e+00> : vector<2x32xf32>
    %145 = tpu.matmul %141, %82, %cst_107 {dimension_numbers = #tpu.dot_dimension_numbers<[1], [0], [0], [1], [0, 0, 1, 1], [], []>} : vector<2x32xf32>, vector<32x32xf32>, vector<2x32xf32> -> vector<2x32xf32>
    %146 = vector.broadcast %83 : vector<1x32xf32> to vector<2x32xf32>
    %147 = arith.addf %145, %146 : vector<2x32xf32>
    %148 = vector.extract_strided_slice %69 {offsets = [4, 0], sizes = [2, 32], strides = [1, 1]} : vector<16x32xf32> to vector<2x32xf32>
    %149 = arith.addf %148, %143 : vector<2x32xf32>
    %150 = arith.negf %149 : vector<2x32xf32>
    %151 = math.exp %150 : vector<2x32xf32>
    %cst_108 = arith.constant 1.000000e+00 : f32
    %152 = vector.broadcast %cst_108 : f32 to vector<2x32xf32>
    %153 = arith.addf %152, %151 : vector<2x32xf32>
    %154 = arith.divf %152, %153 : vector<2x32xf32>
    %155 = vector.extract_strided_slice %74 {offsets = [4, 0], sizes = [2, 32], strides = [1, 1]} : vector<16x32xf32> to vector<2x32xf32>
    %156 = arith.addf %155, %144 : vector<2x32xf32>
    %157 = arith.negf %156 : vector<2x32xf32>
    %158 = math.exp %157 : vector<2x32xf32>
    %cst_109 = arith.constant 1.000000e+00 : f32
    %159 = vector.broadcast %cst_109 : f32 to vector<2x32xf32>
    %160 = arith.addf %159, %158 : vector<2x32xf32>
    %161 = arith.divf %159, %160 : vector<2x32xf32>
    %162 = vector.extract_strided_slice %79 {offsets = [4, 0], sizes = [2, 32], strides = [1, 1]} : vector<16x32xf32> to vector<2x32xf32>
    %163 = arith.mulf %154, %147 : vector<2x32xf32>
    %164 = arith.addf %162, %163 : vector<2x32xf32>
    %165 = math.tanh %164 : vector<2x32xf32>
    %cst_110 = arith.constant 1.000000e+00 : f32
    %166 = vector.broadcast %cst_110 : f32 to vector<2x32xf32>
    %167 = arith.subf %166, %161 : vector<2x32xf32>
    %168 = arith.mulf %167, %165 : vector<2x32xf32>
    %169 = arith.mulf %161, %141 : vector<2x32xf32>
    %170 = arith.addf %168, %169 : vector<2x32xf32>
    %c4_111 = arith.constant 4 : index
    %c0_112 = arith.constant 0 : index
    %171 = vector.load %arg17[%c4_111, %c0_112] : memref<16x32xf32, #tpu.memory_space<vmem>>, vector<2x32xf32>
    tpu.vector_store %arg17[%c4_111, %c0_112], %170 {strides = array<i32>} : memref<16x32xf32, #tpu.memory_space<vmem>>, vector<2x32xf32>,
    %cst_113 = arith.constant dense<0.000000e+00> : vector<2x32xf32>
    %172 = tpu.matmul %170, %80, %cst_113 {dimension_numbers = #tpu.dot_dimension_numbers<[1], [0], [0], [1], [0, 0, 1, 1], [], []>} : vector<2x32xf32>, vector<32x32xf32>, vector<2x32xf32> -> vector<2x32xf32>
    %cst_114 = arith.constant dense<0.000000e+00> : vector<2x32xf32>
    %173 = tpu.matmul %170, %81, %cst_114 {dimension_numbers = #tpu.dot_dimension_numbers<[1], [0], [0], [1], [0, 0, 1, 1], [], []>} : vector<2x32xf32>, vector<32x32xf32>, vector<2x32xf32> -> vector<2x32xf32>
    %cst_115 = arith.constant dense<0.000000e+00> : vector<2x32xf32>
    %174 = tpu.matmul %170, %82, %cst_115 {dimension_numbers = #tpu.dot_dimension_numbers<[1], [0], [0], [1], [0, 0, 1, 1], [], []>} : vector<2x32xf32>, vector<32x32xf32>, vector<2x32xf32> -> vector<2x32xf32>
    %175 = vector.broadcast %83 : vector<1x32xf32> to vector<2x32xf32>
    %176 = arith.addf %174, %175 : vector<2x32xf32>
    %177 = vector.extract_strided_slice %69 {offsets = [6, 0], sizes = [2, 32], strides = [1, 1]} : vector<16x32xf32> to vector<2x32xf32>
    %178 = arith.addf %177, %172 : vector<2x32xf32>
    %179 = arith.negf %178 : vector<2x32xf32>
    %180 = math.exp %179 : vector<2x32xf32>
    %cst_116 = arith.constant 1.000000e+00 : f32
    %181 = vector.broadcast %cst_116 : f32 to vector<2x32xf32>
    %182 = arith.addf %181, %180 : vector<2x32xf32>
    %183 = arith.divf %181, %182 : vector<2x32xf32>
    %184 = vector.extract_strided_slice %74 {offsets = [6, 0], sizes = [2, 32], strides = [1, 1]} : vector<16x32xf32> to vector<2x32xf32>
    %185 = arith.addf %184, %173 : vector<2x32xf32>
    %186 = arith.negf %185 : vector<2x32xf32>
    %187 = math.exp %186 : vector<2x32xf32>
    %cst_117 = arith.constant 1.000000e+00 : f32
    %188 = vector.broadcast %cst_117 : f32 to vector<2x32xf32>
    %189 = arith.addf %188, %187 : vector<2x32xf32>
    %190 = arith.divf %188, %189 : vector<2x32xf32>
    %191 = vector.extract_strided_slice %79 {offsets = [6, 0], sizes = [2, 32], strides = [1, 1]} : vector<16x32xf32> to vector<2x32xf32>
    %192 = arith.mulf %183, %176 : vector<2x32xf32>
    %193 = arith.addf %191, %192 : vector<2x32xf32>
    %194 = math.tanh %193 : vector<2x32xf32>
    %cst_118 = arith.constant 1.000000e+00 : f32
    %195 = vector.broadcast %cst_118 : f32 to vector<2x32xf32>
    %196 = arith.subf %195, %190 : vector<2x32xf32>
    %197 = arith.mulf %196, %194 : vector<2x32xf32>
    %198 = arith.mulf %190, %170 : vector<2x32xf32>
    %199 = arith.addf %197, %198 : vector<2x32xf32>
    %c6_119 = arith.constant 6 : index
    %c0_120 = arith.constant 0 : index
    %200 = vector.load %arg17[%c6_119, %c0_120] : memref<16x32xf32, #tpu.memory_space<vmem>>, vector<2x32xf32>
    tpu.vector_store %arg17[%c6_119, %c0_120], %199 {strides = array<i32>} : memref<16x32xf32, #tpu.memory_space<vmem>>, vector<2x32xf32>,
    %cst_121 = arith.constant dense<0.000000e+00> : vector<2x32xf32>
    %201 = tpu.matmul %199, %80, %cst_121 {dimension_numbers = #tpu.dot_dimension_numbers<[1], [0], [0], [1], [0, 0, 1, 1], [], []>} : vector<2x32xf32>, vector<32x32xf32>, vector<2x32xf32> -> vector<2x32xf32>
    %cst_122 = arith.constant dense<0.000000e+00> : vector<2x32xf32>
    %202 = tpu.matmul %199, %81, %cst_122 {dimension_numbers = #tpu.dot_dimension_numbers<[1], [0], [0], [1], [0, 0, 1, 1], [], []>} : vector<2x32xf32>, vector<32x32xf32>, vector<2x32xf32> -> vector<2x32xf32>
    %cst_123 = arith.constant dense<0.000000e+00> : vector<2x32xf32>
    %203 = tpu.matmul %199, %82, %cst_123 {dimension_numbers = #tpu.dot_dimension_numbers<[1], [0], [0], [1], [0, 0, 1, 1], [], []>} : vector<2x32xf32>, vector<32x32xf32>, vector<2x32xf32> -> vector<2x32xf32>
    %204 = vector.broadcast %83 : vector<1x32xf32> to vector<2x32xf32>
    %205 = arith.addf %203, %204 : vector<2x32xf32>
    %206 = vector.extract_strided_slice %69 {offsets = [8, 0], sizes = [2, 32], strides = [1, 1]} : vector<16x32xf32> to vector<2x32xf32>
    %207 = arith.addf %206, %201 : vector<2x32xf32>
    %208 = arith.negf %207 : vector<2x32xf32>
    %209 = math.exp %208 : vector<2x32xf32>
    %cst_124 = arith.constant 1.000000e+00 : f32
    %210 = vector.broadcast %cst_124 : f32 to vector<2x32xf32>
    %211 = arith.addf %210, %209 : vector<2x32xf32>
    %212 = arith.divf %210, %211 : vector<2x32xf32>
    %213 = vector.extract_strided_slice %74 {offsets = [8, 0], sizes = [2, 32], strides = [1, 1]} : vector<16x32xf32> to vector<2x32xf32>
    %214 = arith.addf %213, %202 : vector<2x32xf32>
    %215 = arith.negf %214 : vector<2x32xf32>
    %216 = math.exp %215 : vector<2x32xf32>
    %cst_125 = arith.constant 1.000000e+00 : f32
    %217 = vector.broadcast %cst_125 : f32 to vector<2x32xf32>
    %218 = arith.addf %217, %216 : vector<2x32xf32>
    %219 = arith.divf %217, %218 : vector<2x32xf32>
    %220 = vector.extract_strided_slice %79 {offsets = [8, 0], sizes = [2, 32], strides = [1, 1]} : vector<16x32xf32> to vector<2x32xf32>
    %221 = arith.mulf %212, %205 : vector<2x32xf32>
    %222 = arith.addf %220, %221 : vector<2x32xf32>
    %223 = math.tanh %222 : vector<2x32xf32>
    %cst_126 = arith.constant 1.000000e+00 : f32
    %224 = vector.broadcast %cst_126 : f32 to vector<2x32xf32>
    %225 = arith.subf %224, %219 : vector<2x32xf32>
    %226 = arith.mulf %225, %223 : vector<2x32xf32>
    %227 = arith.mulf %219, %199 : vector<2x32xf32>
    %228 = arith.addf %226, %227 : vector<2x32xf32>
    %c8_127 = arith.constant 8 : index
    %c0_128 = arith.constant 0 : index
    %229 = vector.load %arg17[%c8_127, %c0_128] : memref<16x32xf32, #tpu.memory_space<vmem>>, vector<2x32xf32>
    tpu.vector_store %arg17[%c8_127, %c0_128], %228 {strides = array<i32>} : memref<16x32xf32, #tpu.memory_space<vmem>>, vector<2x32xf32>,
    %cst_129 = arith.constant dense<0.000000e+00> : vector<2x32xf32>
    %230 = tpu.matmul %228, %80, %cst_129 {dimension_numbers = #tpu.dot_dimension_numbers<[1], [0], [0], [1], [0, 0, 1, 1], [], []>} : vector<2x32xf32>, vector<32x32xf32>, vector<2x32xf32> -> vector<2x32xf32>
    %cst_130 = arith.constant dense<0.000000e+00> : vector<2x32xf32>
    %231 = tpu.matmul %228, %81, %cst_130 {dimension_numbers = #tpu.dot_dimension_numbers<[1], [0], [0], [1], [0, 0, 1, 1], [], []>} : vector<2x32xf32>, vector<32x32xf32>, vector<2x32xf32> -> vector<2x32xf32>
    %cst_131 = arith.constant dense<0.000000e+00> : vector<2x32xf32>
    %232 = tpu.matmul %228, %82, %cst_131 {dimension_numbers = #tpu.dot_dimension_numbers<[1], [0], [0], [1], [0, 0, 1, 1], [], []>} : vector<2x32xf32>, vector<32x32xf32>, vector<2x32xf32> -> vector<2x32xf32>
    %233 = vector.broadcast %83 : vector<1x32xf32> to vector<2x32xf32>
    %234 = arith.addf %232, %233 : vector<2x32xf32>
    %235 = vector.extract_strided_slice %69 {offsets = [10, 0], sizes = [2, 32], strides = [1, 1]} : vector<16x32xf32> to vector<2x32xf32>
    %236 = arith.addf %235, %230 : vector<2x32xf32>
    %237 = arith.negf %236 : vector<2x32xf32>
    %238 = math.exp %237 : vector<2x32xf32>
    %cst_132 = arith.constant 1.000000e+00 : f32
    %239 = vector.broadcast %cst_132 : f32 to vector<2x32xf32>
    %240 = arith.addf %239, %238 : vector<2x32xf32>
    %241 = arith.divf %239, %240 : vector<2x32xf32>
    %242 = vector.extract_strided_slice %74 {offsets = [10, 0], sizes = [2, 32], strides = [1, 1]} : vector<16x32xf32> to vector<2x32xf32>
    %243 = arith.addf %242, %231 : vector<2x32xf32>
    %244 = arith.negf %243 : vector<2x32xf32>
    %245 = math.exp %244 : vector<2x32xf32>
    %cst_133 = arith.constant 1.000000e+00 : f32
    %246 = vector.broadcast %cst_133 : f32 to vector<2x32xf32>
    %247 = arith.addf %246, %245 : vector<2x32xf32>
    %248 = arith.divf %246, %247 : vector<2x32xf32>
    %249 = vector.extract_strided_slice %79 {offsets = [10, 0], sizes = [2, 32], strides = [1, 1]} : vector<16x32xf32> to vector<2x32xf32>
    %250 = arith.mulf %241, %234 : vector<2x32xf32>
    %251 = arith.addf %249, %250 : vector<2x32xf32>
    %252 = math.tanh %251 : vector<2x32xf32>
    %cst_134 = arith.constant 1.000000e+00 : f32
    %253 = vector.broadcast %cst_134 : f32 to vector<2x32xf32>
    %254 = arith.subf %253, %248 : vector<2x32xf32>
    %255 = arith.mulf %254, %252 : vector<2x32xf32>
    %256 = arith.mulf %248, %228 : vector<2x32xf32>
    %257 = arith.addf %255, %256 : vector<2x32xf32>
    %c10_135 = arith.constant 10 : index
    %c0_136 = arith.constant 0 : index
    %258 = vector.load %arg17[%c10_135, %c0_136] : memref<16x32xf32, #tpu.memory_space<vmem>>, vector<2x32xf32>
    tpu.vector_store %arg17[%c10_135, %c0_136], %257 {strides = array<i32>} : memref<16x32xf32, #tpu.memory_space<vmem>>, vector<2x32xf32>,
    %cst_137 = arith.constant dense<0.000000e+00> : vector<2x32xf32>
    %259 = tpu.matmul %257, %80, %cst_137 {dimension_numbers = #tpu.dot_dimension_numbers<[1], [0], [0], [1], [0, 0, 1, 1], [], []>} : vector<2x32xf32>, vector<32x32xf32>, vector<2x32xf32> -> vector<2x32xf32>
    %cst_138 = arith.constant dense<0.000000e+00> : vector<2x32xf32>
    %260 = tpu.matmul %257, %81, %cst_138 {dimension_numbers = #tpu.dot_dimension_numbers<[1], [0], [0], [1], [0, 0, 1, 1], [], []>} : vector<2x32xf32>, vector<32x32xf32>, vector<2x32xf32> -> vector<2x32xf32>
    %cst_139 = arith.constant dense<0.000000e+00> : vector<2x32xf32>
    %261 = tpu.matmul %257, %82, %cst_139 {dimension_numbers = #tpu.dot_dimension_numbers<[1], [0], [0], [1], [0, 0, 1, 1], [], []>} : vector<2x32xf32>, vector<32x32xf32>, vector<2x32xf32> -> vector<2x32xf32>
    %262 = vector.broadcast %83 : vector<1x32xf32> to vector<2x32xf32>
    %263 = arith.addf %261, %262 : vector<2x32xf32>
    %264 = vector.extract_strided_slice %69 {offsets = [12, 0], sizes = [2, 32], strides = [1, 1]} : vector<16x32xf32> to vector<2x32xf32>
    %265 = arith.addf %264, %259 : vector<2x32xf32>
    %266 = arith.negf %265 : vector<2x32xf32>
    %267 = math.exp %266 : vector<2x32xf32>
    %cst_140 = arith.constant 1.000000e+00 : f32
    %268 = vector.broadcast %cst_140 : f32 to vector<2x32xf32>
    %269 = arith.addf %268, %267 : vector<2x32xf32>
    %270 = arith.divf %268, %269 : vector<2x32xf32>
    %271 = vector.extract_strided_slice %74 {offsets = [12, 0], sizes = [2, 32], strides = [1, 1]} : vector<16x32xf32> to vector<2x32xf32>
    %272 = arith.addf %271, %260 : vector<2x32xf32>
    %273 = arith.negf %272 : vector<2x32xf32>
    %274 = math.exp %273 : vector<2x32xf32>
    %cst_141 = arith.constant 1.000000e+00 : f32
    %275 = vector.broadcast %cst_141 : f32 to vector<2x32xf32>
    %276 = arith.addf %275, %274 : vector<2x32xf32>
    %277 = arith.divf %275, %276 : vector<2x32xf32>
    %278 = vector.extract_strided_slice %79 {offsets = [12, 0], sizes = [2, 32], strides = [1, 1]} : vector<16x32xf32> to vector<2x32xf32>
    %279 = arith.mulf %270, %263 : vector<2x32xf32>
    %280 = arith.addf %278, %279 : vector<2x32xf32>
    %281 = math.tanh %280 : vector<2x32xf32>
    %cst_142 = arith.constant 1.000000e+00 : f32
    %282 = vector.broadcast %cst_142 : f32 to vector<2x32xf32>
    %283 = arith.subf %282, %277 : vector<2x32xf32>
    %284 = arith.mulf %283, %281 : vector<2x32xf32>
    %285 = arith.mulf %277, %257 : vector<2x32xf32>
    %286 = arith.addf %284, %285 : vector<2x32xf32>
    %c12_143 = arith.constant 12 : index
    %c0_144 = arith.constant 0 : index
    %287 = vector.load %arg17[%c12_143, %c0_144] : memref<16x32xf32, #tpu.memory_space<vmem>>, vector<2x32xf32>
    tpu.vector_store %arg17[%c12_143, %c0_144], %286 {strides = array<i32>} : memref<16x32xf32, #tpu.memory_space<vmem>>, vector<2x32xf32>,
    %cst_145 = arith.constant dense<0.000000e+00> : vector<2x32xf32>
    %288 = tpu.matmul %286, %80, %cst_145 {dimension_numbers = #tpu.dot_dimension_numbers<[1], [0], [0], [1], [0, 0, 1, 1], [], []>} : vector<2x32xf32>, vector<32x32xf32>, vector<2x32xf32> -> vector<2x32xf32>
    %cst_146 = arith.constant dense<0.000000e+00> : vector<2x32xf32>
    %289 = tpu.matmul %286, %81, %cst_146 {dimension_numbers = #tpu.dot_dimension_numbers<[1], [0], [0], [1], [0, 0, 1, 1], [], []>} : vector<2x32xf32>, vector<32x32xf32>, vector<2x32xf32> -> vector<2x32xf32>
    %cst_147 = arith.constant dense<0.000000e+00> : vector<2x32xf32>
    %290 = tpu.matmul %286, %82, %cst_147 {dimension_numbers = #tpu.dot_dimension_numbers<[1], [0], [0], [1], [0, 0, 1, 1], [], []>} : vector<2x32xf32>, vector<32x32xf32>, vector<2x32xf32> -> vector<2x32xf32>
    %291 = vector.broadcast %83 : vector<1x32xf32> to vector<2x32xf32>
    %292 = arith.addf %290, %291 : vector<2x32xf32>
    %293 = vector.extract_strided_slice %69 {offsets = [14, 0], sizes = [2, 32], strides = [1, 1]} : vector<16x32xf32> to vector<2x32xf32>
    %294 = arith.addf %293, %288 : vector<2x32xf32>
    %295 = arith.negf %294 : vector<2x32xf32>
    %296 = math.exp %295 : vector<2x32xf32>
    %cst_148 = arith.constant 1.000000e+00 : f32
    %297 = vector.broadcast %cst_148 : f32 to vector<2x32xf32>
    %298 = arith.addf %297, %296 : vector<2x32xf32>
    %299 = arith.divf %297, %298 : vector<2x32xf32>
    %300 = vector.extract_strided_slice %74 {offsets = [14, 0], sizes = [2, 32], strides = [1, 1]} : vector<16x32xf32> to vector<2x32xf32>
    %301 = arith.addf %300, %289 : vector<2x32xf32>
    %302 = arith.negf %301 : vector<2x32xf32>
    %303 = math.exp %302 : vector<2x32xf32>
    %cst_149 = arith.constant 1.000000e+00 : f32
    %304 = vector.broadcast %cst_149 : f32 to vector<2x32xf32>
    %305 = arith.addf %304, %303 : vector<2x32xf32>
    %306 = arith.divf %304, %305 : vector<2x32xf32>
    %307 = vector.extract_strided_slice %79 {offsets = [14, 0], sizes = [2, 32], strides = [1, 1]} : vector<16x32xf32> to vector<2x32xf32>
    %308 = arith.mulf %299, %292 : vector<2x32xf32>
    %309 = arith.addf %307, %308 : vector<2x32xf32>
    %310 = math.tanh %309 : vector<2x32xf32>
    %cst_150 = arith.constant 1.000000e+00 : f32
    %311 = vector.broadcast %cst_150 : f32 to vector<2x32xf32>
    %312 = arith.subf %311, %306 : vector<2x32xf32>
    %313 = arith.mulf %312, %310 : vector<2x32xf32>
    %314 = arith.mulf %306, %286 : vector<2x32xf32>
    %315 = arith.addf %313, %314 : vector<2x32xf32>
    %c14_151 = arith.constant 14 : index
    %c0_152 = arith.constant 0 : index
    %316 = vector.load %arg17[%c14_151, %c0_152] : memref<16x32xf32, #tpu.memory_space<vmem>>, vector<2x32xf32>
    tpu.vector_store %arg17[%c14_151, %c0_152], %315 {strides = array<i32>} : memref<16x32xf32, #tpu.memory_space<vmem>>, vector<2x32xf32>,
    %c0_153 = arith.constant 0 : index
    %c0_154 = arith.constant 0 : index
    %317 = vector.load %arg17[%c0_153, %c0_154] : memref<16x32xf32, #tpu.memory_space<vmem>>, vector<16x32xf32>
    %c0_155 = arith.constant 0 : index
    %c0_156 = arith.constant 0 : index
    %318 = vector.load %arg12[%c0_155, %c0_156] : memref<32x128xf32, #tpu.memory_space<vmem>>, vector<32x128xf32>
    %cst_157 = arith.constant dense<0.000000e+00> : vector<16x128xf32>
    %319 = tpu.matmul %317, %318, %cst_157 {dimension_numbers = #tpu.dot_dimension_numbers<[1], [0], [0], [1], [0, 0, 1, 1], [], []>} : vector<16x32xf32>, vector<32x128xf32>, vector<16x128xf32> -> vector<16x128xf32>
    %c0_158 = arith.constant 0 : index
    %c0_159 = arith.constant 0 : index
    %320 = vector.load %arg13[%c0_158, %c0_159] : memref<1x128xf32, #tpu.memory_space<vmem>>, vector<1x128xf32>
    %321 = vector.broadcast %320 : vector<1x128xf32> to vector<16x128xf32>
    %322 = arith.addf %319, %321 : vector<16x128xf32>
    %c0_160 = arith.constant 0 : index
    %c0_161 = arith.constant 0 : index
    %323 = vector.load %arg14[%c0_160, %c0_161] : memref<16x128xf32, #tpu.memory_space<vmem>>, vector<16x128xf32>
    tpu.vector_store %arg14[%c0_160, %c0_161], %322 {strides = array<i32>} : memref<16x128xf32, #tpu.memory_space<vmem>>, vector<16x128xf32>,
    %c0_162 = arith.constant 0 : index
    %c0_163 = arith.constant 0 : index
    %324 = vector.load %arg15[%c0_162, %c0_163] : memref<2x32xf32, #tpu.memory_space<vmem>>, vector<2x32xf32>
    tpu.vector_store %arg15[%c0_162, %c0_163], %315 {strides = array<i32>} : memref<2x32xf32, #tpu.memory_space<vmem>>, vector<2x32xf32>,
    return
  }
}

</mosaic_0001>

<llo_original>
// kernel: tpu_custom_call.1
$region0: #{tpu_custom_call.1}
  #allocation0 [shape = 'u32[]', space=smem, size = 0x4, offset = 0x4, fixed_abs, tag = 'smem constant byte address 0x4 - core index']
  #allocation1 [shape = 'u32[144,128]{1,0:T(1,128)}', space=vmem, size = 0x12000, scoped, tag = 'internal scratch']
  #allocation2 [shape = 'f32[16,32]{1,0:T(8,128)}', space=vmem, size = 0x2000, scoped, tag = 'scratch operand']
  #allocation3 [shape = 'f32[16,32]{1,0:T(8,128)}', space=vmem, size = 0x2000, scoped, tag = 'scratch operand']
  %s0 = inlined_call_operand.vmem [shape: s32[8,2], index: 0, kind: input, shape index: {}]
  %s1 = inlined_call_operand.hbm [shape: f32[20,32], index: 1, kind: input, shape index: {}]
  %s2 = inlined_call_operand.hbm [shape: f32[32,32], index: 2, kind: input, shape index: {}]
  %s3 = inlined_call_operand.hbm [shape: f32[32,32], index: 3, kind: input, shape index: {}]
  %s4 = inlined_call_operand.hbm [shape: f32[32,32], index: 4, kind: input, shape index: {}]
  %s5 = inlined_call_operand.hbm [shape: f32[32,32], index: 5, kind: input, shape index: {}]
  %s6 = inlined_call_operand.vmem [shape: f32[32,32], index: 6, kind: input, shape index: {}]
  %s7 = inlined_call_operand.hbm [shape: f32[32,32], index: 7, kind: input, shape index: {}]
  %s8 = inlined_call_operand.vmem [shape: f32[1,32], index: 8, kind: input, shape index: {}]
  %s9 = inlined_call_operand.vmem [shape: f32[1,32], index: 9, kind: input, shape index: {}]
  %s10 = inlined_call_operand.vmem [shape: f32[1,32], index: 10, kind: input, shape index: {}]
  %s11 = inlined_call_operand.vmem [shape: f32[1,32], index: 11, kind: input, shape index: {}]
  %s12 = inlined_call_operand.hbm [shape: f32[32,128], index: 12, kind: input, shape index: {}]
  %s13 = inlined_call_operand.vmem [shape: f32[1,128], index: 13, kind: input, shape index: {}]
  %s14 = inlined_call_operand.hbm [shape: f32[16,128], index: 14, kind: output, shape index: {0}]
  %s15 = inlined_call_operand.hbm [shape: f32[2,32], index: 15, kind: output, shape index: {1}]
  %16 = xla_tuple %s14, %s15
  %s17 = sld [smem:[#allocation0]]
  $region106: #{tpu_custom_call.1} parent=0
    _
  %s19 = ssub.s32 1, %s17
  %s20 = scalar_select 0, %s19, %s17
  $region1: #{tpu_custom_call.1} parent=0
    #allocation4 [shape = 'u8[4096]{0}', space=smem, size = 0x1000, scoped, tag = 'input window, operand 0, single buffered']
    #allocation5 [shape = 's32[1]{0}', space=sflag, size = 0x4, scoped, tag = 'scoped memory for tpu_custom_call.1']
    #allocation6 [shape = 's32[1]{0}', space=sflag, size = 0x4, scoped, tag = 'scoped memory for tpu_custom_call.1']
    #allocation7 [shape = 's32[1]{0}', space=sflag, size = 0x4, scoped, tag = 'scoped memory for tpu_custom_call.1']
    #allocation8 [shape = 'u8[12288]{0}', space=vmem, size = 0x3000, scoped, tag = 'input window, operand 1, single buffered']
    #allocation9 [shape = 'u8[16384]{0}', space=vmem, size = 0x4000, scoped, tag = 'input window, operand 2, single buffered']
    #allocation10 [shape = 's32[1]{0}', space=sflag, size = 0x4, scoped, tag = 'scoped memory for tpu_custom_call.1']
    #allocation11 [shape = 'u8[16384]{0}', space=vmem, size = 0x4000, scoped, tag = 'input window, operand 3, single buffered']
    #allocation12 [shape = 'u8[16384]{0}', space=vmem, size = 0x4000, scoped, tag = 'input window, operand 4, single buffered']
    #allocation13 [shape = 's32[1]{0}', space=sflag, size = 0x4, scoped, tag = 'scoped memory for tpu_custom_call.1']
    #allocation14 [shape = 'u8[16384]{0}', space=vmem, size = 0x4000, scoped, tag = 'input window, operand 5, single buffered']
    #allocation15 [shape = 'u8[16384]{0}', space=vmem, size = 0x4000, scoped, tag = 'input window, operand 7, single buffered']
    #allocation16 [shape = 's32[1]{0}', space=sflag, size = 0x4, scoped, tag = 'scoped memory for tpu_custom_call.1']
    #allocation17 [shape = 'u8[16384]{0}', space=vmem, size = 0x4000, scoped, tag = 'input window, operand 12, single buffered']
    #allocation18 [shape = 'u8[8192]{0}', space=vmem, size = 0x2000, scoped, tag = 'output window, operand 0, single buffered']
    #allocation19 [shape = 'u8[1024]{0}', space=vmem, size = 0x400, scoped, tag = 'output window, operand 1, single buffered']
    #allocation20 [shape = 's32[1]{0}', space=sflag, size = 0x4, scoped, tag = 'scoped memory for tpu_custom_call.1']
    %21 = vsyncpa [#allocation7], 0
    %22 = vsyncpa [#allocation5], 0
    %23 = vsyncpa [#allocation10], 0
    %24 = vsyncpa [#allocation13], 0
    %25 = vsyncpa [#allocation16], 0
    %26 = vsyncpa [#allocation6], 0
    %27 = vsyncpa [#allocation20], 0
    // Predicated region
    $region2: #{tpu_custom_call.1} parent=1 // pred_check
      _
    $region3: #{tpu_custom_call.1} parent=1 // pred_check_branch
      %29 = sbr.rel (0) target = $region5
    $region4: #{tpu_custom_call.1} parent=1 // pred_region
      %s31 = ssub.s32 128, 128
      %32 = vsyncadd [#allocation7], %s31
      %s34 = sshll.u32 %s0, 4
      %s35 = int_to_ptr.vmem [resolvable:$true] %s34
      %37 = dma.vmem_to_smem %s35, 128, [#allocation4], [#allocation7]
    $region5: #{tpu_custom_call.1} parent=1 // pred_fallthru
      _
    // Predicated region
    $region6: #{tpu_custom_call.1} parent=1 // pred_check
      _
    $region7: #{tpu_custom_call.1} parent=1 // pred_check_branch
      %39 = sbr.rel (0) target = $region9
    $region8: #{tpu_custom_call.1} parent=1 // pred_region
      %s41 = ssub.s32 384, 384
      %42 = vsyncadd [#allocation5], %s41
      %s43 = sshll.u32 [#allocation8], 4
      %s44 = int_to_ptr.vmem [resolvable:$true] %s43
      %49 = dma.hbm_to_vmem [thread:$0]  %s1, 384, %s44, [#allocation5], 128, 128, 8
    $region9: #{tpu_custom_call.1} parent=1 // pred_fallthru
      _
    // Predicated region
    $region10: #{tpu_custom_call.1} parent=1 // pred_check
      _
    $region11: #{tpu_custom_call.1} parent=1 // pred_check_branch
      %51 = sbr.rel (0) target = $region13
    $region12: #{tpu_custom_call.1} parent=1 // pred_region
      %s53 = ssub.s32 512, 512
      %54 = vsyncadd [#allocation10], %s53
      %s55 = sshll.u32 [#allocation9], 4
      %s56 = int_to_ptr.vmem [resolvable:$true] %s55
      %61 = dma.hbm_to_vmem [thread:$0]  %s2, 512, %s56, [#allocation10], 128, 128, 8
    $region13: #{tpu_custom_call.1} parent=1 // pred_fallthru
      _
    // Predicated region
    $region14: #{tpu_custom_call.1} parent=1 // pred_check
      _
    $region15: #{tpu_custom_call.1} parent=1 // pred_check_branch
      %63 = sbr.rel (0) target = $region17
    $region16: #{tpu_custom_call.1} parent=1 // pred_region
      %s65 = ssub.s32 512, 512
      %66 = vsyncadd [#allocation10], %s65
      %s67 = sshll.u32 [#allocation11], 4
      %s68 = int_to_ptr.vmem [resolvable:$true] %s67
      %73 = dma.hbm_to_vmem [thread:$0]  %s3, 512, %s68, [#allocation10], 128, 128, 8
    $region17: #{tpu_custom_call.1} parent=1 // pred_fallthru
      _
    // Predicated region
    $region18: #{tpu_custom_call.1} parent=1 // pred_check
      _
    $region19: #{tpu_custom_call.1} parent=1 // pred_check_branch
      %75 = sbr.rel (0) target = $region21
    $region20: #{tpu_custom_call.1} parent=1 // pred_region
      %s77 = ssub.s32 512, 512
      %78 = vsyncadd [#allocation13], %s77
      %s79 = sshll.u32 [#allocation12], 4
      %s80 = int_to_ptr.vmem [resolvable:$true] %s79
      %85 = dma.hbm_to_vmem [thread:$0]  %s4, 512, %s80, [#allocation13], 128, 128, 8
    $region21: #{tpu_custom_call.1} parent=1 // pred_fallthru
      _
    // Predicated region
    $region22: #{tpu_custom_call.1} parent=1 // pred_check
      _
    $region23: #{tpu_custom_call.1} parent=1 // pred_check_branch
      %87 = sbr.rel (0) target = $region25
    $region24: #{tpu_custom_call.1} parent=1 // pred_region
      %s89 = ssub.s32 512, 512
      %90 = vsyncadd [#allocation13], %s89
      %s91 = sshll.u32 [#allocation14], 4
      %s92 = int_to_ptr.vmem [resolvable:$true] %s91
      %97 = dma.hbm_to_vmem [thread:$0]  %s5, 512, %s92, [#allocation13], 128, 128, 8
    $region25: #{tpu_custom_call.1} parent=1 // pred_fallthru
      _
    // Predicated region
    $region26: #{tpu_custom_call.1} parent=1 // pred_check
      _
    $region27: #{tpu_custom_call.1} parent=1 // pred_check_branch
      %99 = sbr.rel (0) target = $region29
    $region28: #{tpu_custom_call.1} parent=1 // pred_region
      _
    $region29: #{tpu_custom_call.1} parent=1 // pred_fallthru
      _
    // Predicated region
    $region30: #{tpu_custom_call.1} parent=1 // pred_check
      _
    $region31: #{tpu_custom_call.1} parent=1 // pred_check_branch
      %101 = sbr.rel (0) target = $region33
    $region32: #{tpu_custom_call.1} parent=1 // pred_region
      %s103 = ssub.s32 512, 512
      %104 = vsyncadd [#allocation16], %s103
      %s105 = sshll.u32 [#allocation15], 4
      %s106 = int_to_ptr.vmem [resolvable:$true] %s105
      %111 = dma.hbm_to_vmem [thread:$0]  %s7, 512, %s106, [#allocation16], 128, 128, 8
    $region33: #{tpu_custom_call.1} parent=1 // pred_fallthru
      _
    // Predicated region
    $region34: #{tpu_custom_call.1} parent=1 // pred_check
      _
    $region35: #{tpu_custom_call.1} parent=1 // pred_check_branch
      %113 = sbr.rel (0) target = $region37
    $region36: #{tpu_custom_call.1} parent=1 // pred_region
      _
    $region37: #{tpu_custom_call.1} parent=1 // pred_fallthru
      _
    // Predicated region
    $region38: #{tpu_custom_call.1} parent=1 // pred_check
      _
    $region39: #{tpu_custom_call.1} parent=1 // pred_check_branch
      %115 = sbr.rel (0) target = $region41
    $region40: #{tpu_custom_call.1} parent=1 // pred_region
      _
    $region41: #{tpu_custom_call.1} parent=1 // pred_fallthru
      _
    // Predicated region
    $region42: #{tpu_custom_call.1} parent=1 // pred_check
      _
    $region43: #{tpu_custom_call.1} parent=1 // pred_check_branch
      %117 = sbr.rel (0) target = $region45
    $region44: #{tpu_custom_call.1} parent=1 // pred_region
      _
    $region45: #{tpu_custom_call.1} parent=1 // pred_fallthru
      _
    // Predicated region
    $region46: #{tpu_custom_call.1} parent=1 // pred_check
      _
    $region47: #{tpu_custom_call.1} parent=1 // pred_check_branch
      %119 = sbr.rel (0) target = $region49
    $region48: #{tpu_custom_call.1} parent=1 // pred_region
      _
    $region49: #{tpu_custom_call.1} parent=1 // pred_fallthru
      _
    // Predicated region
    $region50: #{tpu_custom_call.1} parent=1 // pred_check
      _
    $region51: #{tpu_custom_call.1} parent=1 // pred_check_branch
      %121 = sbr.rel (0) target = $region53
    $region52: #{tpu_custom_call.1} parent=1 // pred_region
      %s123 = ssub.s32 512, 512
      %124 = vsyncadd [#allocation16], %s123
      %s125 = sshll.u32 [#allocation17], 4
      %s126 = int_to_ptr.vmem [resolvable:$true] %s125
      %131 = dma.hbm_to_vmem [thread:$0]  %s12, 512, %s126, [#allocation16], 128, 128, 8
    $region53: #{tpu_custom_call.1} parent=1 // pred_fallthru
      _
    // Predicated region
    $region54: #{tpu_custom_call.1} parent=1 // pred_check
      _
    $region55: #{tpu_custom_call.1} parent=1 // pred_check_branch
      %133 = sbr.rel (0) target = $region57
    $region56: #{tpu_custom_call.1} parent=1 // pred_region
      _
    $region57: #{tpu_custom_call.1} parent=1 // pred_fallthru
      _
    // Predicated region
    $region58: #{tpu_custom_call.1} parent=1 // pred_check
      _
    $region59: #{tpu_custom_call.1} parent=1 // pred_check_branch
      %135 = sbr.rel (0) target = $region61
    $region60: #{tpu_custom_call.1} parent=1 // pred_region
      %136 = dma.done [#allocation7], 128
    $region61: #{tpu_custom_call.1} parent=1 // pred_fallthru
      _
    // Predicated region
    $region62: #{tpu_custom_call.1} parent=1 // pred_check
      _
    $region63: #{tpu_custom_call.1} parent=1 // pred_check_branch
      %138 = sbr.rel (0) target = $region65
    $region64: #{tpu_custom_call.1} parent=1 // pred_region
      %139 = dma.done [#allocation5], 384
    $region65: #{tpu_custom_call.1} parent=1 // pred_fallthru
      _
    // Predicated region
    $region66: #{tpu_custom_call.1} parent=1 // pred_check
      _
    $region67: #{tpu_custom_call.1} parent=1 // pred_check_branch
      %141 = sbr.rel (0) target = $region69
    $region68: #{tpu_custom_call.1} parent=1 // pred_region
      %142 = dma.done [#allocation10], 512
    $region69: #{tpu_custom_call.1} parent=1 // pred_fallthru
      _
    // Predicated region
    $region70: #{tpu_custom_call.1} parent=1 // pred_check
      _
    $region71: #{tpu_custom_call.1} parent=1 // pred_check_branch
      %144 = sbr.rel (0) target = $region73
    $region72: #{tpu_custom_call.1} parent=1 // pred_region
      %145 = dma.done [#allocation10], 512
    $region73: #{tpu_custom_call.1} parent=1 // pred_fallthru
      _
    // Predicated region
    $region74: #{tpu_custom_call.1} parent=1 // pred_check
      _
    $region75: #{tpu_custom_call.1} parent=1 // pred_check_branch
      %147 = sbr.rel (0) target = $region77
    $region76: #{tpu_custom_call.1} parent=1 // pred_region
      %148 = dma.done [#allocation13], 512
    $region77: #{tpu_custom_call.1} parent=1 // pred_fallthru
      _
    // Predicated region
    $region78: #{tpu_custom_call.1} parent=1 // pred_check
      _
    $region79: #{tpu_custom_call.1} parent=1 // pred_check_branch
      %150 = sbr.rel (0) target = $region81
    $region80: #{tpu_custom_call.1} parent=1 // pred_region
      %151 = dma.done [#allocation13], 512
    $region81: #{tpu_custom_call.1} parent=1 // pred_fallthru
      _
    // Predicated region
    $region82: #{tpu_custom_call.1} parent=1 // pred_check
      _
    $region83: #{tpu_custom_call.1} parent=1 // pred_check_branch
      %153 = sbr.rel (0) target = $region85
    $region84: #{tpu_custom_call.1} parent=1 // pred_region
      %154 = dma.done [#allocation16], 512
    $region85: #{tpu_custom_call.1} parent=1 // pred_fallthru
      _
    // Predicated region
    $region86: #{tpu_custom_call.1} parent=1 // pred_check
      _
    $region87: #{tpu_custom_call.1} parent=1 // pred_check_branch
      %156 = sbr.rel (0) target = $region89
    $region88: #{tpu_custom_call.1} parent=1 // pred_region
      %157 = dma.done [#allocation16], 512
    $region89: #{tpu_custom_call.1} parent=1 // pred_fallthru
      _
    %158 = sfence
    %s159 = sld [smem:[#allocation4]]
    %s160 = scalar_lea.vmem [#allocation8], %s159
    %v161 = vld [vmem:[%s160] sm:$0x1]
    %vm162 = vcmask 253952
    %163 = vst.msk [vmem:[#allocation2] sm:$0x1] %vm162, %v161
    %s164 = sld [smem:[#allocation4 + $0x1]]
    %s165 = scalar_lea.vmem [#allocation8], %s164
    %v166 = vld [vmem:[%s165] sm:$0x1]
    %167 = vst.msk [vmem:[#allocation2 + $0x1] sm:$0x1] %vm162, %v166
    %s168 = sld [smem:[#allocation4 + $0x80]]
    %s169 = scalar_lea.vmem [#allocation8], %s168
    %v170 = vld [vmem:[%s169] sm:$0x1]
    %171 = vst.msk [vmem:[#allocation2 + $0x2] sm:$0x1] %vm162, %v170
    %s172 = sld [smem:[#allocation4 + $0x81]]
    %s173 = scalar_lea.vmem [#allocation8], %s172
    %v174 = vld [vmem:[%s173] sm:$0x1]
    %175 = vst.msk [vmem:[#allocation2 + $0x3] sm:$0x1] %vm162, %v174
    %s176 = sld [smem:[#allocation4 + $0x100]]
    %s177 = scalar_lea.vmem [#allocation8], %s176
    %v178 = vld [vmem:[%s177] sm:$0x1]
    %179 = vst.msk [vmem:[#allocation2 + $0x4] sm:$0x1] %vm162, %v178
    %s180 = sld [smem:[#allocation4 + $0x101]]
    %s181 = scalar_lea.vmem [#allocation8], %s180
    %v182 = vld [vmem:[%s181] sm:$0x1]
    %183 = vst.msk [vmem:[#allocation2 + $0x5] sm:$0x1] %vm162, %v182
    %s184 = sld [smem:[#allocation4 + $0x180]]
    %s185 = scalar_lea.vmem [#allocation8], %s184
    %v186 = vld [vmem:[%s185] sm:$0x1]
    %187 = vst.msk [vmem:[#allocation2 + $0x6] sm:$0x1] %vm162, %v186
    %s188 = sld [smem:[#allocation4 + $0x181]]
    %s189 = scalar_lea.vmem [#allocation8], %s188
    %v190 = vld [vmem:[%s189] sm:$0x1]
    %191 = vst.msk [vmem:[#allocation2 + $0x7] sm:$0x1] %vm162, %v190
    %s192 = sld [smem:[#allocation4 + $0x200]]
    %s193 = scalar_lea.vmem [#allocation8], %s192
    %v194 = vld [vmem:[%s193] sm:$0x1]
    %195 = vst.msk [vmem:[#allocation2 + $0x8] sm:$0x1] %vm162, %v194
    %s196 = sld [smem:[#allocation4 + $0x201]]
    %s197 = scalar_lea.vmem [#allocation8], %s196
    %v198 = vld [vmem:[%s197] sm:$0x1]
    %199 = vst.msk [vmem:[#allocation2 + $0x9] sm:$0x1] %vm162, %v198
    %s200 = sld [smem:[#allocation4 + $0x280]]
    %s201 = scalar_lea.vmem [#allocation8], %s200
    %v202 = vld [vmem:[%s201] sm:$0x1]
    %203 = vst.msk [vmem:[#allocation2 + $0xa] sm:$0x1] %vm162, %v202
    %s204 = sld [smem:[#allocation4 + $0x281]]
    %s205 = scalar_lea.vmem [#allocation8], %s204
    %v206 = vld [vmem:[%s205] sm:$0x1]
    %207 = vst.msk [vmem:[#allocation2 + $0xb] sm:$0x1] %vm162, %v206
    %s208 = sld [smem:[#allocation4 + $0x300]]
    %s209 = scalar_lea.vmem [#allocation8], %s208
    %v210 = vld [vmem:[%s209] sm:$0x1]
    %211 = vst.msk [vmem:[#allocation2 + $0xc] sm:$0x1] %vm162, %v210
    %s212 = sld [smem:[#allocation4 + $0x301]]
    %s213 = scalar_lea.vmem [#allocation8], %s212
    %v214 = vld [vmem:[%s213] sm:$0x1]
    %215 = vst.msk [vmem:[#allocation2 + $0xd] sm:$0x1] %vm162, %v214
    %s216 = sld [smem:[#allocation4 + $0x380]]
    %s217 = scalar_lea.vmem [#allocation8], %s216
    %v218 = vld [vmem:[%s217] sm:$0x1]
    %219 = vst.msk [vmem:[#allocation2 + $0xe] sm:$0x1] %vm162, %v218
    %s220 = sld [smem:[#allocation4 + $0x381]]
    %s221 = scalar_lea.vmem [#allocation8], %s220
    %v222 = vld [vmem:[%s221] sm:$0x1]
    %223 = vst.msk [vmem:[#allocation2 + $0xf] sm:$0x1] %vm162, %v222
    %v224 = vld [vmem:[#allocation2] sm:$0xff]
    %v225 = vld [vmem:[#allocation2 + $0x8] sm:$0xff]
    %v226 = vld [vmem:[#allocation9] sm:$0xff]
    %v227 = vld [vmem:[#allocation9 + $0x8] sm:$0xff]
    %v228 = vld [vmem:[#allocation9 + $0x10] sm:$0xff]
    %v229 = vld [vmem:[#allocation9 + $0x18] sm:$0xff]
    %v230 = vld [vmem:[%s8] sm:$0x1]
    %v232 = vlaneseq
    %v233 = vshrl.u32 %v232, 7
    %v234 = vsub.s32 0, %v233
    %v235 = vrot.slane %v230, %v234
    %vm237 = vcmask 261120
    %v239 = vsel %vm237, %v224, 0
    %v242 = vsel %vm237, %v225, 0
    %244 = vmatprep.subr.mxu0 0.0
    %245 = vmatpush1.msra.mxu0 %v226
    %246 = vmatprep.subr.mxu0 0.0
    %247 = vmatpush1.msra.mxu0 %v227
    %248 = vmatprep.subr.mxu0 0.0
    %249 = vmatpush1.msra.mxu0 %v228
    %250 = vmatprep.subr.mxu0 0.0
    %251 = vmatpush1.msra.mxu0 %v229
    %252 = vmatprep.subr.mxu0 0.0
    %253 = vmatpush1.msra.mxu0 0.0
    %254 = vmatprep.subr.mxu0 0.0
    %255 = vmatpush1.msra.mxu0 0.0
    %256 = vmatprep.subr.mxu0 0.0
    %257 = vmatpush1.msra.mxu0 0.0
    %258 = vmatprep.subr.mxu0 0.0
    %259 = vmatpush1.msra.mxu0 0.0
    %260 = vmatprep.subr.mxu0 0.0
    %261 = vmatpush1.msra.mxu0 0.0
    %262 = vmatprep.subr.mxu0 0.0
    %263 = vmatpush1.msra.mxu0 0.0
    %264 = vmatprep.subr.mxu0 0.0
    %265 = vmatpush1.msra.mxu0 0.0
    %266 = vmatprep.subr.mxu0 0.0
    %267 = vmatpush1.msra.mxu0 0.0
    %268 = vmatprep.subr.mxu0 0.0
    %269 = vmatpush1.msra.mxu0 0.0
    %270 = vmatprep.subr.mxu0 0.0
    %271 = vmatpush1.msra.mxu0 0.0
    %272 = vmatprep.subr.mxu0 0.0
    %273 = vmatpush1.msra.mxu0 0.0
    %274 = vmatprep.subr.mxu0 0.0
    %275 = vmatpush1.msra.mxu0 0.0
    %276 = vmatprep.subr.mxu0 0.0
    %277 = vmatpush1.msra.mxu0 0.0
    %278 = vmatprep.subr.mxu0 0.0
    %279 = vmatpush1.msra.mxu0 0.0
    %280 = vmatprep.subr.mxu0 0.0
    %281 = vmatpush1.msra.mxu0 0.0
    %282 = vmatprep.subr.mxu0 0.0
    %283 = vmatpush1.msra.mxu0 0.0
    %284 = vmatprep.subr.mxu0 0.0
    %285 = vmatpush1.msra.mxu0 0.0
    %286 = vmatprep.subr.mxu0 0.0
    %287 = vmatpush1.msra.mxu0 0.0
    %288 = vmatprep.subr.mxu0 0.0
    %289 = vmatpush1.msra.mxu0 0.0
    %290 = vmatprep.subr.mxu0 0.0
    %291 = vmatpush1.msra.mxu0 0.0
    %292 = vmatprep.subr.mxu0 0.0
    %293 = vmatpush1.msra.mxu0 0.0
    %294 = vmatprep.subr.mxu0 0.0
    %295 = vmatpush1.msra.mxu0 0.0
    %296 = vmatprep.subr.mxu0 0.0
    %297 = vmatpush1.msra.mxu0 0.0
    %298 = vmatprep.subr.mxu0 0.0
    %299 = vmatpush1.msra.mxu0 0.0
    %300 = vmatprep.subr.mxu0 0.0
    %301 = vmatpush1.msra.mxu0 0.0
    %302 = vmatprep.subr.mxu0 0.0
    %303 = vmatpush1.msra.mxu0 0.0
    %304 = vmatprep.subr.mxu0 0.0
    %305 = vmatpush1.msra.mxu0 0.0
    %306 = vmatprep.subr.mxu0 0.0
    %307 = vmatpush1.msra.mxu0 0.0
    %308 = vmatprep.mubr.f32.mxu0 0.0
    %309 = vmatmul.mubr.f32.gmra.mrb[0].mxu0 %v239
    %v310 = vpop.f32.mrb[0].mxu0
    %v311 = vadd.f32 %v235, %v310
    %v312 = vpop.f32.mrb[0].mxu0
    %313 = vmatprep.mubr.f32.mxu0 0.0
    %314 = vmatmul.mubr.f32.gmra.mrb[0].mxu0 %v242
    %v315 = vpop.f32.mrb[0].mxu0
    %v316 = vadd.f32 %v235, %v315
    %v317 = vpop.f32.mrb[0].mxu0
    %318 = vdwg.mxu0
    %v319 = vld [vmem:[#allocation11] sm:$0xff]
    %v320 = vld [vmem:[#allocation11 + $0x8] sm:$0xff]
    %v321 = vld [vmem:[#allocation11 + $0x10] sm:$0xff]
    %v322 = vld [vmem:[#allocation11 + $0x18] sm:$0xff]
    %v323 = vld [vmem:[%s9] sm:$0x1]
    %v325 = vlaneseq
    %v326 = vshrl.u32 %v325, 7
    %v327 = vsub.s32 0, %v326
    %v328 = vrot.slane %v323, %v327
    %330 = vmatprep.subr.mxu0 0.0
    %331 = vmatpush1.msra.mxu0 %v319
    %332 = vmatprep.subr.mxu0 0.0
    %333 = vmatpush1.msra.mxu0 %v320
    %334 = vmatprep.subr.mxu0 0.0
    %335 = vmatpush1.msra.mxu0 %v321
    %336 = vmatprep.subr.mxu0 0.0
    %337 = vmatpush1.msra.mxu0 %v322
    %338 = vmatprep.subr.mxu0 0.0
    %339 = vmatpush1.msra.mxu0 0.0
    %340 = vmatprep.subr.mxu0 0.0
    %341 = vmatpush1.msra.mxu0 0.0
    %342 = vmatprep.subr.mxu0 0.0
    %343 = vmatpush1.msra.mxu0 0.0
    %344 = vmatprep.subr.mxu0 0.0
    %345 = vmatpush1.msra.mxu0 0.0
    %346 = vmatprep.subr.mxu0 0.0
    %347 = vmatpush1.msra.mxu0 0.0
    %348 = vmatprep.subr.mxu0 0.0
    %349 = vmatpush1.msra.mxu0 0.0
    %350 = vmatprep.subr.mxu0 0.0
    %351 = vmatpush1.msra.mxu0 0.0
    %352 = vmatprep.subr.mxu0 0.0
    %353 = vmatpush1.msra.mxu0 0.0
    %354 = vmatprep.subr.mxu0 0.0
    %355 = vmatpush1.msra.mxu0 0.0
    %356 = vmatprep.subr.mxu0 0.0
    %357 = vmatpush1.msra.mxu0 0.0
    %358 = vmatprep.subr.mxu0 0.0
    %359 = vmatpush1.msra.mxu0 0.0
    %360 = vmatprep.subr.mxu0 0.0
    %361 = vmatpush1.msra.mxu0 0.0
    %362 = vmatprep.subr.mxu0 0.0
    %363 = vmatpush1.msra.mxu0 0.0
    %364 = vmatprep.subr.mxu0 0.0
    %365 = vmatpush1.msra.mxu0 0.0
    %366 = vmatprep.subr.mxu0 0.0
    %367 = vmatpush1.msra.mxu0 0.0
    %368 = vmatprep.subr.mxu0 0.0
    %369 = vmatpush1.msra.mxu0 0.0
    %370 = vmatprep.subr.mxu0 0.0
    %371 = vmatpush1.msra.mxu0 0.0
    %372 = vmatprep.subr.mxu0 0.0
    %373 = vmatpush1.msra.mxu0 0.0
    %374 = vmatprep.subr.mxu0 0.0
    %375 = vmatpush1.msra.mxu0 0.0
    %376 = vmatprep.subr.mxu0 0.0
    %377 = vmatpush1.msra.mxu0 0.0
    %378 = vmatprep.subr.mxu0 0.0
    %379 = vmatpush1.msra.mxu0 0.0
    %380 = vmatprep.subr.mxu0 0.0
    %381 = vmatpush1.msra.mxu0 0.0
    %382 = vmatprep.subr.mxu0 0.0
    %383 = vmatpush1.msra.mxu0 0.0
    %384 = vmatprep.subr.mxu0 0.0
    %385 = vmatpush1.msra.mxu0 0.0
    %386 = vmatprep.subr.mxu0 0.0
    %387 = vmatpush1.msra.mxu0 0.0
    %388 = vmatprep.subr.mxu0 0.0
    %389 = vmatpush1.msra.mxu0 0.0
    %390 = vmatprep.subr.mxu0 0.0
    %391 = vmatpush1.msra.mxu0 0.0
    %392 = vmatprep.subr.mxu0 0.0
    %393 = vmatpush1.msra.mxu0 0.0
    %394 = vmatprep.mubr.f32.mxu0 0.0
    %395 = vmatmul.mubr.f32.gmra.mrb[0].mxu0 %v239
    %v396 = vpop.f32.mrb[0].mxu0
    %v397 = vadd.f32 %v328, %v396
    %v398 = vpop.f32.mrb[0].mxu0
    %399 = vmatprep.mubr.f32.mxu0 0.0
    %400 = vmatmul.mubr.f32.gmra.mrb[0].mxu0 %v242
    %v401 = vpop.f32.mrb[0].mxu0
    %v402 = vadd.f32 %v328, %v401
    %v403 = vpop.f32.mrb[0].mxu0
    %404 = vdwg.mxu0
    %v405 = vld [vmem:[#allocation12] sm:$0xff]
    %v406 = vld [vmem:[#allocation12 + $0x8] sm:$0xff]
    %v407 = vld [vmem:[#allocation12 + $0x10] sm:$0xff]
    %v408 = vld [vmem:[#allocation12 + $0x18] sm:$0xff]
    %v409 = vld [vmem:[%s10] sm:$0x1]
    %v411 = vlaneseq
    %v412 = vshrl.u32 %v411, 7
    %v413 = vsub.s32 0, %v412
    %v414 = vrot.slane %v409, %v413
    %416 = vmatprep.subr.mxu0 0.0
    %417 = vmatpush1.msra.mxu0 %v405
    %418 = vmatprep.subr.mxu0 0.0
    %419 = vmatpush1.msra.mxu0 %v406
    %420 = vmatprep.subr.mxu0 0.0
    %421 = vmatpush1.msra.mxu0 %v407
    %422 = vmatprep.subr.mxu0 0.0
    %423 = vmatpush1.msra.mxu0 %v408
    %424 = vmatprep.subr.mxu0 0.0
    %425 = vmatpush1.msra.mxu0 0.0
    %426 = vmatprep.subr.mxu0 0.0
    %427 = vmatpush1.msra.mxu0 0.0
    %428 = vmatprep.subr.mxu0 0.0
    %429 = vmatpush1.msra.mxu0 0.0
    %430 = vmatprep.subr.mxu0 0.0
    %431 = vmatpush1.msra.mxu0 0.0
    %432 = vmatprep.subr.mxu0 0.0
    %433 = vmatpush1.msra.mxu0 0.0
    %434 = vmatprep.subr.mxu0 0.0
    %435 = vmatpush1.msra.mxu0 0.0
    %436 = vmatprep.subr.mxu0 0.0
    %437 = vmatpush1.msra.mxu0 0.0
    %438 = vmatprep.subr.mxu0 0.0
    %439 = vmatpush1.msra.mxu0 0.0
    %440 = vmatprep.subr.mxu0 0.0
    %441 = vmatpush1.msra.mxu0 0.0
    %442 = vmatprep.subr.mxu0 0.0
    %443 = vmatpush1.msra.mxu0 0.0
    %444 = vmatprep.subr.mxu0 0.0
    %445 = vmatpush1.msra.mxu0 0.0
    %446 = vmatprep.subr.mxu0 0.0
    %447 = vmatpush1.msra.mxu0 0.0
    %448 = vmatprep.subr.mxu0 0.0
    %449 = vmatpush1.msra.mxu0 0.0
    %450 = vmatprep.subr.mxu0 0.0
    %451 = vmatpush1.msra.mxu0 0.0
    %452 = vmatprep.subr.mxu0 0.0
    %453 = vmatpush1.msra.mxu0 0.0
    %454 = vmatprep.subr.mxu0 0.0
    %455 = vmatpush1.msra.mxu0 0.0
    %456 = vmatprep.subr.mxu0 0.0
    %457 = vmatpush1.msra.mxu0 0.0
    %458 = vmatprep.subr.mxu0 0.0
    %459 = vmatpush1.msra.mxu0 0.0
    %460 = vmatprep.subr.mxu0 0.0
    %461 = vmatpush1.msra.mxu0 0.0
    %462 = vmatprep.subr.mxu0 0.0
    %463 = vmatpush1.msra.mxu0 0.0
    %464 = vmatprep.subr.mxu0 0.0
    %465 = vmatpush1.msra.mxu0 0.0
    %466 = vmatprep.subr.mxu0 0.0
    %467 = vmatpush1.msra.mxu0 0.0
    %468 = vmatprep.subr.mxu0 0.0
    %469 = vmatpush1.msra.mxu0 0.0
    %470 = vmatprep.subr.mxu0 0.0
    %471 = vmatpush1.msra.mxu0 0.0
    %472 = vmatprep.subr.mxu0 0.0
    %473 = vmatpush1.msra.mxu0 0.0
    %474 = vmatprep.subr.mxu0 0.0
    %475 = vmatpush1.msra.mxu0 0.0
    %476 = vmatprep.subr.mxu0 0.0
    %477 = vmatpush1.msra.mxu0 0.0
    %478 = vmatprep.subr.mxu0 0.0
    %479 = vmatpush1.msra.mxu0 0.0
    %480 = vmatprep.mubr.f32.mxu0 0.0
    %481 = vmatmul.mubr.f32.gmra.mrb[0].mxu0 %v239
    %v482 = vpop.f32.mrb[0].mxu0
    %v483 = vadd.f32 %v414, %v482
    %v484 = vpop.f32.mrb[0].mxu0
    %485 = vmatprep.mubr.f32.mxu0 0.0
    %486 = vmatmul.mubr.f32.gmra.mrb[0].mxu0 %v242
    %v487 = vpop.f32.mrb[0].mxu0
    %v488 = vadd.f32 %v414, %v487
    %v489 = vpop.f32.mrb[0].mxu0
    %490 = vdwg.mxu0
    %v491 = vld [vmem:[#allocation14] sm:$0xff]
    %v492 = vld [vmem:[#allocation14 + $0x8] sm:$0xff]
    %v493 = vld [vmem:[#allocation14 + $0x10] sm:$0xff]
    %v494 = vld [vmem:[#allocation14 + $0x18] sm:$0xff]
    %v495 = vld [vmem:[%s6] sm:$0xff]
    %v496 = vld [vmem:[%s6 + $0x8] sm:$0xff]
    %v497 = vld [vmem:[%s6 + $0x10] sm:$0xff]
    %v498 = vld [vmem:[%s6 + $0x18] sm:$0xff]
    %v499 = vld [vmem:[#allocation15] sm:$0xff]
    %v500 = vld [vmem:[#allocation15 + $0x8] sm:$0xff]
    %v501 = vld [vmem:[#allocation15 + $0x10] sm:$0xff]
    %v502 = vld [vmem:[#allocation15 + $0x18] sm:$0xff]
    %v503 = vld [vmem:[%s11] sm:$0x1]
    %v505 = vsel %vm237, 0.0, 0
    %507 = vmatprep.subr.mxu0 0.0
    %508 = vmatpush1.msra.mxu0 %v491
    %509 = vmatprep.subr.mxu0 0.0
    %510 = vmatpush1.msra.mxu0 %v492
    %511 = vmatprep.subr.mxu0 0.0
    %512 = vmatpush1.msra.mxu0 %v493
    %513 = vmatprep.subr.mxu0 0.0
    %514 = vmatpush1.msra.mxu0 %v494
    %515 = vmatprep.subr.mxu0 0.0
    %516 = vmatpush1.msra.mxu0 0.0
    %517 = vmatprep.subr.mxu0 0.0
    %518 = vmatpush1.msra.mxu0 0.0
    %519 = vmatprep.subr.mxu0 0.0
    %520 = vmatpush1.msra.mxu0 0.0
    %521 = vmatprep.subr.mxu0 0.0
    %522 = vmatpush1.msra.mxu0 0.0
    %523 = vmatprep.subr.mxu0 0.0
    %524 = vmatpush1.msra.mxu0 0.0
    %525 = vmatprep.subr.mxu0 0.0
    %526 = vmatpush1.msra.mxu0 0.0
    %527 = vmatprep.subr.mxu0 0.0
    %528 = vmatpush1.msra.mxu0 0.0
    %529 = vmatprep.subr.mxu0 0.0
    %530 = vmatpush1.msra.mxu0 0.0
    %531 = vmatprep.subr.mxu0 0.0
    %532 = vmatpush1.msra.mxu0 0.0
    %533 = vmatprep.subr.mxu0 0.0
    %534 = vmatpush1.msra.mxu0 0.0
    %535 = vmatprep.subr.mxu0 0.0
    %536 = vmatpush1.msra.mxu0 0.0
    %537 = vmatprep.subr.mxu0 0.0
    %538 = vmatpush1.msra.mxu0 0.0
    %539 = vmatprep.subr.mxu0 0.0
    %540 = vmatpush1.msra.mxu0 0.0
    %541 = vmatprep.subr.mxu0 0.0
    %542 = vmatpush1.msra.mxu0 0.0
    %543 = vmatprep.subr.mxu0 0.0
    %544 = vmatpush1.msra.mxu0 0.0
    %545 = vmatprep.subr.mxu0 0.0
    %546 = vmatpush1.msra.mxu0 0.0
    %547 = vmatprep.subr.mxu0 0.0
    %548 = vmatpush1.msra.mxu0 0.0
    %549 = vmatprep.subr.mxu0 0.0
    %550 = vmatpush1.msra.mxu0 0.0
    %551 = vmatprep.subr.mxu0 0.0
    %552 = vmatpush1.msra.mxu0 0.0
    %553 = vmatprep.subr.mxu0 0.0
    %554 = vmatpush1.msra.mxu0 0.0
    %555 = vmatprep.subr.mxu0 0.0
    %556 = vmatpush1.msra.mxu0 0.0
    %557 = vmatprep.subr.mxu0 0.0
    %558 = vmatpush1.msra.mxu0 0.0
    %559 = vmatprep.subr.mxu0 0.0
    %560 = vmatpush1.msra.mxu0 0.0
    %561 = vmatprep.subr.mxu0 0.0
    %562 = vmatpush1.msra.mxu0 0.0
    %563 = vmatprep.subr.mxu0 0.0
    %564 = vmatpush1.msra.mxu0 0.0
    %565 = vmatprep.subr.mxu0 0.0
    %566 = vmatpush1.msra.mxu0 0.0
    %567 = vmatprep.subr.mxu0 0.0
    %568 = vmatpush1.msra.mxu0 0.0
    %569 = vmatprep.subr.mxu0 0.0
    %570 = vmatpush1.msra.mxu0 0.0
    %571 = vmatprep.mubr.f32.mxu0 0.0
    %572 = vmatmul.mubr.f32.gmra.mrb[0].mxu0 %v505
    %v573 = vpop.f32.mrb[0].mxu0
    %v574 = vadd.f32 0.0, %v573
    %v575 = vpop.f32.mrb[0].mxu0
    %576 = vdwg.mxu0
    %577 = vmatprep.subr.mxu0 0.0
    %578 = vmatpush1.msra.mxu0 %v495
    %579 = vmatprep.subr.mxu0 0.0
    %580 = vmatpush1.msra.mxu0 %v496
    %581 = vmatprep.subr.mxu0 0.0
    %582 = vmatpush1.msra.mxu0 %v497
    %583 = vmatprep.subr.mxu0 0.0
    %584 = vmatpush1.msra.mxu0 %v498
    %585 = vmatprep.subr.mxu0 0.0
    %586 = vmatpush1.msra.mxu0 0.0
    %587 = vmatprep.subr.mxu0 0.0
    %588 = vmatpush1.msra.mxu0 0.0
    %589 = vmatprep.subr.mxu0 0.0
    %590 = vmatpush1.msra.mxu0 0.0
    %591 = vmatprep.subr.mxu0 0.0
    %592 = vmatpush1.msra.mxu0 0.0
    %593 = vmatprep.subr.mxu0 0.0
    %594 = vmatpush1.msra.mxu0 0.0
    %595 = vmatprep.subr.mxu0 0.0
    %596 = vmatpush1.msra.mxu0 0.0
    %597 = vmatprep.subr.mxu0 0.0
    %598 = vmatpush1.msra.mxu0 0.0
    %599 = vmatprep.subr.mxu0 0.0
    %600 = vmatpush1.msra.mxu0 0.0
    %601 = vmatprep.subr.mxu0 0.0
    %602 = vmatpush1.msra.mxu0 0.0
    %603 = vmatprep.subr.mxu0 0.0
    %604 = vmatpush1.msra.mxu0 0.0
    %605 = vmatprep.subr.mxu0 0.0
    %606 = vmatpush1.msra.mxu0 0.0
    %607 = vmatprep.subr.mxu0 0.0
    %608 = vmatpush1.msra.mxu0 0.0
    %609 = vmatprep.subr.mxu0 0.0
    %610 = vmatpush1.msra.mxu0 0.0
    %611 = vmatprep.subr.mxu0 0.0
    %612 = vmatpush1.msra.mxu0 0.0
    %613 = vmatprep.subr.mxu0 0.0
    %614 = vmatpush1.msra.mxu0 0.0
    %615 = vmatprep.subr.mxu0 0.0
    %616 = vmatpush1.msra.mxu0 0.0
    %617 = vmatprep.subr.mxu0 0.0
    %618 = vmatpush1.msra.mxu0 0.0
    %619 = vmatprep.subr.mxu0 0.0
    %620 = vmatpush1.msra.mxu0 0.0
    %621 = vmatprep.subr.mxu0 0.0
    %622 = vmatpush1.msra.mxu0 0.0
    %623 = vmatprep.subr.mxu0 0.0
    %624 = vmatpush1.msra.mxu0 0.0
    %625 = vmatprep.subr.mxu0 0.0
    %626 = vmatpush1.msra.mxu0 0.0
    %627 = vmatprep.subr.mxu0 0.0
    %628 = vmatpush1.msra.mxu0 0.0
    %629 = vmatprep.subr.mxu0 0.0
    %630 = vmatpush1.msra.mxu0 0.0
    %631 = vmatprep.subr.mxu0 0.0
    %632 = vmatpush1.msra.mxu0 0.0
    %633 = vmatprep.subr.mxu0 0.0
    %634 = vmatpush1.msra.mxu0 0.0
    %635 = vmatprep.subr.mxu0 0.0
    %636 = vmatpush1.msra.mxu0 0.0
    %637 = vmatprep.subr.mxu0 0.0
    %638 = vmatpush1.msra.mxu0 0.0
    %639 = vmatprep.subr.mxu0 0.0
    %640 = vmatpush1.msra.mxu0 0.0
    %641 = vmatprep.mubr.f32.mxu0 0.0
    %642 = vmatmul.mubr.f32.gmra.mrb[0].mxu0 %v505
    %v643 = vpop.f32.mrb[0].mxu0
    %v644 = vadd.f32 0.0, %v643
    %v645 = vpop.f32.mrb[0].mxu0
    %646 = vdwg.mxu0
    %v648 = vlaneseq
    %v649 = vshrl.u32 %v648, 7
    %v650 = vsub.s32 0, %v649
    %v651 = vrot.slane %v503, %v650
    %653 = vmatprep.subr.mxu0 0.0
    %654 = vmatpush1.msra.mxu0 %v499
    %655 = vmatprep.subr.mxu0 0.0
    %656 = vmatpush1.msra.mxu0 %v500
    %657 = vmatprep.subr.mxu0 0.0
    %658 = vmatpush1.msra.mxu0 %v501
    %659 = vmatprep.subr.mxu0 0.0
    %660 = vmatpush1.msra.mxu0 %v502
    %661 = vmatprep.subr.mxu0 0.0
    %662 = vmatpush1.msra.mxu0 0.0
    %663 = vmatprep.subr.mxu0 0.0
    %664 = vmatpush1.msra.mxu0 0.0
    %665 = vmatprep.subr.mxu0 0.0
    %666 = vmatpush1.msra.mxu0 0.0
    %667 = vmatprep.subr.mxu0 0.0
    %668 = vmatpush1.msra.mxu0 0.0
    %669 = vmatprep.subr.mxu0 0.0
    %670 = vmatpush1.msra.mxu0 0.0
    %671 = vmatprep.subr.mxu0 0.0
    %672 = vmatpush1.msra.mxu0 0.0
    %673 = vmatprep.subr.mxu0 0.0
    %674 = vmatpush1.msra.mxu0 0.0
    %675 = vmatprep.subr.mxu0 0.0
    %676 = vmatpush1.msra.mxu0 0.0
    %677 = vmatprep.subr.mxu0 0.0
    %678 = vmatpush1.msra.mxu0 0.0
    %679 = vmatprep.subr.mxu0 0.0
    %680 = vmatpush1.msra.mxu0 0.0
    %681 = vmatprep.subr.mxu0 0.0
    %682 = vmatpush1.msra.mxu0 0.0
    %683 = vmatprep.subr.mxu0 0.0
    %684 = vmatpush1.msra.mxu0 0.0
    %685 = vmatprep.subr.mxu0 0.0
    %686 = vmatpush1.msra.mxu0 0.0
    %687 = vmatprep.subr.mxu0 0.0
    %688 = vmatpush1.msra.mxu0 0.0
    %689 = vmatprep.subr.mxu0 0.0
    %690 = vmatpush1.msra.mxu0 0.0
    %691 = vmatprep.subr.mxu0 0.0
    %692 = vmatpush1.msra.mxu0 0.0
    %693 = vmatprep.subr.mxu0 0.0
    %694 = vmatpush1.msra.mxu0 0.0
    %695 = vmatprep.subr.mxu0 0.0
    %696 = vmatpush1.msra.mxu0 0.0
    %697 = vmatprep.subr.mxu0 0.0
    %698 = vmatpush1.msra.mxu0 0.0
    %699 = vmatprep.subr.mxu0 0.0
    %700 = vmatpush1.msra.mxu0 0.0
    %701 = vmatprep.subr.mxu0 0.0
    %702 = vmatpush1.msra.mxu0 0.0
    %703 = vmatprep.subr.mxu0 0.0
    %704 = vmatpush1.msra.mxu0 0.0
    %705 = vmatprep.subr.mxu0 0.0
    %706 = vmatpush1.msra.mxu0 0.0
    %707 = vmatprep.subr.mxu0 0.0
    %708 = vmatpush1.msra.mxu0 0.0
    %709 = vmatprep.subr.mxu0 0.0
    %710 = vmatpush1.msra.mxu0 0.0
    %711 = vmatprep.subr.mxu0 0.0
    %712 = vmatpush1.msra.mxu0 0.0
    %713 = vmatprep.subr.mxu0 0.0
    %714 = vmatpush1.msra.mxu0 0.0
    %715 = vmatprep.subr.mxu0 0.0
    %716 = vmatpush1.msra.mxu0 0.0
    %717 = vmatprep.mubr.f32.mxu0 0.0
    %718 = vmatmul.mubr.f32.gmra.mrb[0].mxu0 %v505
    %v719 = vpop.f32.mrb[0].mxu0
    %v720 = vadd.f32 %v651, %v719
    %v721 = vpop.f32.mrb[0].mxu0
    %722 = vdwg.mxu0
    %v723 = vadd.f32 %v311, %v574
    %v724 = vxor.u32 %v723, 2147483648
    %v725 = vmul.f32 %v724, 1.442695
    %v726 = vpow.pop %v725
    %v727 = vadd.f32 %v726, 1.0
    %v728 = vrcp.pop %v727
    %v729 = vmul.f32 1.0, %v728
    %v730 = vadd.f32 %v397, %v644
    %v731 = vxor.u32 %v730, 2147483648
    %v732 = vmul.f32 %v731, 1.442695
    %v733 = vpow.pop %v732
    %v734 = vadd.f32 %v733, 1.0
    %v735 = vrcp.pop %v734
    %v736 = vmul.f32 1.0, %v735
    %v737 = vmul.f32 %v729, %v720
    %v738 = vadd.f32 %v483, %v737
    %v739 = vtanh.pop %v738
    %v740 = vsub.f32 1.0, %v736
    %v741 = vmul.f32 %v740, %v739
    %v742 = vmul.f32 %v736, 0.0
    %v743 = vadd.f32 %v741, %v742
    %vm744 = vcmask 254976
    %745 = vst.msk [vmem:[#allocation3] sm:$0x3] %vm744, %v743
    %v747 = vsel %vm237, %v743, 0
    %749 = vmatprep.subr.mxu0 0.0
    %750 = vmatpush1.msra.mxu0 %v491
    %751 = vmatprep.subr.mxu0 0.0
    %752 = vmatpush1.msra.mxu0 %v492
    %753 = vmatprep.subr.mxu0 0.0
    %754 = vmatpush1.msra.mxu0 %v493
    %755 = vmatprep.subr.mxu0 0.0
    %756 = vmatpush1.msra.mxu0 %v494
    %757 = vmatprep.subr.mxu0 0.0
    %758 = vmatpush1.msra.mxu0 0.0
    %759 = vmatprep.subr.mxu0 0.0
    %760 = vmatpush1.msra.mxu0 0.0
    %761 = vmatprep.subr.mxu0 0.0
    %762 = vmatpush1.msra.mxu0 0.0
    %763 = vmatprep.subr.mxu0 0.0
    %764 = vmatpush1.msra.mxu0 0.0
    %765 = vmatprep.subr.mxu0 0.0
    %766 = vmatpush1.msra.mxu0 0.0
    %767 = vmatprep.subr.mxu0 0.0
    %768 = vmatpush1.msra.mxu0 0.0
    %769 = vmatprep.subr.mxu0 0.0
    %770 = vmatpush1.msra.mxu0 0.0
    %771 = vmatprep.subr.mxu0 0.0
    %772 = vmatpush1.msra.mxu0 0.0
    %773 = vmatprep.subr.mxu0 0.0
    %774 = vmatpush1.msra.mxu0 0.0
    %775 = vmatprep.subr.mxu0 0.0
    %776 = vmatpush1.msra.mxu0 0.0
    %777 = vmatprep.subr.mxu0 0.0
    %778 = vmatpush1.msra.mxu0 0.0
    %779 = vmatprep.subr.mxu0 0.0
    %780 = vmatpush1.msra.mxu0 0.0
    %781 = vmatprep.subr.mxu0 0.0
    %782 = vmatpush1.msra.mxu0 0.0
    %783 = vmatprep.subr.mxu0 0.0
    %784 = vmatpush1.msra.mxu0 0.0
    %785 = vmatprep.subr.mxu0 0.0
    %786 = vmatpush1.msra.mxu0 0.0
    %787 = vmatprep.subr.mxu0 0.0
    %788 = vmatpush1.msra.mxu0 0.0
    %789 = vmatprep.subr.mxu0 0.0
    %790 = vmatpush1.msra.mxu0 0.0
    %791 = vmatprep.subr.mxu0 0.0
    %792 = vmatpush1.msra.mxu0 0.0
    %793 = vmatprep.subr.mxu0 0.0
    %794 = vmatpush1.msra.mxu0 0.0
    %795 = vmatprep.subr.mxu0 0.0
    %796 = vmatpush1.msra.mxu0 0.0
    %797 = vmatprep.subr.mxu0 0.0
    %798 = vmatpush1.msra.mxu0 0.0
    %799 = vmatprep.subr.mxu0 0.0
    %800 = vmatpush1.msra.mxu0 0.0
    %801 = vmatprep.subr.mxu0 0.0
    %802 = vmatpush1.msra.mxu0 0.0
    %803 = vmatprep.subr.mxu0 0.0
    %804 = vmatpush1.msra.mxu0 0.0
    %805 = vmatprep.subr.mxu0 0.0
    %806 = vmatpush1.msra.mxu0 0.0
    %807 = vmatprep.subr.mxu0 0.0
    %808 = vmatpush1.msra.mxu0 0.0
    %809 = vmatprep.subr.mxu0 0.0
    %810 = vmatpush1.msra.mxu0 0.0
    %811 = vmatprep.subr.mxu0 0.0
    %812 = vmatpush1.msra.mxu0 0.0
    %813 = vmatprep.mubr.f32.mxu0 0.0
    %814 = vmatmul.mubr.f32.gmra.mrb[0].mxu0 %v747
    %v815 = vpop.f32.mrb[0].mxu0
    %v816 = vadd.f32 0.0, %v815
    %v817 = vpop.f32.mrb[0].mxu0
    %818 = vdwg.mxu0
    %819 = vmatprep.subr.mxu0 0.0
    %820 = vmatpush1.msra.mxu0 %v495
    %821 = vmatprep.subr.mxu0 0.0
    %822 = vmatpush1.msra.mxu0 %v496
    %823 = vmatprep.subr.mxu0 0.0
    %824 = vmatpush1.msra.mxu0 %v497
    %825 = vmatprep.subr.mxu0 0.0
    %826 = vmatpush1.msra.mxu0 %v498
    %827 = vmatprep.subr.mxu0 0.0
    %828 = vmatpush1.msra.mxu0 0.0
    %829 = vmatprep.subr.mxu0 0.0
    %830 = vmatpush1.msra.mxu0 0.0
    %831 = vmatprep.subr.mxu0 0.0
    %832 = vmatpush1.msra.mxu0 0.0
    %833 = vmatprep.subr.mxu0 0.0
    %834 = vmatpush1.msra.mxu0 0.0
    %835 = vmatprep.subr.mxu0 0.0
    %836 = vmatpush1.msra.mxu0 0.0
    %837 = vmatprep.subr.mxu0 0.0
    %838 = vmatpush1.msra.mxu0 0.0
    %839 = vmatprep.subr.mxu0 0.0
    %840 = vmatpush1.msra.mxu0 0.0
    %841 = vmatprep.subr.mxu0 0.0
    %842 = vmatpush1.msra.mxu0 0.0
    %843 = vmatprep.subr.mxu0 0.0
    %844 = vmatpush1.msra.mxu0 0.0
    %845 = vmatprep.subr.mxu0 0.0
    %846 = vmatpush1.msra.mxu0 0.0
    %847 = vmatprep.subr.mxu0 0.0
    %848 = vmatpush1.msra.mxu0 0.0
    %849 = vmatprep.subr.mxu0 0.0
    %850 = vmatpush1.msra.mxu0 0.0
    %851 = vmatprep.subr.mxu0 0.0
    %852 = vmatpush1.msra.mxu0 0.0
    %853 = vmatprep.subr.mxu0 0.0
    %854 = vmatpush1.msra.mxu0 0.0
    %855 = vmatprep.subr.mxu0 0.0
    %856 = vmatpush1.msra.mxu0 0.0
    %857 = vmatprep.subr.mxu0 0.0
    %858 = vmatpush1.msra.mxu0 0.0
    %859 = vmatprep.subr.mxu0 0.0
    %860 = vmatpush1.msra.mxu0 0.0
    %861 = vmatprep.subr.mxu0 0.0
    %862 = vmatpush1.msra.mxu0 0.0
    %863 = vmatprep.subr.mxu0 0.0
    %864 = vmatpush1.msra.mxu0 0.0
    %865 = vmatprep.subr.mxu0 0.0
    %866 = vmatpush1.msra.mxu0 0.0
    %867 = vmatprep.subr.mxu0 0.0
    %868 = vmatpush1.msra.mxu0 0.0
    %869 = vmatprep.subr.mxu0 0.0
    %870 = vmatpush1.msra.mxu0 0.0
    %871 = vmatprep.subr.mxu0 0.0
    %872 = vmatpush1.msra.mxu0 0.0
    %873 = vmatprep.subr.mxu0 0.0
    %874 = vmatpush1.msra.mxu0 0.0
    %875 = vmatprep.subr.mxu0 0.0
    %876 = vmatpush1.msra.mxu0 0.0
    %877 = vmatprep.subr.mxu0 0.0
    %878 = vmatpush1.msra.mxu0 0.0
    %879 = vmatprep.subr.mxu0 0.0
    %880 = vmatpush1.msra.mxu0 0.0
    %881 = vmatprep.subr.mxu0 0.0
    %882 = vmatpush1.msra.mxu0 0.0
    %883 = vmatprep.mubr.f32.mxu0 0.0
    %884 = vmatmul.mubr.f32.gmra.mrb[0].mxu0 %v747
    %v885 = vpop.f32.mrb[0].mxu0
    %v886 = vadd.f32 0.0, %v885
    %v887 = vpop.f32.mrb[0].mxu0
    %888 = vdwg.mxu0
    %889 = vmatprep.subr.mxu0 0.0
    %890 = vmatpush1.msra.mxu0 %v499
    %891 = vmatprep.subr.mxu0 0.0
    %892 = vmatpush1.msra.mxu0 %v500
    %893 = vmatprep.subr.mxu0 0.0
    %894 = vmatpush1.msra.mxu0 %v501
    %895 = vmatprep.subr.mxu0 0.0
    %896 = vmatpush1.msra.mxu0 %v502
    %897 = vmatprep.subr.mxu0 0.0
    %898 = vmatpush1.msra.mxu0 0.0
    %899 = vmatprep.subr.mxu0 0.0
    %900 = vmatpush1.msra.mxu0 0.0
    %901 = vmatprep.subr.mxu0 0.0
    %902 = vmatpush1.msra.mxu0 0.0
    %903 = vmatprep.subr.mxu0 0.0
    %904 = vmatpush1.msra.mxu0 0.0
    %905 = vmatprep.subr.mxu0 0.0
    %906 = vmatpush1.msra.mxu0 0.0
    %907 = vmatprep.subr.mxu0 0.0
    %908 = vmatpush1.msra.mxu0 0.0
    %909 = vmatprep.subr.mxu0 0.0
    %910 = vmatpush1.msra.mxu0 0.0
    %911 = vmatprep.subr.mxu0 0.0
    %912 = vmatpush1.msra.mxu0 0.0
    %913 = vmatprep.subr.mxu0 0.0
    %914 = vmatpush1.msra.mxu0 0.0
    %915 = vmatprep.subr.mxu0 0.0
    %916 = vmatpush1.msra.mxu0 0.0
    %917 = vmatprep.subr.mxu0 0.0
    %918 = vmatpush1.msra.mxu0 0.0
    %919 = vmatprep.subr.mxu0 0.0
    %920 = vmatpush1.msra.mxu0 0.0
    %921 = vmatprep.subr.mxu0 0.0
    %922 = vmatpush1.msra.mxu0 0.0
    %923 = vmatprep.subr.mxu0 0.0
    %924 = vmatpush1.msra.mxu0 0.0
    %925 = vmatprep.subr.mxu0 0.0
    %926 = vmatpush1.msra.mxu0 0.0
    %927 = vmatprep.subr.mxu0 0.0
    %928 = vmatpush1.msra.mxu0 0.0
    %929 = vmatprep.subr.mxu0 0.0
    %930 = vmatpush1.msra.mxu0 0.0
    %931 = vmatprep.subr.mxu0 0.0
    %932 = vmatpush1.msra.mxu0 0.0
    %933 = vmatprep.subr.mxu0 0.0
    %934 = vmatpush1.msra.mxu0 0.0
    %935 = vmatprep.subr.mxu0 0.0
    %936 = vmatpush1.msra.mxu0 0.0
    %937 = vmatprep.subr.mxu0 0.0
    %938 = vmatpush1.msra.mxu0 0.0
    %939 = vmatprep.subr.mxu0 0.0
    %940 = vmatpush1.msra.mxu0 0.0
    %941 = vmatprep.subr.mxu0 0.0
    %942 = vmatpush1.msra.mxu0 0.0
    %943 = vmatprep.subr.mxu0 0.0
    %944 = vmatpush1.msra.mxu0 0.0
    %945 = vmatprep.subr.mxu0 0.0
    %946 = vmatpush1.msra.mxu0 0.0
    %947 = vmatprep.subr.mxu0 0.0
    %948 = vmatpush1.msra.mxu0 0.0
    %949 = vmatprep.subr.mxu0 0.0
    %950 = vmatpush1.msra.mxu0 0.0
    %951 = vmatprep.subr.mxu0 0.0
    %952 = vmatpush1.msra.mxu0 0.0
    %953 = vmatprep.mubr.f32.mxu0 0.0
    %954 = vmatmul.mubr.f32.gmra.mrb[0].mxu0 %v747
    %v955 = vpop.f32.mrb[0].mxu0
    %v956 = vadd.f32 %v651, %v955
    %v957 = vpop.f32.mrb[0].mxu0
    %958 = vdwg.mxu0
    %v960 = vrot.slane %v816, 6
    %v962 = vadd.f32 %v311, %v960
    %v963 = vxor.u32 %v962, 2147483648
    %v964 = vmul.f32 %v963, 1.442695
    %v965 = vpow.pop %v964
    %v966 = vadd.f32 %v965, 1.0
    %v967 = vrcp.pop %v966
    %v968 = vmul.f32 1.0, %v967
    %v970 = vrot.slane %v886, 6
    %v972 = vadd.f32 %v397, %v970
    %v973 = vxor.u32 %v972, 2147483648
    %v974 = vmul.f32 %v973, 1.442695
    %v975 = vpow.pop %v974
    %v976 = vadd.f32 %v975, 1.0
    %v977 = vrcp.pop %v976
    %v978 = vmul.f32 1.0, %v977
    %v980 = vrot.slane %v956, 6
    %v982 = vmul.f32 %v968, %v980
    %v983 = vadd.f32 %v483, %v982
    %v984 = vtanh.pop %v983
    %v985 = vsub.f32 1.0, %v978
    %v986 = vmul.f32 %v985, %v984
    %v987 = vrot.slane %v743, 6
    %v989 = vmul.f32 %v978, %v987
    %v990 = vadd.f32 %v986, %v989
    %vm991 = vcmask 257026
    %992 = vst.msk [vmem:[#allocation3] sm:$0xc] %vm991, %v990
    %v994 = vrot.slane %v990, 2
    %v995 = vsel %vm237, %v994, 0
    %997 = vmatprep.subr.mxu0 0.0
    %998 = vmatpush1.msra.mxu0 %v491
    %999 = vmatprep.subr.mxu0 0.0
    %1000 = vmatpush1.msra.mxu0 %v492
    %1001 = vmatprep.subr.mxu0 0.0
    %1002 = vmatpush1.msra.mxu0 %v493
    %1003 = vmatprep.subr.mxu0 0.0
    %1004 = vmatpush1.msra.mxu0 %v494
    %1005 = vmatprep.subr.mxu0 0.0
    %1006 = vmatpush1.msra.mxu0 0.0
    %1007 = vmatprep.subr.mxu0 0.0
    %1008 = vmatpush1.msra.mxu0 0.0
    %1009 = vmatprep.subr.mxu0 0.0
    %1010 = vmatpush1.msra.mxu0 0.0
    %1011 = vmatprep.subr.mxu0 0.0
    %1012 = vmatpush1.msra.mxu0 0.0
    %1013 = vmatprep.subr.mxu0 0.0
    %1014 = vmatpush1.msra.mxu0 0.0
    %1015 = vmatprep.subr.mxu0 0.0
    %1016 = vmatpush1.msra.mxu0 0.0
    %1017 = vmatprep.subr.mxu0 0.0
    %1018 = vmatpush1.msra.mxu0 0.0
    %1019 = vmatprep.subr.mxu0 0.0
    %1020 = vmatpush1.msra.mxu0 0.0
    %1021 = vmatprep.subr.mxu0 0.0
    %1022 = vmatpush1.msra.mxu0 0.0
    %1023 = vmatprep.subr.mxu0 0.0
    %1024 = vmatpush1.msra.mxu0 0.0
    %1025 = vmatprep.subr.mxu0 0.0
    %1026 = vmatpush1.msra.mxu0 0.0
    %1027 = vmatprep.subr.mxu0 0.0
    %1028 = vmatpush1.msra.mxu0 0.0
    %1029 = vmatprep.subr.mxu0 0.0
    %1030 = vmatpush1.msra.mxu0 0.0
    %1031 = vmatprep.subr.mxu0 0.0
    %1032 = vmatpush1.msra.mxu0 0.0
    %1033 = vmatprep.subr.mxu0 0.0
    %1034 = vmatpush1.msra.mxu0 0.0
    %1035 = vmatprep.subr.mxu0 0.0
    %1036 = vmatpush1.msra.mxu0 0.0
    %1037 = vmatprep.subr.mxu0 0.0
    %1038 = vmatpush1.msra.mxu0 0.0
    %1039 = vmatprep.subr.mxu0 0.0
    %1040 = vmatpush1.msra.mxu0 0.0
    %1041 = vmatprep.subr.mxu0 0.0
    %1042 = vmatpush1.msra.mxu0 0.0
    %1043 = vmatprep.subr.mxu0 0.0
    %1044 = vmatpush1.msra.mxu0 0.0
    %1045 = vmatprep.subr.mxu0 0.0
    %1046 = vmatpush1.msra.mxu0 0.0
    %1047 = vmatprep.subr.mxu0 0.0
    %1048 = vmatpush1.msra.mxu0 0.0
    %1049 = vmatprep.subr.mxu0 0.0
    %1050 = vmatpush1.msra.mxu0 0.0
    %1051 = vmatprep.subr.mxu0 0.0
    %1052 = vmatpush1.msra.mxu0 0.0
    %1053 = vmatprep.subr.mxu0 0.0
    %1054 = vmatpush1.msra.mxu0 0.0
    %1055 = vmatprep.subr.mxu0 0.0
    %1056 = vmatpush1.msra.mxu0 0.0
    %1057 = vmatprep.subr.mxu0 0.0
    %1058 = vmatpush1.msra.mxu0 0.0
    %1059 = vmatprep.subr.mxu0 0.0
    %1060 = vmatpush1.msra.mxu0 0.0
    %1061 = vmatprep.mubr.f32.mxu0 0.0
    %1062 = vmatmul.mubr.f32.gmra.mrb[0].mxu0 %v995
    %v1063 = vpop.f32.mrb[0].mxu0
    %v1064 = vadd.f32 0.0, %v1063
    %v1065 = vpop.f32.mrb[0].mxu0
    %1066 = vdwg.mxu0
    %1067 = vmatprep.subr.mxu0 0.0
    %1068 = vmatpush1.msra.mxu0 %v495
    %1069 = vmatprep.subr.mxu0 0.0
    %1070 = vmatpush1.msra.mxu0 %v496
    %1071 = vmatprep.subr.mxu0 0.0
    %1072 = vmatpush1.msra.mxu0 %v497
    %1073 = vmatprep.subr.mxu0 0.0
    %1074 = vmatpush1.msra.mxu0 %v498
    %1075 = vmatprep.subr.mxu0 0.0
    %1076 = vmatpush1.msra.mxu0 0.0
    %1077 = vmatprep.subr.mxu0 0.0
    %1078 = vmatpush1.msra.mxu0 0.0
    %1079 = vmatprep.subr.mxu0 0.0
    %1080 = vmatpush1.msra.mxu0 0.0
    %1081 = vmatprep.subr.mxu0 0.0
    %1082 = vmatpush1.msra.mxu0 0.0
    %1083 = vmatprep.subr.mxu0 0.0
    %1084 = vmatpush1.msra.mxu0 0.0
    %1085 = vmatprep.subr.mxu0 0.0
    %1086 = vmatpush1.msra.mxu0 0.0
    %1087 = vmatprep.subr.mxu0 0.0
    %1088 = vmatpush1.msra.mxu0 0.0
    %1089 = vmatprep.subr.mxu0 0.0
    %1090 = vmatpush1.msra.mxu0 0.0
    %1091 = vmatprep.subr.mxu0 0.0
    %1092 = vmatpush1.msra.mxu0 0.0
    %1093 = vmatprep.subr.mxu0 0.0
    %1094 = vmatpush1.msra.mxu0 0.0
    %1095 = vmatprep.subr.mxu0 0.0
    %1096 = vmatpush1.msra.mxu0 0.0
    %1097 = vmatprep.subr.mxu0 0.0
    %1098 = vmatpush1.msra.mxu0 0.0
    %1099 = vmatprep.subr.mxu0 0.0
    %1100 = vmatpush1.msra.mxu0 0.0
    %1101 = vmatprep.subr.mxu0 0.0
    %1102 = vmatpush1.msra.mxu0 0.0
    %1103 = vmatprep.subr.mxu0 0.0
    %1104 = vmatpush1.msra.mxu0 0.0
    %1105 = vmatprep.subr.mxu0 0.0
    %1106 = vmatpush1.msra.mxu0 0.0
    %1107 = vmatprep.subr.mxu0 0.0
    %1108 = vmatpush1.msra.mxu0 0.0
    %1109 = vmatprep.subr.mxu0 0.0
    %1110 = vmatpush1.msra.mxu0 0.0
    %1111 = vmatprep.subr.mxu0 0.0
    %1112 = vmatpush1.msra.mxu0 0.0
    %1113 = vmatprep.subr.mxu0 0.0
    %1114 = vmatpush1.msra.mxu0 0.0
    %1115 = vmatprep.subr.mxu0 0.0
    %1116 = vmatpush1.msra.mxu0 0.0
    %1117 = vmatprep.subr.mxu0 0.0
    %1118 = vmatpush1.msra.mxu0 0.0
    %1119 = vmatprep.subr.mxu0 0.0
    %1120 = vmatpush1.msra.mxu0 0.0
    %1121 = vmatprep.subr.mxu0 0.0
    %1122 = vmatpush1.msra.mxu0 0.0
    %1123 = vmatprep.subr.mxu0 0.0
    %1124 = vmatpush1.msra.mxu0 0.0
    %1125 = vmatprep.subr.mxu0 0.0
    %1126 = vmatpush1.msra.mxu0 0.0
    %1127 = vmatprep.subr.mxu0 0.0
    %1128 = vmatpush1.msra.mxu0 0.0
    %1129 = vmatprep.subr.mxu0 0.0
    %1130 = vmatpush1.msra.mxu0 0.0
    %1131 = vmatprep.mubr.f32.mxu0 0.0
    %1132 = vmatmul.mubr.f32.gmra.mrb[0].mxu0 %v995
    %v1133 = vpop.f32.mrb[0].mxu0
    %v1134 = vadd.f32 0.0, %v1133
    %v1135 = vpop.f32.mrb[0].mxu0
    %1136 = vdwg.mxu0
    %1137 = vmatprep.subr.mxu0 0.0
    %1138 = vmatpush1.msra.mxu0 %v499
    %1139 = vmatprep.subr.mxu0 0.0
    %1140 = vmatpush1.msra.mxu0 %v500
    %1141 = vmatprep.subr.mxu0 0.0
    %1142 = vmatpush1.msra.mxu0 %v501
    %1143 = vmatprep.subr.mxu0 0.0
    %1144 = vmatpush1.msra.mxu0 %v502
    %1145 = vmatprep.subr.mxu0 0.0
    %1146 = vmatpush1.msra.mxu0 0.0
    %1147 = vmatprep.subr.mxu0 0.0
    %1148 = vmatpush1.msra.mxu0 0.0
    %1149 = vmatprep.subr.mxu0 0.0
    %1150 = vmatpush1.msra.mxu0 0.0
    %1151 = vmatprep.subr.mxu0 0.0
    %1152 = vmatpush1.msra.mxu0 0.0
    %1153 = vmatprep.subr.mxu0 0.0
    %1154 = vmatpush1.msra.mxu0 0.0
    %1155 = vmatprep.subr.mxu0 0.0
    %1156 = vmatpush1.msra.mxu0 0.0
    %1157 = vmatprep.subr.mxu0 0.0
    %1158 = vmatpush1.msra.mxu0 0.0
    %1159 = vmatprep.subr.mxu0 0.0
    %1160 = vmatpush1.msra.mxu0 0.0
    %1161 = vmatprep.subr.mxu0 0.0
    %1162 = vmatpush1.msra.mxu0 0.0
    %1163 = vmatprep.subr.mxu0 0.0
    %1164 = vmatpush1.msra.mxu0 0.0
    %1165 = vmatprep.subr.mxu0 0.0
    %1166 = vmatpush1.msra.mxu0 0.0
    %1167 = vmatprep.subr.mxu0 0.0
    %1168 = vmatpush1.msra.mxu0 0.0
    %1169 = vmatprep.subr.mxu0 0.0
    %1170 = vmatpush1.msra.mxu0 0.0
    %1171 = vmatprep.subr.mxu0 0.0
    %1172 = vmatpush1.msra.mxu0 0.0
    %1173 = vmatprep.subr.mxu0 0.0
    %1174 = vmatpush1.msra.mxu0 0.0
    %1175 = vmatprep.subr.mxu0 0.0
    %1176 = vmatpush1.msra.mxu0 0.0
    %1177 = vmatprep.subr.mxu0 0.0
    %1178 = vmatpush1.msra.mxu0 0.0
    %1179 = vmatprep.subr.mxu0 0.0
    %1180 = vmatpush1.msra.mxu0 0.0
    %1181 = vmatprep.subr.mxu0 0.0
    %1182 = vmatpush1.msra.mxu0 0.0
    %1183 = vmatprep.subr.mxu0 0.0
    %1184 = vmatpush1.msra.mxu0 0.0
    %1185 = vmatprep.subr.mxu0 0.0
    %1186 = vmatpush1.msra.mxu0 0.0
    %1187 = vmatprep.subr.mxu0 0.0
    %1188 = vmatpush1.msra.mxu0 0.0
    %1189 = vmatprep.subr.mxu0 0.0
    %1190 = vmatpush1.msra.mxu0 0.0
    %1191 = vmatprep.subr.mxu0 0.0
    %1192 = vmatpush1.msra.mxu0 0.0
    %1193 = vmatprep.subr.mxu0 0.0
    %1194 = vmatpush1.msra.mxu0 0.0
    %1195 = vmatprep.subr.mxu0 0.0
    %1196 = vmatpush1.msra.mxu0 0.0
    %1197 = vmatprep.subr.mxu0 0.0
    %1198 = vmatpush1.msra.mxu0 0.0
    %1199 = vmatprep.subr.mxu0 0.0
    %1200 = vmatpush1.msra.mxu0 0.0
    %1201 = vmatprep.mubr.f32.mxu0 0.0
    %1202 = vmatmul.mubr.f32.gmra.mrb[0].mxu0 %v995
    %v1203 = vpop.f32.mrb[0].mxu0
    %v1204 = vadd.f32 %v651, %v1203
    %v1205 = vpop.f32.mrb[0].mxu0
    %1206 = vdwg.mxu0
    %v1208 = vrot.slane %v1064, 4
    %v1210 = vadd.f32 %v311, %v1208
    %v1211 = vxor.u32 %v1210, 2147483648
    %v1212 = vmul.f32 %v1211, 1.442695
    %v1213 = vpow.pop %v1212
    %v1214 = vadd.f32 %v1213, 1.0
    %v1215 = vrcp.pop %v1214
    %v1216 = vmul.f32 1.0, %v1215
    %v1218 = vrot.slane %v1134, 4
    %v1220 = vadd.f32 %v397, %v1218
    %v1221 = vxor.u32 %v1220, 2147483648
    %v1222 = vmul.f32 %v1221, 1.442695
    %v1223 = vpow.pop %v1222
    %v1224 = vadd.f32 %v1223, 1.0
    %v1225 = vrcp.pop %v1224
    %v1226 = vmul.f32 1.0, %v1225
    %v1228 = vrot.slane %v1204, 4
    %v1230 = vmul.f32 %v1216, %v1228
    %v1231 = vadd.f32 %v483, %v1230
    %v1232 = vtanh.pop %v1231
    %v1233 = vsub.f32 1.0, %v1226
    %v1234 = vmul.f32 %v1233, %v1232
    %v1235 = vrot.slane %v990, 6
    %v1237 = vmul.f32 %v1226, %v1235
    %v1238 = vadd.f32 %v1234, %v1237
    %vm1239 = vcmask 259076
    %1240 = vst.msk [vmem:[#allocation3] sm:$0x30] %vm1239, %v1238
    %v1242 = vrot.slane %v1238, 4
    %v1243 = vsel %vm237, %v1242, 0
    %1245 = vmatprep.subr.mxu0 0.0
    %1246 = vmatpush1.msra.mxu0 %v491
    %1247 = vmatprep.subr.mxu0 0.0
    %1248 = vmatpush1.msra.mxu0 %v492
    %1249 = vmatprep.subr.mxu0 0.0
    %1250 = vmatpush1.msra.mxu0 %v493
    %1251 = vmatprep.subr.mxu0 0.0
    %1252 = vmatpush1.msra.mxu0 %v494
    %1253 = vmatprep.subr.mxu0 0.0
    %1254 = vmatpush1.msra.mxu0 0.0
    %1255 = vmatprep.subr.mxu0 0.0
    %1256 = vmatpush1.msra.mxu0 0.0
    %1257 = vmatprep.subr.mxu0 0.0
    %1258 = vmatpush1.msra.mxu0 0.0
    %1259 = vmatprep.subr.mxu0 0.0
    %1260 = vmatpush1.msra.mxu0 0.0
    %1261 = vmatprep.subr.mxu0 0.0
    %1262 = vmatpush1.msra.mxu0 0.0
    %1263 = vmatprep.subr.mxu0 0.0
    %1264 = vmatpush1.msra.mxu0 0.0
    %1265 = vmatprep.subr.mxu0 0.0
    %1266 = vmatpush1.msra.mxu0 0.0
    %1267 = vmatprep.subr.mxu0 0.0
    %1268 = vmatpush1.msra.mxu0 0.0
    %1269 = vmatprep.subr.mxu0 0.0
    %1270 = vmatpush1.msra.mxu0 0.0
    %1271 = vmatprep.subr.mxu0 0.0
    %1272 = vmatpush1.msra.mxu0 0.0
    %1273 = vmatprep.subr.mxu0 0.0
    %1274 = vmatpush1.msra.mxu0 0.0
    %1275 = vmatprep.subr.mxu0 0.0
    %1276 = vmatpush1.msra.mxu0 0.0
    %1277 = vmatprep.subr.mxu0 0.0
    %1278 = vmatpush1.msra.mxu0 0.0
    %1279 = vmatprep.subr.mxu0 0.0
    %1280 = vmatpush1.msra.mxu0 0.0
    %1281 = vmatprep.subr.mxu0 0.0
    %1282 = vmatpush1.msra.mxu0 0.0
    %1283 = vmatprep.subr.mxu0 0.0
    %1284 = vmatpush1.msra.mxu0 0.0
    %1285 = vmatprep.subr.mxu0 0.0
    %1286 = vmatpush1.msra.mxu0 0.0
    %1287 = vmatprep.subr.mxu0 0.0
    %1288 = vmatpush1.msra.mxu0 0.0
    %1289 = vmatprep.subr.mxu0 0.0
    %1290 = vmatpush1.msra.mxu0 0.0
    %1291 = vmatprep.subr.mxu0 0.0
    %1292 = vmatpush1.msra.mxu0 0.0
    %1293 = vmatprep.subr.mxu0 0.0
    %1294 = vmatpush1.msra.mxu0 0.0
    %1295 = vmatprep.subr.mxu0 0.0
    %1296 = vmatpush1.msra.mxu0 0.0
    %1297 = vmatprep.subr.mxu0 0.0
    %1298 = vmatpush1.msra.mxu0 0.0
    %1299 = vmatprep.subr.mxu0 0.0
    %1300 = vmatpush1.msra.mxu0 0.0
    %1301 = vmatprep.subr.mxu0 0.0
    %1302 = vmatpush1.msra.mxu0 0.0
    %1303 = vmatprep.subr.mxu0 0.0
    %1304 = vmatpush1.msra.mxu0 0.0
    %1305 = vmatprep.subr.mxu0 0.0
    %1306 = vmatpush1.msra.mxu0 0.0
    %1307 = vmatprep.subr.mxu0 0.0
    %1308 = vmatpush1.msra.mxu0 0.0
    %1309 = vmatprep.mubr.f32.mxu0 0.0
    %1310 = vmatmul.mubr.f32.gmra.mrb[0].mxu0 %v1243
    %v1311 = vpop.f32.mrb[0].mxu0
    %v1312 = vadd.f32 0.0, %v1311
    %v1313 = vpop.f32.mrb[0].mxu0
    %1314 = vdwg.mxu0
    %1315 = vmatprep.subr.mxu0 0.0
    %1316 = vmatpush1.msra.mxu0 %v495
    %1317 = vmatprep.subr.mxu0 0.0
    %1318 = vmatpush1.msra.mxu0 %v496
    %1319 = vmatprep.subr.mxu0 0.0
    %1320 = vmatpush1.msra.mxu0 %v497
    %1321 = vmatprep.subr.mxu0 0.0
    %1322 = vmatpush1.msra.mxu0 %v498
    %1323 = vmatprep.subr.mxu0 0.0
    %1324 = vmatpush1.msra.mxu0 0.0
    %1325 = vmatprep.subr.mxu0 0.0
    %1326 = vmatpush1.msra.mxu0 0.0
    %1327 = vmatprep.subr.mxu0 0.0
    %1328 = vmatpush1.msra.mxu0 0.0
    %1329 = vmatprep.subr.mxu0 0.0
    %1330 = vmatpush1.msra.mxu0 0.0
    %1331 = vmatprep.subr.mxu0 0.0
    %1332 = vmatpush1.msra.mxu0 0.0
    %1333 = vmatprep.subr.mxu0 0.0
    %1334 = vmatpush1.msra.mxu0 0.0
    %1335 = vmatprep.subr.mxu0 0.0
    %1336 = vmatpush1.msra.mxu0 0.0
    %1337 = vmatprep.subr.mxu0 0.0
    %1338 = vmatpush1.msra.mxu0 0.0
    %1339 = vmatprep.subr.mxu0 0.0
    %1340 = vmatpush1.msra.mxu0 0.0
    %1341 = vmatprep.subr.mxu0 0.0
    %1342 = vmatpush1.msra.mxu0 0.0
    %1343 = vmatprep.subr.mxu0 0.0
    %1344 = vmatpush1.msra.mxu0 0.0
    %1345 = vmatprep.subr.mxu0 0.0
    %1346 = vmatpush1.msra.mxu0 0.0
    %1347 = vmatprep.subr.mxu0 0.0
    %1348 = vmatpush1.msra.mxu0 0.0
    %1349 = vmatprep.subr.mxu0 0.0
    %1350 = vmatpush1.msra.mxu0 0.0
    %1351 = vmatprep.subr.mxu0 0.0
    %1352 = vmatpush1.msra.mxu0 0.0
    %1353 = vmatprep.subr.mxu0 0.0
    %1354 = vmatpush1.msra.mxu0 0.0
    %1355 = vmatprep.subr.mxu0 0.0
    %1356 = vmatpush1.msra.mxu0 0.0
    %1357 = vmatprep.subr.mxu0 0.0
    %1358 = vmatpush1.msra.mxu0 0.0
    %1359 = vmatprep.subr.mxu0 0.0
    %1360 = vmatpush1.msra.mxu0 0.0
    %1361 = vmatprep.subr.mxu0 0.0
    %1362 = vmatpush1.msra.mxu0 0.0
    %1363 = vmatprep.subr.mxu0 0.0
    %1364 = vmatpush1.msra.mxu0 0.0
    %1365 = vmatprep.subr.mxu0 0.0
    %1366 = vmatpush1.msra.mxu0 0.0
    %1367 = vmatprep.subr.mxu0 0.0
    %1368 = vmatpush1.msra.mxu0 0.0
    %1369 = vmatprep.subr.mxu0 0.0
    %1370 = vmatpush1.msra.mxu0 0.0
    %1371 = vmatprep.subr.mxu0 0.0
    %1372 = vmatpush1.msra.mxu0 0.0
    %1373 = vmatprep.subr.mxu0 0.0
    %1374 = vmatpush1.msra.mxu0 0.0
    %1375 = vmatprep.subr.mxu0 0.0
    %1376 = vmatpush1.msra.mxu0 0.0
    %1377 = vmatprep.subr.mxu0 0.0
    %1378 = vmatpush1.msra.mxu0 0.0
    %1379 = vmatprep.mubr.f32.mxu0 0.0
    %1380 = vmatmul.mubr.f32.gmra.mrb[0].mxu0 %v1243
    %v1381 = vpop.f32.mrb[0].mxu0
    %v1382 = vadd.f32 0.0, %v1381
    %v1383 = vpop.f32.mrb[0].mxu0
    %1384 = vdwg.mxu0
    %1385 = vmatprep.subr.mxu0 0.0
    %1386 = vmatpush1.msra.mxu0 %v499
    %1387 = vmatprep.subr.mxu0 0.0
    %1388 = vmatpush1.msra.mxu0 %v500
    %1389 = vmatprep.subr.mxu0 0.0
    %1390 = vmatpush1.msra.mxu0 %v501
    %1391 = vmatprep.subr.mxu0 0.0
    %1392 = vmatpush1.msra.mxu0 %v502
    %1393 = vmatprep.subr.mxu0 0.0
    %1394 = vmatpush1.msra.mxu0 0.0
    %1395 = vmatprep.subr.mxu0 0.0
    %1396 = vmatpush1.msra.mxu0 0.0
    %1397 = vmatprep.subr.mxu0 0.0
    %1398 = vmatpush1.msra.mxu0 0.0
    %1399 = vmatprep.subr.mxu0 0.0
    %1400 = vmatpush1.msra.mxu0 0.0
    %1401 = vmatprep.subr.mxu0 0.0
    %1402 = vmatpush1.msra.mxu0 0.0
    %1403 = vmatprep.subr.mxu0 0.0
    %1404 = vmatpush1.msra.mxu0 0.0
    %1405 = vmatprep.subr.mxu0 0.0
    %1406 = vmatpush1.msra.mxu0 0.0
    %1407 = vmatprep.subr.mxu0 0.0
    %1408 = vmatpush1.msra.mxu0 0.0
    %1409 = vmatprep.subr.mxu0 0.0
    %1410 = vmatpush1.msra.mxu0 0.0
    %1411 = vmatprep.subr.mxu0 0.0
    %1412 = vmatpush1.msra.mxu0 0.0
    %1413 = vmatprep.subr.mxu0 0.0
    %1414 = vmatpush1.msra.mxu0 0.0
    %1415 = vmatprep.subr.mxu0 0.0
    %1416 = vmatpush1.msra.mxu0 0.0
    %1417 = vmatprep.subr.mxu0 0.0
    %1418 = vmatpush1.msra.mxu0 0.0
    %1419 = vmatprep.subr.mxu0 0.0
    %1420 = vmatpush1.msra.mxu0 0.0
    %1421 = vmatprep.subr.mxu0 0.0
    %1422 = vmatpush1.msra.mxu0 0.0
    %1423 = vmatprep.subr.mxu0 0.0
    %1424 = vmatpush1.msra.mxu0 0.0
    %1425 = vmatprep.subr.mxu0 0.0
    %1426 = vmatpush1.msra.mxu0 0.0
    %1427 = vmatprep.subr.mxu0 0.0
    %1428 = vmatpush1.msra.mxu0 0.0
    %1429 = vmatprep.subr.mxu0 0.0
    %1430 = vmatpush1.msra.mxu0 0.0
    %1431 = vmatprep.subr.mxu0 0.0
    %1432 = vmatpush1.msra.mxu0 0.0
    %1433 = vmatprep.subr.mxu0 0.0
    %1434 = vmatpush1.msra.mxu0 0.0
    %1435 = vmatprep.subr.mxu0 0.0
    %1436 = vmatpush1.msra.mxu0 0.0
    %1437 = vmatprep.subr.mxu0 0.0
    %1438 = vmatpush1.msra.mxu0 0.0
    %1439 = vmatprep.subr.mxu0 0.0
    %1440 = vmatpush1.msra.mxu0 0.0
    %1441 = vmatprep.subr.mxu0 0.0
    %1442 = vmatpush1.msra.mxu0 0.0
    %1443 = vmatprep.subr.mxu0 0.0
    %1444 = vmatpush1.msra.mxu0 0.0
    %1445 = vmatprep.subr.mxu0 0.0
    %1446 = vmatpush1.msra.mxu0 0.0
    %1447 = vmatprep.subr.mxu0 0.0
    %1448 = vmatpush1.msra.mxu0 0.0
    %1449 = vmatprep.mubr.f32.mxu0 0.0
    %1450 = vmatmul.mubr.f32.gmra.mrb[0].mxu0 %v1243
    %v1451 = vpop.f32.mrb[0].mxu0
    %v1452 = vadd.f32 %v651, %v1451
    %v1453 = vpop.f32.mrb[0].mxu0
    %1454 = vdwg.mxu0
    %v1456 = vrot.slane %v1312, 2
    %v1458 = vadd.f32 %v311, %v1456
    %v1459 = vxor.u32 %v1458, 2147483648
    %v1460 = vmul.f32 %v1459, 1.442695
    %v1461 = vpow.pop %v1460
    %v1462 = vadd.f32 %v1461, 1.0
    %v1463 = vrcp.pop %v1462
    %v1464 = vmul.f32 1.0, %v1463
    %v1466 = vrot.slane %v1382, 2
    %v1468 = vadd.f32 %v397, %v1466
    %v1469 = vxor.u32 %v1468, 2147483648
    %v1470 = vmul.f32 %v1469, 1.442695
    %v1471 = vpow.pop %v1470
    %v1472 = vadd.f32 %v1471, 1.0
    %v1473 = vrcp.pop %v1472
    %v1474 = vmul.f32 1.0, %v1473
    %v1476 = vrot.slane %v1452, 2
    %v1478 = vmul.f32 %v1464, %v1476
    %v1479 = vadd.f32 %v483, %v1478
    %v1480 = vtanh.pop %v1479
    %v1481 = vsub.f32 1.0, %v1474
    %v1482 = vmul.f32 %v1481, %v1480
    %v1483 = vrot.slane %v1238, 6
    %v1485 = vmul.f32 %v1474, %v1483
    %v1486 = vadd.f32 %v1482, %v1485
    %vm1487 = vcmask 261126
    %1488 = vst.msk [vmem:[#allocation3] sm:$0xc0] %vm1487, %v1486
    %v1490 = vrot.slane %v1486, 6
    %v1491 = vsel %vm237, %v1490, 0
    %1493 = vmatprep.subr.mxu0 0.0
    %1494 = vmatpush1.msra.mxu0 %v491
    %1495 = vmatprep.subr.mxu0 0.0
    %1496 = vmatpush1.msra.mxu0 %v492
    %1497 = vmatprep.subr.mxu0 0.0
    %1498 = vmatpush1.msra.mxu0 %v493
    %1499 = vmatprep.subr.mxu0 0.0
    %1500 = vmatpush1.msra.mxu0 %v494
    %1501 = vmatprep.subr.mxu0 0.0
    %1502 = vmatpush1.msra.mxu0 0.0
    %1503 = vmatprep.subr.mxu0 0.0
    %1504 = vmatpush1.msra.mxu0 0.0
    %1505 = vmatprep.subr.mxu0 0.0
    %1506 = vmatpush1.msra.mxu0 0.0
    %1507 = vmatprep.subr.mxu0 0.0
    %1508 = vmatpush1.msra.mxu0 0.0
    %1509 = vmatprep.subr.mxu0 0.0
    %1510 = vmatpush1.msra.mxu0 0.0
    %1511 = vmatprep.subr.mxu0 0.0
    %1512 = vmatpush1.msra.mxu0 0.0
    %1513 = vmatprep.subr.mxu0 0.0
    %1514 = vmatpush1.msra.mxu0 0.0
    %1515 = vmatprep.subr.mxu0 0.0
    %1516 = vmatpush1.msra.mxu0 0.0
    %1517 = vmatprep.subr.mxu0 0.0
    %1518 = vmatpush1.msra.mxu0 0.0
    %1519 = vmatprep.subr.mxu0 0.0
    %1520 = vmatpush1.msra.mxu0 0.0
    %1521 = vmatprep.subr.mxu0 0.0
    %1522 = vmatpush1.msra.mxu0 0.0
    %1523 = vmatprep.subr.mxu0 0.0
    %1524 = vmatpush1.msra.mxu0 0.0
    %1525 = vmatprep.subr.mxu0 0.0
    %1526 = vmatpush1.msra.mxu0 0.0
    %1527 = vmatprep.subr.mxu0 0.0
    %1528 = vmatpush1.msra.mxu0 0.0
    %1529 = vmatprep.subr.mxu0 0.0
    %1530 = vmatpush1.msra.mxu0 0.0
    %1531 = vmatprep.subr.mxu0 0.0
    %1532 = vmatpush1.msra.mxu0 0.0
    %1533 = vmatprep.subr.mxu0 0.0
    %1534 = vmatpush1.msra.mxu0 0.0
    %1535 = vmatprep.subr.mxu0 0.0
    %1536 = vmatpush1.msra.mxu0 0.0
    %1537 = vmatprep.subr.mxu0 0.0
    %1538 = vmatpush1.msra.mxu0 0.0
    %1539 = vmatprep.subr.mxu0 0.0
    %1540 = vmatpush1.msra.mxu0 0.0
    %1541 = vmatprep.subr.mxu0 0.0
    %1542 = vmatpush1.msra.mxu0 0.0
    %1543 = vmatprep.subr.mxu0 0.0
    %1544 = vmatpush1.msra.mxu0 0.0
    %1545 = vmatprep.subr.mxu0 0.0
    %1546 = vmatpush1.msra.mxu0 0.0
    %1547 = vmatprep.subr.mxu0 0.0
    %1548 = vmatpush1.msra.mxu0 0.0
    %1549 = vmatprep.subr.mxu0 0.0
    %1550 = vmatpush1.msra.mxu0 0.0
    %1551 = vmatprep.subr.mxu0 0.0
    %1552 = vmatpush1.msra.mxu0 0.0
    %1553 = vmatprep.subr.mxu0 0.0
    %1554 = vmatpush1.msra.mxu0 0.0
    %1555 = vmatprep.subr.mxu0 0.0
    %1556 = vmatpush1.msra.mxu0 0.0
    %1557 = vmatprep.mubr.f32.mxu0 0.0
    %1558 = vmatmul.mubr.f32.gmra.mrb[0].mxu0 %v1491
    %v1559 = vpop.f32.mrb[0].mxu0
    %v1560 = vadd.f32 0.0, %v1559
    %v1561 = vpop.f32.mrb[0].mxu0
    %1562 = vdwg.mxu0
    %1563 = vmatprep.subr.mxu0 0.0
    %1564 = vmatpush1.msra.mxu0 %v495
    %1565 = vmatprep.subr.mxu0 0.0
    %1566 = vmatpush1.msra.mxu0 %v496
    %1567 = vmatprep.subr.mxu0 0.0
    %1568 = vmatpush1.msra.mxu0 %v497
    %1569 = vmatprep.subr.mxu0 0.0
    %1570 = vmatpush1.msra.mxu0 %v498
    %1571 = vmatprep.subr.mxu0 0.0
    %1572 = vmatpush1.msra.mxu0 0.0
    %1573 = vmatprep.subr.mxu0 0.0
    %1574 = vmatpush1.msra.mxu0 0.0
    %1575 = vmatprep.subr.mxu0 0.0
    %1576 = vmatpush1.msra.mxu0 0.0
    %1577 = vmatprep.subr.mxu0 0.0
    %1578 = vmatpush1.msra.mxu0 0.0
    %1579 = vmatprep.subr.mxu0 0.0
    %1580 = vmatpush1.msra.mxu0 0.0
    %1581 = vmatprep.subr.mxu0 0.0
    %1582 = vmatpush1.msra.mxu0 0.0
    %1583 = vmatprep.subr.mxu0 0.0
    %1584 = vmatpush1.msra.mxu0 0.0
    %1585 = vmatprep.subr.mxu0 0.0
    %1586 = vmatpush1.msra.mxu0 0.0
    %1587 = vmatprep.subr.mxu0 0.0
    %1588 = vmatpush1.msra.mxu0 0.0
    %1589 = vmatprep.subr.mxu0 0.0
    %1590 = vmatpush1.msra.mxu0 0.0
    %1591 = vmatprep.subr.mxu0 0.0
    %1592 = vmatpush1.msra.mxu0 0.0
    %1593 = vmatprep.subr.mxu0 0.0
    %1594 = vmatpush1.msra.mxu0 0.0
    %1595 = vmatprep.subr.mxu0 0.0
    %1596 = vmatpush1.msra.mxu0 0.0
    %1597 = vmatprep.subr.mxu0 0.0
    %1598 = vmatpush1.msra.mxu0 0.0
    %1599 = vmatprep.subr.mxu0 0.0
    %1600 = vmatpush1.msra.mxu0 0.0
    %1601 = vmatprep.subr.mxu0 0.0
    %1602 = vmatpush1.msra.mxu0 0.0
    %1603 = vmatprep.subr.mxu0 0.0
    %1604 = vmatpush1.msra.mxu0 0.0
    %1605 = vmatprep.subr.mxu0 0.0
    %1606 = vmatpush1.msra.mxu0 0.0
    %1607 = vmatprep.subr.mxu0 0.0
    %1608 = vmatpush1.msra.mxu0 0.0
    %1609 = vmatprep.subr.mxu0 0.0
    %1610 = vmatpush1.msra.mxu0 0.0
    %1611 = vmatprep.subr.mxu0 0.0
    %1612 = vmatpush1.msra.mxu0 0.0
    %1613 = vmatprep.subr.mxu0 0.0
    %1614 = vmatpush1.msra.mxu0 0.0
    %1615 = vmatprep.subr.mxu0 0.0
    %1616 = vmatpush1.msra.mxu0 0.0
    %1617 = vmatprep.subr.mxu0 0.0
    %1618 = vmatpush1.msra.mxu0 0.0
    %1619 = vmatprep.subr.mxu0 0.0
    %1620 = vmatpush1.msra.mxu0 0.0
    %1621 = vmatprep.subr.mxu0 0.0
    %1622 = vmatpush1.msra.mxu0 0.0
    %1623 = vmatprep.subr.mxu0 0.0
    %1624 = vmatpush1.msra.mxu0 0.0
    %1625 = vmatprep.subr.mxu0 0.0
    %1626 = vmatpush1.msra.mxu0 0.0
    %1627 = vmatprep.mubr.f32.mxu0 0.0
    %1628 = vmatmul.mubr.f32.gmra.mrb[0].mxu0 %v1491
    %v1629 = vpop.f32.mrb[0].mxu0
    %v1630 = vadd.f32 0.0, %v1629
    %v1631 = vpop.f32.mrb[0].mxu0
    %1632 = vdwg.mxu0
    %1633 = vmatprep.subr.mxu0 0.0
    %1634 = vmatpush1.msra.mxu0 %v499
    %1635 = vmatprep.subr.mxu0 0.0
    %1636 = vmatpush1.msra.mxu0 %v500
    %1637 = vmatprep.subr.mxu0 0.0
    %1638 = vmatpush1.msra.mxu0 %v501
    %1639 = vmatprep.subr.mxu0 0.0
    %1640 = vmatpush1.msra.mxu0 %v502
    %1641 = vmatprep.subr.mxu0 0.0
    %1642 = vmatpush1.msra.mxu0 0.0
    %1643 = vmatprep.subr.mxu0 0.0
    %1644 = vmatpush1.msra.mxu0 0.0
    %1645 = vmatprep.subr.mxu0 0.0
    %1646 = vmatpush1.msra.mxu0 0.0
    %1647 = vmatprep.subr.mxu0 0.0
    %1648 = vmatpush1.msra.mxu0 0.0
    %1649 = vmatprep.subr.mxu0 0.0
    %1650 = vmatpush1.msra.mxu0 0.0
    %1651 = vmatprep.subr.mxu0 0.0
    %1652 = vmatpush1.msra.mxu0 0.0
    %1653 = vmatprep.subr.mxu0 0.0
    %1654 = vmatpush1.msra.mxu0 0.0
    %1655 = vmatprep.subr.mxu0 0.0
    %1656 = vmatpush1.msra.mxu0 0.0
    %1657 = vmatprep.subr.mxu0 0.0
    %1658 = vmatpush1.msra.mxu0 0.0
    %1659 = vmatprep.subr.mxu0 0.0
    %1660 = vmatpush1.msra.mxu0 0.0
    %1661 = vmatprep.subr.mxu0 0.0
    %1662 = vmatpush1.msra.mxu0 0.0
    %1663 = vmatprep.subr.mxu0 0.0
    %1664 = vmatpush1.msra.mxu0 0.0
    %1665 = vmatprep.subr.mxu0 0.0
    %1666 = vmatpush1.msra.mxu0 0.0
    %1667 = vmatprep.subr.mxu0 0.0
    %1668 = vmatpush1.msra.mxu0 0.0
    %1669 = vmatprep.subr.mxu0 0.0
    %1670 = vmatpush1.msra.mxu0 0.0
    %1671 = vmatprep.subr.mxu0 0.0
    %1672 = vmatpush1.msra.mxu0 0.0
    %1673 = vmatprep.subr.mxu0 0.0
    %1674 = vmatpush1.msra.mxu0 0.0
    %1675 = vmatprep.subr.mxu0 0.0
    %1676 = vmatpush1.msra.mxu0 0.0
    %1677 = vmatprep.subr.mxu0 0.0
    %1678 = vmatpush1.msra.mxu0 0.0
    %1679 = vmatprep.subr.mxu0 0.0
    %1680 = vmatpush1.msra.mxu0 0.0
    %1681 = vmatprep.subr.mxu0 0.0
    %1682 = vmatpush1.msra.mxu0 0.0
    %1683 = vmatprep.subr.mxu0 0.0
    %1684 = vmatpush1.msra.mxu0 0.0
    %1685 = vmatprep.subr.mxu0 0.0
    %1686 = vmatpush1.msra.mxu0 0.0
    %1687 = vmatprep.subr.mxu0 0.0
    %1688 = vmatpush1.msra.mxu0 0.0
    %1689 = vmatprep.subr.mxu0 0.0
    %1690 = vmatpush1.msra.mxu0 0.0
    %1691 = vmatprep.subr.mxu0 0.0
    %1692 = vmatpush1.msra.mxu0 0.0
    %1693 = vmatprep.subr.mxu0 0.0
    %1694 = vmatpush1.msra.mxu0 0.0
    %1695 = vmatprep.subr.mxu0 0.0
    %1696 = vmatpush1.msra.mxu0 0.0
    %1697 = vmatprep.mubr.f32.mxu0 0.0
    %1698 = vmatmul.mubr.f32.gmra.mrb[0].mxu0 %v1491
    %v1699 = vpop.f32.mrb[0].mxu0
    %v1700 = vadd.f32 %v651, %v1699
    %v1701 = vpop.f32.mrb[0].mxu0
    %1702 = vdwg.mxu0
    %v1703 = vadd.f32 %v316, %v1560
    %v1704 = vxor.u32 %v1703, 2147483648
    %v1705 = vmul.f32 %v1704, 1.442695
    %v1706 = vpow.pop %v1705
    %v1707 = vadd.f32 %v1706, 1.0
    %v1708 = vrcp.pop %v1707
    %v1709 = vmul.f32 1.0, %v1708
    %v1710 = vadd.f32 %v402, %v1630
    %v1711 = vxor.u32 %v1710, 2147483648
    %v1712 = vmul.f32 %v1711, 1.442695
    %v1713 = vpow.pop %v1712
    %v1714 = vadd.f32 %v1713, 1.0
    %v1715 = vrcp.pop %v1714
    %v1716 = vmul.f32 1.0, %v1715
    %v1717 = vmul.f32 %v1709, %v1700
    %v1718 = vadd.f32 %v488, %v1717
    %v1719 = vtanh.pop %v1718
    %v1720 = vsub.f32 1.0, %v1716
    %v1721 = vmul.f32 %v1720, %v1719
    %v1723 = vmul.f32 %v1716, %v1490
    %v1724 = vadd.f32 %v1721, %v1723
    %1725 = vst.msk [vmem:[#allocation3 + $0x8] sm:$0x3] %vm744, %v1724
    %v1727 = vsel %vm237, %v1724, 0
    %1729 = vmatprep.subr.mxu0 0.0
    %1730 = vmatpush1.msra.mxu0 %v491
    %1731 = vmatprep.subr.mxu0 0.0
    %1732 = vmatpush1.msra.mxu0 %v492
    %1733 = vmatprep.subr.mxu0 0.0
    %1734 = vmatpush1.msra.mxu0 %v493
    %1735 = vmatprep.subr.mxu0 0.0
    %1736 = vmatpush1.msra.mxu0 %v494
    %1737 = vmatprep.subr.mxu0 0.0
    %1738 = vmatpush1.msra.mxu0 0.0
    %1739 = vmatprep.subr.mxu0 0.0
    %1740 = vmatpush1.msra.mxu0 0.0
    %1741 = vmatprep.subr.mxu0 0.0
    %1742 = vmatpush1.msra.mxu0 0.0
    %1743 = vmatprep.subr.mxu0 0.0
    %1744 = vmatpush1.msra.mxu0 0.0
    %1745 = vmatprep.subr.mxu0 0.0
    %1746 = vmatpush1.msra.mxu0 0.0
    %1747 = vmatprep.subr.mxu0 0.0
    %1748 = vmatpush1.msra.mxu0 0.0
    %1749 = vmatprep.subr.mxu0 0.0
    %1750 = vmatpush1.msra.mxu0 0.0
    %1751 = vmatprep.subr.mxu0 0.0
    %1752 = vmatpush1.msra.mxu0 0.0
    %1753 = vmatprep.subr.mxu0 0.0
    %1754 = vmatpush1.msra.mxu0 0.0
    %1755 = vmatprep.subr.mxu0 0.0
    %1756 = vmatpush1.msra.mxu0 0.0
    %1757 = vmatprep.subr.mxu0 0.0
    %1758 = vmatpush1.msra.mxu0 0.0
    %1759 = vmatprep.subr.mxu0 0.0
    %1760 = vmatpush1.msra.mxu0 0.0
    %1761 = vmatprep.subr.mxu0 0.0
    %1762 = vmatpush1.msra.mxu0 0.0
    %1763 = vmatprep.subr.mxu0 0.0
    %1764 = vmatpush1.msra.mxu0 0.0
    %1765 = vmatprep.subr.mxu0 0.0
    %1766 = vmatpush1.msra.mxu0 0.0
    %1767 = vmatprep.subr.mxu0 0.0
    %1768 = vmatpush1.msra.mxu0 0.0
    %1769 = vmatprep.subr.mxu0 0.0
    %1770 = vmatpush1.msra.mxu0 0.0
    %1771 = vmatprep.subr.mxu0 0.0
    %1772 = vmatpush1.msra.mxu0 0.0
    %1773 = vmatprep.subr.mxu0 0.0
    %1774 = vmatpush1.msra.mxu0 0.0
    %1775 = vmatprep.subr.mxu0 0.0
    %1776 = vmatpush1.msra.mxu0 0.0
    %1777 = vmatprep.subr.mxu0 0.0
    %1778 = vmatpush1.msra.mxu0 0.0
    %1779 = vmatprep.subr.mxu0 0.0
    %1780 = vmatpush1.msra.mxu0 0.0
    %1781 = vmatprep.subr.mxu0 0.0
    %1782 = vmatpush1.msra.mxu0 0.0
    %1783 = vmatprep.subr.mxu0 0.0
    %1784 = vmatpush1.msra.mxu0 0.0
    %1785 = vmatprep.subr.mxu0 0.0
    %1786 = vmatpush1.msra.mxu0 0.0
    %1787 = vmatprep.subr.mxu0 0.0
    %1788 = vmatpush1.msra.mxu0 0.0
    %1789 = vmatprep.subr.mxu0 0.0
    %1790 = vmatpush1.msra.mxu0 0.0
    %1791 = vmatprep.subr.mxu0 0.0
    %1792 = vmatpush1.msra.mxu0 0.0
    %1793 = vmatprep.mubr.f32.mxu0 0.0
    %1794 = vmatmul.mubr.f32.gmra.mrb[0].mxu0 %v1727
    %v1795 = vpop.f32.mrb[0].mxu0
    %v1796 = vadd.f32 0.0, %v1795
    %v1797 = vpop.f32.mrb[0].mxu0
    %1798 = vdwg.mxu0
    %1799 = vmatprep.subr.mxu0 0.0
    %1800 = vmatpush1.msra.mxu0 %v495
    %1801 = vmatprep.subr.mxu0 0.0
    %1802 = vmatpush1.msra.mxu0 %v496
    %1803 = vmatprep.subr.mxu0 0.0
    %1804 = vmatpush1.msra.mxu0 %v497
    %1805 = vmatprep.subr.mxu0 0.0
    %1806 = vmatpush1.msra.mxu0 %v498
    %1807 = vmatprep.subr.mxu0 0.0
    %1808 = vmatpush1.msra.mxu0 0.0
    %1809 = vmatprep.subr.mxu0 0.0
    %1810 = vmatpush1.msra.mxu0 0.0
    %1811 = vmatprep.subr.mxu0 0.0
    %1812 = vmatpush1.msra.mxu0 0.0
    %1813 = vmatprep.subr.mxu0 0.0
    %1814 = vmatpush1.msra.mxu0 0.0
    %1815 = vmatprep.subr.mxu0 0.0
    %1816 = vmatpush1.msra.mxu0 0.0
    %1817 = vmatprep.subr.mxu0 0.0
    %1818 = vmatpush1.msra.mxu0 0.0
    %1819 = vmatprep.subr.mxu0 0.0
    %1820 = vmatpush1.msra.mxu0 0.0
    %1821 = vmatprep.subr.mxu0 0.0
    %1822 = vmatpush1.msra.mxu0 0.0
    %1823 = vmatprep.subr.mxu0 0.0
    %1824 = vmatpush1.msra.mxu0 0.0
    %1825 = vmatprep.subr.mxu0 0.0
    %1826 = vmatpush1.msra.mxu0 0.0
    %1827 = vmatprep.subr.mxu0 0.0
    %1828 = vmatpush1.msra.mxu0 0.0
    %1829 = vmatprep.subr.mxu0 0.0
    %1830 = vmatpush1.msra.mxu0 0.0
    %1831 = vmatprep.subr.mxu0 0.0
    %1832 = vmatpush1.msra.mxu0 0.0
    %1833 = vmatprep.subr.mxu0 0.0
    %1834 = vmatpush1.msra.mxu0 0.0
    %1835 = vmatprep.subr.mxu0 0.0
    %1836 = vmatpush1.msra.mxu0 0.0
    %1837 = vmatprep.subr.mxu0 0.0
    %1838 = vmatpush1.msra.mxu0 0.0
    %1839 = vmatprep.subr.mxu0 0.0
    %1840 = vmatpush1.msra.mxu0 0.0
    %1841 = vmatprep.subr.mxu0 0.0
    %1842 = vmatpush1.msra.mxu0 0.0
    %1843 = vmatprep.subr.mxu0 0.0
    %1844 = vmatpush1.msra.mxu0 0.0
    %1845 = vmatprep.subr.mxu0 0.0
    %1846 = vmatpush1.msra.mxu0 0.0
    %1847 = vmatprep.subr.mxu0 0.0
    %1848 = vmatpush1.msra.mxu0 0.0
    %1849 = vmatprep.subr.mxu0 0.0
    %1850 = vmatpush1.msra.mxu0 0.0
    %1851 = vmatprep.subr.mxu0 0.0
    %1852 = vmatpush1.msra.mxu0 0.0
    %1853 = vmatprep.subr.mxu0 0.0
    %1854 = vmatpush1.msra.mxu0 0.0
    %1855 = vmatprep.subr.mxu0 0.0
    %1856 = vmatpush1.msra.mxu0 0.0
    %1857 = vmatprep.subr.mxu0 0.0
    %1858 = vmatpush1.msra.mxu0 0.0
    %1859 = vmatprep.subr.mxu0 0.0
    %1860 = vmatpush1.msra.mxu0 0.0
    %1861 = vmatprep.subr.mxu0 0.0
    %1862 = vmatpush1.msra.mxu0 0.0
    %1863 = vmatprep.mubr.f32.mxu0 0.0
    %1864 = vmatmul.mubr.f32.gmra.mrb[0].mxu0 %v1727
    %v1865 = vpop.f32.mrb[0].mxu0
    %v1866 = vadd.f32 0.0, %v1865
    %v1867 = vpop.f32.mrb[0].mxu0
    %1868 = vdwg.mxu0
    %1869 = vmatprep.subr.mxu0 0.0
    %1870 = vmatpush1.msra.mxu0 %v499
    %1871 = vmatprep.subr.mxu0 0.0
    %1872 = vmatpush1.msra.mxu0 %v500
    %1873 = vmatprep.subr.mxu0 0.0
    %1874 = vmatpush1.msra.mxu0 %v501
    %1875 = vmatprep.subr.mxu0 0.0
    %1876 = vmatpush1.msra.mxu0 %v502
    %1877 = vmatprep.subr.mxu0 0.0
    %1878 = vmatpush1.msra.mxu0 0.0
    %1879 = vmatprep.subr.mxu0 0.0
    %1880 = vmatpush1.msra.mxu0 0.0
    %1881 = vmatprep.subr.mxu0 0.0
    %1882 = vmatpush1.msra.mxu0 0.0
    %1883 = vmatprep.subr.mxu0 0.0
    %1884 = vmatpush1.msra.mxu0 0.0
    %1885 = vmatprep.subr.mxu0 0.0
    %1886 = vmatpush1.msra.mxu0 0.0
    %1887 = vmatprep.subr.mxu0 0.0
    %1888 = vmatpush1.msra.mxu0 0.0
    %1889 = vmatprep.subr.mxu0 0.0
    %1890 = vmatpush1.msra.mxu0 0.0
    %1891 = vmatprep.subr.mxu0 0.0
    %1892 = vmatpush1.msra.mxu0 0.0
    %1893 = vmatprep.subr.mxu0 0.0
    %1894 = vmatpush1.msra.mxu0 0.0
    %1895 = vmatprep.subr.mxu0 0.0
    %1896 = vmatpush1.msra.mxu0 0.0
    %1897 = vmatprep.subr.mxu0 0.0
    %1898 = vmatpush1.msra.mxu0 0.0
    %1899 = vmatprep.subr.mxu0 0.0
    %1900 = vmatpush1.msra.mxu0 0.0
    %1901 = vmatprep.subr.mxu0 0.0
    %1902 = vmatpush1.msra.mxu0 0.0
    %1903 = vmatprep.subr.mxu0 0.0
    %1904 = vmatpush1.msra.mxu0 0.0
    %1905 = vmatprep.subr.mxu0 0.0
    %1906 = vmatpush1.msra.mxu0 0.0
    %1907 = vmatprep.subr.mxu0 0.0
    %1908 = vmatpush1.msra.mxu0 0.0
    %1909 = vmatprep.subr.mxu0 0.0
    %1910 = vmatpush1.msra.mxu0 0.0
    %1911 = vmatprep.subr.mxu0 0.0
    %1912 = vmatpush1.msra.mxu0 0.0
    %1913 = vmatprep.subr.mxu0 0.0
    %1914 = vmatpush1.msra.mxu0 0.0
    %1915 = vmatprep.subr.mxu0 0.0
    %1916 = vmatpush1.msra.mxu0 0.0
    %1917 = vmatprep.subr.mxu0 0.0
    %1918 = vmatpush1.msra.mxu0 0.0
    %1919 = vmatprep.subr.mxu0 0.0
    %1920 = vmatpush1.msra.mxu0 0.0
    %1921 = vmatprep.subr.mxu0 0.0
    %1922 = vmatpush1.msra.mxu0 0.0
    %1923 = vmatprep.subr.mxu0 0.0
    %1924 = vmatpush1.msra.mxu0 0.0
    %1925 = vmatprep.subr.mxu0 0.0
    %1926 = vmatpush1.msra.mxu0 0.0
    %1927 = vmatprep.subr.mxu0 0.0
    %1928 = vmatpush1.msra.mxu0 0.0
    %1929 = vmatprep.subr.mxu0 0.0
    %1930 = vmatpush1.msra.mxu0 0.0
    %1931 = vmatprep.subr.mxu0 0.0
    %1932 = vmatpush1.msra.mxu0 0.0
    %1933 = vmatprep.mubr.f32.mxu0 0.0
    %1934 = vmatmul.mubr.f32.gmra.mrb[0].mxu0 %v1727
    %v1935 = vpop.f32.mrb[0].mxu0
    %v1936 = vadd.f32 %v651, %v1935
    %v1937 = vpop.f32.mrb[0].mxu0
    %1938 = vdwg.mxu0
    %v1940 = vrot.slane %v1796, 6
    %v1942 = vadd.f32 %v316, %v1940
    %v1943 = vxor.u32 %v1942, 2147483648
    %v1944 = vmul.f32 %v1943, 1.442695
    %v1945 = vpow.pop %v1944
    %v1946 = vadd.f32 %v1945, 1.0
    %v1947 = vrcp.pop %v1946
    %v1948 = vmul.f32 1.0, %v1947
    %v1950 = vrot.slane %v1866, 6
    %v1952 = vadd.f32 %v402, %v1950
    %v1953 = vxor.u32 %v1952, 2147483648
    %v1954 = vmul.f32 %v1953, 1.442695
    %v1955 = vpow.pop %v1954
    %v1956 = vadd.f32 %v1955, 1.0
    %v1957 = vrcp.pop %v1956
    %v1958 = vmul.f32 1.0, %v1957
    %v1960 = vrot.slane %v1936, 6
    %v1962 = vmul.f32 %v1948, %v1960
    %v1963 = vadd.f32 %v488, %v1962
    %v1964 = vtanh.pop %v1963
    %v1965 = vsub.f32 1.0, %v1958
    %v1966 = vmul.f32 %v1965, %v1964
    %v1967 = vrot.slane %v1724, 6
    %v1969 = vmul.f32 %v1958, %v1967
    %v1970 = vadd.f32 %v1966, %v1969
    %1971 = vst.msk [vmem:[#allocation3 + $0x8] sm:$0xc] %vm991, %v1970
    %v1973 = vrot.slane %v1970, 2
    %v1974 = vsel %vm237, %v1973, 0
    %1976 = vmatprep.subr.mxu0 0.0
    %1977 = vmatpush1.msra.mxu0 %v491
    %1978 = vmatprep.subr.mxu0 0.0
    %1979 = vmatpush1.msra.mxu0 %v492
    %1980 = vmatprep.subr.mxu0 0.0
    %1981 = vmatpush1.msra.mxu0 %v493
    %1982 = vmatprep.subr.mxu0 0.0
    %1983 = vmatpush1.msra.mxu0 %v494
    %1984 = vmatprep.subr.mxu0 0.0
    %1985 = vmatpush1.msra.mxu0 0.0
    %1986 = vmatprep.subr.mxu0 0.0
    %1987 = vmatpush1.msra.mxu0 0.0
    %1988 = vmatprep.subr.mxu0 0.0
    %1989 = vmatpush1.msra.mxu0 0.0
    %1990 = vmatprep.subr.mxu0 0.0
    %1991 = vmatpush1.msra.mxu0 0.0
    %1992 = vmatprep.subr.mxu0 0.0
    %1993 = vmatpush1.msra.mxu0 0.0
    %1994 = vmatprep.subr.mxu0 0.0
    %1995 = vmatpush1.msra.mxu0 0.0
    %1996 = vmatprep.subr.mxu0 0.0
    %1997 = vmatpush1.msra.mxu0 0.0
    %1998 = vmatprep.subr.mxu0 0.0
    %1999 = vmatpush1.msra.mxu0 0.0
    %2000 = vmatprep.subr.mxu0 0.0
    %2001 = vmatpush1.msra.mxu0 0.0
    %2002 = vmatprep.subr.mxu0 0.0
    %2003 = vmatpush1.msra.mxu0 0.0
    %2004 = vmatprep.subr.mxu0 0.0
    %2005 = vmatpush1.msra.mxu0 0.0
    %2006 = vmatprep.subr.mxu0 0.0
    %2007 = vmatpush1.msra.mxu0 0.0
    %2008 = vmatprep.subr.mxu0 0.0
    %2009 = vmatpush1.msra.mxu0 0.0
    %2010 = vmatprep.subr.mxu0 0.0
    %2011 = vmatpush1.msra.mxu0 0.0
    %2012 = vmatprep.subr.mxu0 0.0
    %2013 = vmatpush1.msra.mxu0 0.0
    %2014 = vmatprep.subr.mxu0 0.0
    %2015 = vmatpush1.msra.mxu0 0.0
    %2016 = vmatprep.subr.mxu0 0.0
    %2017 = vmatpush1.msra.mxu0 0.0
    %2018 = vmatprep.subr.mxu0 0.0
    %2019 = vmatpush1.msra.mxu0 0.0
    %2020 = vmatprep.subr.mxu0 0.0
    %2021 = vmatpush1.msra.mxu0 0.0
    %2022 = vmatprep.subr.mxu0 0.0
    %2023 = vmatpush1.msra.mxu0 0.0
    %2024 = vmatprep.subr.mxu0 0.0
    %2025 = vmatpush1.msra.mxu0 0.0
    %2026 = vmatprep.subr.mxu0 0.0
    %2027 = vmatpush1.msra.mxu0 0.0
    %2028 = vmatprep.subr.mxu0 0.0
    %2029 = vmatpush1.msra.mxu0 0.0
    %2030 = vmatprep.subr.mxu0 0.0
    %2031 = vmatpush1.msra.mxu0 0.0
    %2032 = vmatprep.subr.mxu0 0.0
    %2033 = vmatpush1.msra.mxu0 0.0
    %2034 = vmatprep.subr.mxu0 0.0
    %2035 = vmatpush1.msra.mxu0 0.0
    %2036 = vmatprep.subr.mxu0 0.0
    %2037 = vmatpush1.msra.mxu0 0.0
    %2038 = vmatprep.subr.mxu0 0.0
    %2039 = vmatpush1.msra.mxu0 0.0
    %2040 = vmatprep.mubr.f32.mxu0 0.0
    %2041 = vmatmul.mubr.f32.gmra.mrb[0].mxu0 %v1974
    %v2042 = vpop.f32.mrb[0].mxu0
    %v2043 = vadd.f32 0.0, %v2042
    %v2044 = vpop.f32.mrb[0].mxu0
    %2045 = vdwg.mxu0
    %2046 = vmatprep.subr.mxu0 0.0
    %2047 = vmatpush1.msra.mxu0 %v495
    %2048 = vmatprep.subr.mxu0 0.0
    %2049 = vmatpush1.msra.mxu0 %v496
    %2050 = vmatprep.subr.mxu0 0.0
    %2051 = vmatpush1.msra.mxu0 %v497
    %2052 = vmatprep.subr.mxu0 0.0
    %2053 = vmatpush1.msra.mxu0 %v498
    %2054 = vmatprep.subr.mxu0 0.0
    %2055 = vmatpush1.msra.mxu0 0.0
    %2056 = vmatprep.subr.mxu0 0.0
    %2057 = vmatpush1.msra.mxu0 0.0
    %2058 = vmatprep.subr.mxu0 0.0
    %2059 = vmatpush1.msra.mxu0 0.0
    %2060 = vmatprep.subr.mxu0 0.0
    %2061 = vmatpush1.msra.mxu0 0.0
    %2062 = vmatprep.subr.mxu0 0.0
    %2063 = vmatpush1.msra.mxu0 0.0
    %2064 = vmatprep.subr.mxu0 0.0
    %2065 = vmatpush1.msra.mxu0 0.0
    %2066 = vmatprep.subr.mxu0 0.0
    %2067 = vmatpush1.msra.mxu0 0.0
    %2068 = vmatprep.subr.mxu0 0.0
    %2069 = vmatpush1.msra.mxu0 0.0
    %2070 = vmatprep.subr.mxu0 0.0
    %2071 = vmatpush1.msra.mxu0 0.0
    %2072 = vmatprep.subr.mxu0 0.0
    %2073 = vmatpush1.msra.mxu0 0.0
    %2074 = vmatprep.subr.mxu0 0.0
    %2075 = vmatpush1.msra.mxu0 0.0
    %2076 = vmatprep.subr.mxu0 0.0
    %2077 = vmatpush1.msra.mxu0 0.0
    %2078 = vmatprep.subr.mxu0 0.0
    %2079 = vmatpush1.msra.mxu0 0.0
    %2080 = vmatprep.subr.mxu0 0.0
    %2081 = vmatpush1.msra.mxu0 0.0
    %2082 = vmatprep.subr.mxu0 0.0
    %2083 = vmatpush1.msra.mxu0 0.0
    %2084 = vmatprep.subr.mxu0 0.0
    %2085 = vmatpush1.msra.mxu0 0.0
    %2086 = vmatprep.subr.mxu0 0.0
    %2087 = vmatpush1.msra.mxu0 0.0
    %2088 = vmatprep.subr.mxu0 0.0
    %2089 = vmatpush1.msra.mxu0 0.0
    %2090 = vmatprep.subr.mxu0 0.0
    %2091 = vmatpush1.msra.mxu0 0.0
    %2092 = vmatprep.subr.mxu0 0.0
    %2093 = vmatpush1.msra.mxu0 0.0
    %2094 = vmatprep.subr.mxu0 0.0
    %2095 = vmatpush1.msra.mxu0 0.0
    %2096 = vmatprep.subr.mxu0 0.0
    %2097 = vmatpush1.msra.mxu0 0.0
    %2098 = vmatprep.subr.mxu0 0.0
    %2099 = vmatpush1.msra.mxu0 0.0
    %2100 = vmatprep.subr.mxu0 0.0
    %2101 = vmatpush1.msra.mxu0 0.0
    %2102 = vmatprep.subr.mxu0 0.0
    %2103 = vmatpush1.msra.mxu0 0.0
    %2104 = vmatprep.subr.mxu0 0.0
    %2105 = vmatpush1.msra.mxu0 0.0
    %2106 = vmatprep.subr.mxu0 0.0
    %2107 = vmatpush1.msra.mxu0 0.0
    %2108 = vmatprep.subr.mxu0 0.0
    %2109 = vmatpush1.msra.mxu0 0.0
    %2110 = vmatprep.mubr.f32.mxu0 0.0
    %2111 = vmatmul.mubr.f32.gmra.mrb[0].mxu0 %v1974
    %v2112 = vpop.f32.mrb[0].mxu0
    %v2113 = vadd.f32 0.0, %v2112
    %v2114 = vpop.f32.mrb[0].mxu0
    %2115 = vdwg.mxu0
    %2116 = vmatprep.subr.mxu0 0.0
    %2117 = vmatpush1.msra.mxu0 %v499
    %2118 = vmatprep.subr.mxu0 0.0
    %2119 = vmatpush1.msra.mxu0 %v500
    %2120 = vmatprep.subr.mxu0 0.0
    %2121 = vmatpush1.msra.mxu0 %v501
    %2122 = vmatprep.subr.mxu0 0.0
    %2123 = vmatpush1.msra.mxu0 %v502
    %2124 = vmatprep.subr.mxu0 0.0
    %2125 = vmatpush1.msra.mxu0 0.0
    %2126 = vmatprep.subr.mxu0 0.0
    %2127 = vmatpush1.msra.mxu0 0.0
    %2128 = vmatprep.subr.mxu0 0.0
    %2129 = vmatpush1.msra.mxu0 0.0
    %2130 = vmatprep.subr.mxu0 0.0
    %2131 = vmatpush1.msra.mxu0 0.0
    %2132 = vmatprep.subr.mxu0 0.0
    %2133 = vmatpush1.msra.mxu0 0.0
    %2134 = vmatprep.subr.mxu0 0.0
    %2135 = vmatpush1.msra.mxu0 0.0
    %2136 = vmatprep.subr.mxu0 0.0
    %2137 = vmatpush1.msra.mxu0 0.0
    %2138 = vmatprep.subr.mxu0 0.0
    %2139 = vmatpush1.msra.mxu0 0.0
    %2140 = vmatprep.subr.mxu0 0.0
    %2141 = vmatpush1.msra.mxu0 0.0
    %2142 = vmatprep.subr.mxu0 0.0
    %2143 = vmatpush1.msra.mxu0 0.0
    %2144 = vmatprep.subr.mxu0 0.0
    %2145 = vmatpush1.msra.mxu0 0.0
    %2146 = vmatprep.subr.mxu0 0.0
    %2147 = vmatpush1.msra.mxu0 0.0
    %2148 = vmatprep.subr.mxu0 0.0
    %2149 = vmatpush1.msra.mxu0 0.0
    %2150 = vmatprep.subr.mxu0 0.0
    %2151 = vmatpush1.msra.mxu0 0.0
    %2152 = vmatprep.subr.mxu0 0.0
    %2153 = vmatpush1.msra.mxu0 0.0
    %2154 = vmatprep.subr.mxu0 0.0
    %2155 = vmatpush1.msra.mxu0 0.0
    %2156 = vmatprep.subr.mxu0 0.0
    %2157 = vmatpush1.msra.mxu0 0.0
    %2158 = vmatprep.subr.mxu0 0.0
    %2159 = vmatpush1.msra.mxu0 0.0
    %2160 = vmatprep.subr.mxu0 0.0
    %2161 = vmatpush1.msra.mxu0 0.0
    %2162 = vmatprep.subr.mxu0 0.0
    %2163 = vmatpush1.msra.mxu0 0.0
    %2164 = vmatprep.subr.mxu0 0.0
    %2165 = vmatpush1.msra.mxu0 0.0
    %2166 = vmatprep.subr.mxu0 0.0
    %2167 = vmatpush1.msra.mxu0 0.0
    %2168 = vmatprep.subr.mxu0 0.0
    %2169 = vmatpush1.msra.mxu0 0.0
    %2170 = vmatprep.subr.mxu0 0.0
    %2171 = vmatpush1.msra.mxu0 0.0
    %2172 = vmatprep.subr.mxu0 0.0
    %2173 = vmatpush1.msra.mxu0 0.0
    %2174 = vmatprep.subr.mxu0 0.0
    %2175 = vmatpush1.msra.mxu0 0.0
    %2176 = vmatprep.subr.mxu0 0.0
    %2177 = vmatpush1.msra.mxu0 0.0
    %2178 = vmatprep.subr.mxu0 0.0
    %2179 = vmatpush1.msra.mxu0 0.0
    %2180 = vmatprep.mubr.f32.mxu0 0.0
    %2181 = vmatmul.mubr.f32.gmra.mrb[0].mxu0 %v1974
    %v2182 = vpop.f32.mrb[0].mxu0
    %v2183 = vadd.f32 %v651, %v2182
    %v2184 = vpop.f32.mrb[0].mxu0
    %2185 = vdwg.mxu0
    %v2187 = vrot.slane %v2043, 4
    %v2189 = vadd.f32 %v316, %v2187
    %v2190 = vxor.u32 %v2189, 2147483648
    %v2191 = vmul.f32 %v2190, 1.442695
    %v2192 = vpow.pop %v2191
    %v2193 = vadd.f32 %v2192, 1.0
    %v2194 = vrcp.pop %v2193
    %v2195 = vmul.f32 1.0, %v2194
    %v2197 = vrot.slane %v2113, 4
    %v2199 = vadd.f32 %v402, %v2197
    %v2200 = vxor.u32 %v2199, 2147483648
    %v2201 = vmul.f32 %v2200, 1.442695
    %v2202 = vpow.pop %v2201
    %v2203 = vadd.f32 %v2202, 1.0
    %v2204 = vrcp.pop %v2203
    %v2205 = vmul.f32 1.0, %v2204
    %v2207 = vrot.slane %v2183, 4
    %v2209 = vmul.f32 %v2195, %v2207
    %v2210 = vadd.f32 %v488, %v2209
    %v2211 = vtanh.pop %v2210
    %v2212 = vsub.f32 1.0, %v2205
    %v2213 = vmul.f32 %v2212, %v2211
    %v2214 = vrot.slane %v1970, 6
    %v2216 = vmul.f32 %v2205, %v2214
    %v2217 = vadd.f32 %v2213, %v2216
    %2218 = vst.msk [vmem:[#allocation3 + $0x8] sm:$0x30] %vm1239, %v2217
    %v2220 = vrot.slane %v2217, 4
    %v2221 = vsel %vm237, %v2220, 0
    %2223 = vmatprep.subr.mxu0 0.0
    %2224 = vmatpush1.msra.mxu0 %v491
    %2225 = vmatprep.subr.mxu0 0.0
    %2226 = vmatpush1.msra.mxu0 %v492
    %2227 = vmatprep.subr.mxu0 0.0
    %2228 = vmatpush1.msra.mxu0 %v493
    %2229 = vmatprep.subr.mxu0 0.0
    %2230 = vmatpush1.msra.mxu0 %v494
    %2231 = vmatprep.subr.mxu0 0.0
    %2232 = vmatpush1.msra.mxu0 0.0
    %2233 = vmatprep.subr.mxu0 0.0
    %2234 = vmatpush1.msra.mxu0 0.0
    %2235 = vmatprep.subr.mxu0 0.0
    %2236 = vmatpush1.msra.mxu0 0.0
    %2237 = vmatprep.subr.mxu0 0.0
    %2238 = vmatpush1.msra.mxu0 0.0
    %2239 = vmatprep.subr.mxu0 0.0
    %2240 = vmatpush1.msra.mxu0 0.0
    %2241 = vmatprep.subr.mxu0 0.0
    %2242 = vmatpush1.msra.mxu0 0.0
    %2243 = vmatprep.subr.mxu0 0.0
    %2244 = vmatpush1.msra.mxu0 0.0
    %2245 = vmatprep.subr.mxu0 0.0
    %2246 = vmatpush1.msra.mxu0 0.0
    %2247 = vmatprep.subr.mxu0 0.0
    %2248 = vmatpush1.msra.mxu0 0.0
    %2249 = vmatprep.subr.mxu0 0.0
    %2250 = vmatpush1.msra.mxu0 0.0
    %2251 = vmatprep.subr.mxu0 0.0
    %2252 = vmatpush1.msra.mxu0 0.0
    %2253 = vmatprep.subr.mxu0 0.0
    %2254 = vmatpush1.msra.mxu0 0.0
    %2255 = vmatprep.subr.mxu0 0.0
    %2256 = vmatpush1.msra.mxu0 0.0
    %2257 = vmatprep.subr.mxu0 0.0
    %2258 = vmatpush1.msra.mxu0 0.0
    %2259 = vmatprep.subr.mxu0 0.0
    %2260 = vmatpush1.msra.mxu0 0.0
    %2261 = vmatprep.subr.mxu0 0.0
    %2262 = vmatpush1.msra.mxu0 0.0
    %2263 = vmatprep.subr.mxu0 0.0
    %2264 = vmatpush1.msra.mxu0 0.0
    %2265 = vmatprep.subr.mxu0 0.0
    %2266 = vmatpush1.msra.mxu0 0.0
    %2267 = vmatprep.subr.mxu0 0.0
    %2268 = vmatpush1.msra.mxu0 0.0
    %2269 = vmatprep.subr.mxu0 0.0
    %2270 = vmatpush1.msra.mxu0 0.0
    %2271 = vmatprep.subr.mxu0 0.0
    %2272 = vmatpush1.msra.mxu0 0.0
    %2273 = vmatprep.subr.mxu0 0.0
    %2274 = vmatpush1.msra.mxu0 0.0
    %2275 = vmatprep.subr.mxu0 0.0
    %2276 = vmatpush1.msra.mxu0 0.0
    %2277 = vmatprep.subr.mxu0 0.0
    %2278 = vmatpush1.msra.mxu0 0.0
    %2279 = vmatprep.subr.mxu0 0.0
    %2280 = vmatpush1.msra.mxu0 0.0
    %2281 = vmatprep.subr.mxu0 0.0
    %2282 = vmatpush1.msra.mxu0 0.0
    %2283 = vmatprep.subr.mxu0 0.0
    %2284 = vmatpush1.msra.mxu0 0.0
    %2285 = vmatprep.subr.mxu0 0.0
    %2286 = vmatpush1.msra.mxu0 0.0
    %2287 = vmatprep.mubr.f32.mxu0 0.0
    %2288 = vmatmul.mubr.f32.gmra.mrb[0].mxu0 %v2221
    %v2289 = vpop.f32.mrb[0].mxu0
    %v2290 = vadd.f32 0.0, %v2289
    %v2291 = vpop.f32.mrb[0].mxu0
    %2292 = vdwg.mxu0
    %2293 = vmatprep.subr.mxu0 0.0
    %2294 = vmatpush1.msra.mxu0 %v495
    %2295 = vmatprep.subr.mxu0 0.0
    %2296 = vmatpush1.msra.mxu0 %v496
    %2297 = vmatprep.subr.mxu0 0.0
    %2298 = vmatpush1.msra.mxu0 %v497
    %2299 = vmatprep.subr.mxu0 0.0
    %2300 = vmatpush1.msra.mxu0 %v498
    %2301 = vmatprep.subr.mxu0 0.0
    %2302 = vmatpush1.msra.mxu0 0.0
    %2303 = vmatprep.subr.mxu0 0.0
    %2304 = vmatpush1.msra.mxu0 0.0
    %2305 = vmatprep.subr.mxu0 0.0
    %2306 = vmatpush1.msra.mxu0 0.0
    %2307 = vmatprep.subr.mxu0 0.0
    %2308 = vmatpush1.msra.mxu0 0.0
    %2309 = vmatprep.subr.mxu0 0.0
    %2310 = vmatpush1.msra.mxu0 0.0
    %2311 = vmatprep.subr.mxu0 0.0
    %2312 = vmatpush1.msra.mxu0 0.0
    %2313 = vmatprep.subr.mxu0 0.0
    %2314 = vmatpush1.msra.mxu0 0.0
    %2315 = vmatprep.subr.mxu0 0.0
    %2316 = vmatpush1.msra.mxu0 0.0
    %2317 = vmatprep.subr.mxu0 0.0
    %2318 = vmatpush1.msra.mxu0 0.0
    %2319 = vmatprep.subr.mxu0 0.0
    %2320 = vmatpush1.msra.mxu0 0.0
    %2321 = vmatprep.subr.mxu0 0.0
    %2322 = vmatpush1.msra.mxu0 0.0
    %2323 = vmatprep.subr.mxu0 0.0
    %2324 = vmatpush1.msra.mxu0 0.0
    %2325 = vmatprep.subr.mxu0 0.0
    %2326 = vmatpush1.msra.mxu0 0.0
    %2327 = vmatprep.subr.mxu0 0.0
    %2328 = vmatpush1.msra.mxu0 0.0
    %2329 = vmatprep.subr.mxu0 0.0
    %2330 = vmatpush1.msra.mxu0 0.0
    %2331 = vmatprep.subr.mxu0 0.0
    %2332 = vmatpush1.msra.mxu0 0.0
    %2333 = vmatprep.subr.mxu0 0.0
    %2334 = vmatpush1.msra.mxu0 0.0
    %2335 = vmatprep.subr.mxu0 0.0
    %2336 = vmatpush1.msra.mxu0 0.0
    %2337 = vmatprep.subr.mxu0 0.0
    %2338 = vmatpush1.msra.mxu0 0.0
    %2339 = vmatprep.subr.mxu0 0.0
    %2340 = vmatpush1.msra.mxu0 0.0
    %2341 = vmatprep.subr.mxu0 0.0
    %2342 = vmatpush1.msra.mxu0 0.0
    %2343 = vmatprep.subr.mxu0 0.0
    %2344 = vmatpush1.msra.mxu0 0.0
    %2345 = vmatprep.subr.mxu0 0.0
    %2346 = vmatpush1.msra.mxu0 0.0
    %2347 = vmatprep.subr.mxu0 0.0
    %2348 = vmatpush1.msra.mxu0 0.0
    %2349 = vmatprep.subr.mxu0 0.0
    %2350 = vmatpush1.msra.mxu0 0.0
    %2351 = vmatprep.subr.mxu0 0.0
    %2352 = vmatpush1.msra.mxu0 0.0
    %2353 = vmatprep.subr.mxu0 0.0
    %2354 = vmatpush1.msra.mxu0 0.0
    %2355 = vmatprep.subr.mxu0 0.0
    %2356 = vmatpush1.msra.mxu0 0.0
    %2357 = vmatprep.mubr.f32.mxu0 0.0
    %2358 = vmatmul.mubr.f32.gmra.mrb[0].mxu0 %v2221
    %v2359 = vpop.f32.mrb[0].mxu0
    %v2360 = vadd.f32 0.0, %v2359
    %v2361 = vpop.f32.mrb[0].mxu0
    %2362 = vdwg.mxu0
    %2363 = vmatprep.subr.mxu0 0.0
    %2364 = vmatpush1.msra.mxu0 %v499
    %2365 = vmatprep.subr.mxu0 0.0
    %2366 = vmatpush1.msra.mxu0 %v500
    %2367 = vmatprep.subr.mxu0 0.0
    %2368 = vmatpush1.msra.mxu0 %v501
    %2369 = vmatprep.subr.mxu0 0.0
    %2370 = vmatpush1.msra.mxu0 %v502
    %2371 = vmatprep.subr.mxu0 0.0
    %2372 = vmatpush1.msra.mxu0 0.0
    %2373 = vmatprep.subr.mxu0 0.0
    %2374 = vmatpush1.msra.mxu0 0.0
    %2375 = vmatprep.subr.mxu0 0.0
    %2376 = vmatpush1.msra.mxu0 0.0
    %2377 = vmatprep.subr.mxu0 0.0
    %2378 = vmatpush1.msra.mxu0 0.0
    %2379 = vmatprep.subr.mxu0 0.0
    %2380 = vmatpush1.msra.mxu0 0.0
    %2381 = vmatprep.subr.mxu0 0.0
    %2382 = vmatpush1.msra.mxu0 0.0
    %2383 = vmatprep.subr.mxu0 0.0
    %2384 = vmatpush1.msra.mxu0 0.0
    %2385 = vmatprep.subr.mxu0 0.0
    %2386 = vmatpush1.msra.mxu0 0.0
    %2387 = vmatprep.subr.mxu0 0.0
    %2388 = vmatpush1.msra.mxu0 0.0
    %2389 = vmatprep.subr.mxu0 0.0
    %2390 = vmatpush1.msra.mxu0 0.0
    %2391 = vmatprep.subr.mxu0 0.0
    %2392 = vmatpush1.msra.mxu0 0.0
    %2393 = vmatprep.subr.mxu0 0.0
    %2394 = vmatpush1.msra.mxu0 0.0
    %2395 = vmatprep.subr.mxu0 0.0
    %2396 = vmatpush1.msra.mxu0 0.0
    %2397 = vmatprep.subr.mxu0 0.0
    %2398 = vmatpush1.msra.mxu0 0.0
    %2399 = vmatprep.subr.mxu0 0.0
    %2400 = vmatpush1.msra.mxu0 0.0
    %2401 = vmatprep.subr.mxu0 0.0
    %2402 = vmatpush1.msra.mxu0 0.0
    %2403 = vmatprep.subr.mxu0 0.0
    %2404 = vmatpush1.msra.mxu0 0.0
    %2405 = vmatprep.subr.mxu0 0.0
    %2406 = vmatpush1.msra.mxu0 0.0
    %2407 = vmatprep.subr.mxu0 0.0
    %2408 = vmatpush1.msra.mxu0 0.0
    %2409 = vmatprep.subr.mxu0 0.0
    %2410 = vmatpush1.msra.mxu0 0.0
    %2411 = vmatprep.subr.mxu0 0.0
    %2412 = vmatpush1.msra.mxu0 0.0
    %2413 = vmatprep.subr.mxu0 0.0
    %2414 = vmatpush1.msra.mxu0 0.0
    %2415 = vmatprep.subr.mxu0 0.0
    %2416 = vmatpush1.msra.mxu0 0.0
    %2417 = vmatprep.subr.mxu0 0.0
    %2418 = vmatpush1.msra.mxu0 0.0
    %2419 = vmatprep.subr.mxu0 0.0
    %2420 = vmatpush1.msra.mxu0 0.0
    %2421 = vmatprep.subr.mxu0 0.0
    %2422 = vmatpush1.msra.mxu0 0.0
    %2423 = vmatprep.subr.mxu0 0.0
    %2424 = vmatpush1.msra.mxu0 0.0
    %2425 = vmatprep.subr.mxu0 0.0
    %2426 = vmatpush1.msra.mxu0 0.0
    %2427 = vmatprep.mubr.f32.mxu0 0.0
    %2428 = vmatmul.mubr.f32.gmra.mrb[0].mxu0 %v2221
    %v2429 = vpop.f32.mrb[0].mxu0
    %v2430 = vadd.f32 %v651, %v2429
    %v2431 = vpop.f32.mrb[0].mxu0
    %2432 = vdwg.mxu0
    %v2434 = vrot.slane %v2290, 2
    %v2436 = vadd.f32 %v316, %v2434
    %v2437 = vxor.u32 %v2436, 2147483648
    %v2438 = vmul.f32 %v2437, 1.442695
    %v2439 = vpow.pop %v2438
    %v2440 = vadd.f32 %v2439, 1.0
    %v2441 = vrcp.pop %v2440
    %v2442 = vmul.f32 1.0, %v2441
    %v2444 = vrot.slane %v2360, 2
    %v2446 = vadd.f32 %v402, %v2444
    %v2447 = vxor.u32 %v2446, 2147483648
    %v2448 = vmul.f32 %v2447, 1.442695
    %v2449 = vpow.pop %v2448
    %v2450 = vadd.f32 %v2449, 1.0
    %v2451 = vrcp.pop %v2450
    %v2452 = vmul.f32 1.0, %v2451
    %v2454 = vrot.slane %v2430, 2
    %v2456 = vmul.f32 %v2442, %v2454
    %v2457 = vadd.f32 %v488, %v2456
    %v2458 = vtanh.pop %v2457
    %v2459 = vsub.f32 1.0, %v2452
    %v2460 = vmul.f32 %v2459, %v2458
    %v2461 = vrot.slane %v2217, 6
    %v2463 = vmul.f32 %v2452, %v2461
    %v2464 = vadd.f32 %v2460, %v2463
    %2465 = vst.msk [vmem:[#allocation3 + $0x8] sm:$0xc0] %vm1487, %v2464
    %v2466 = vld [vmem:[#allocation3] sm:$0xff]
    %v2467 = vld [vmem:[#allocation3 + $0x8] sm:$0xff]
    %v2468 = vld [vmem:[#allocation17] sm:$0xff]
    %v2469 = vld [vmem:[#allocation17 + $0x8] sm:$0xff]
    %v2470 = vld [vmem:[#allocation17 + $0x10] sm:$0xff]
    %v2471 = vld [vmem:[#allocation17 + $0x18] sm:$0xff]
    %v2472 = vld [vmem:[%s13] sm:$0x1]
    %v2474 = vlaneseq
    %v2475 = vshrl.u32 %v2474, 7
    %v2476 = vsub.s32 0, %v2475
    %v2477 = vrot.slane %v2472, %v2476
    %v2480 = vsel %vm237, %v2466, 0
    %v2483 = vsel %vm237, %v2467, 0
    %2485 = vmatprep.subr.mxu0 0.0
    %2486 = vmatpush1.msra.mxu0 %v2468
    %2487 = vmatprep.subr.mxu0 0.0
    %2488 = vmatpush1.msra.mxu0 %v2469
    %2489 = vmatprep.subr.mxu0 0.0
    %2490 = vmatpush1.msra.mxu0 %v2470
    %2491 = vmatprep.subr.mxu0 0.0
    %2492 = vmatpush1.msra.mxu0 %v2471
    %2493 = vmatprep.subr.mxu0 0.0
    %2494 = vmatpush1.msra.mxu0 0.0
    %2495 = vmatprep.subr.mxu0 0.0
    %2496 = vmatpush1.msra.mxu0 0.0
    %2497 = vmatprep.subr.mxu0 0.0
    %2498 = vmatpush1.msra.mxu0 0.0
    %2499 = vmatprep.subr.mxu0 0.0
    %2500 = vmatpush1.msra.mxu0 0.0
    %2501 = vmatprep.subr.mxu0 0.0
    %2502 = vmatpush1.msra.mxu0 0.0
    %2503 = vmatprep.subr.mxu0 0.0
    %2504 = vmatpush1.msra.mxu0 0.0
    %2505 = vmatprep.subr.mxu0 0.0
    %2506 = vmatpush1.msra.mxu0 0.0
    %2507 = vmatprep.subr.mxu0 0.0
    %2508 = vmatpush1.msra.mxu0 0.0
    %2509 = vmatprep.subr.mxu0 0.0
    %2510 = vmatpush1.msra.mxu0 0.0
    %2511 = vmatprep.subr.mxu0 0.0
    %2512 = vmatpush1.msra.mxu0 0.0
    %2513 = vmatprep.subr.mxu0 0.0
    %2514 = vmatpush1.msra.mxu0 0.0
    %2515 = vmatprep.subr.mxu0 0.0
    %2516 = vmatpush1.msra.mxu0 0.0
    %2517 = vmatprep.subr.mxu0 0.0
    %2518 = vmatpush1.msra.mxu0 0.0
    %2519 = vmatprep.subr.mxu0 0.0
    %2520 = vmatpush1.msra.mxu0 0.0
    %2521 = vmatprep.subr.mxu0 0.0
    %2522 = vmatpush1.msra.mxu0 0.0
    %2523 = vmatprep.subr.mxu0 0.0
    %2524 = vmatpush1.msra.mxu0 0.0
    %2525 = vmatprep.subr.mxu0 0.0
    %2526 = vmatpush1.msra.mxu0 0.0
    %2527 = vmatprep.subr.mxu0 0.0
    %2528 = vmatpush1.msra.mxu0 0.0
    %2529 = vmatprep.subr.mxu0 0.0
    %2530 = vmatpush1.msra.mxu0 0.0
    %2531 = vmatprep.subr.mxu0 0.0
    %2532 = vmatpush1.msra.mxu0 0.0
    %2533 = vmatprep.subr.mxu0 0.0
    %2534 = vmatpush1.msra.mxu0 0.0
    %2535 = vmatprep.subr.mxu0 0.0
    %2536 = vmatpush1.msra.mxu0 0.0
    %2537 = vmatprep.subr.mxu0 0.0
    %2538 = vmatpush1.msra.mxu0 0.0
    %2539 = vmatprep.subr.mxu0 0.0
    %2540 = vmatpush1.msra.mxu0 0.0
    %2541 = vmatprep.subr.mxu0 0.0
    %2542 = vmatpush1.msra.mxu0 0.0
    %2543 = vmatprep.subr.mxu0 0.0
    %2544 = vmatpush1.msra.mxu0 0.0
    %2545 = vmatprep.subr.mxu0 0.0
    %2546 = vmatpush1.msra.mxu0 0.0
    %2547 = vmatprep.subr.mxu0 0.0
    %2548 = vmatpush1.msra.mxu0 0.0
    %2549 = vmatprep.mubr.f32.mxu0 0.0
    %2550 = vmatmul.mubr.f32.gmra.mrb[0].mxu0 %v2480
    %v2551 = vpop.f32.mrb[0].mxu0
    %v2552 = vadd.f32 %v2477, %v2551
    %v2553 = vpop.f32.mrb[0].mxu0
    %2554 = vmatprep.mubr.f32.mxu0 0.0
    %2555 = vmatmul.mubr.f32.gmra.mrb[0].mxu0 %v2483
    %v2556 = vpop.f32.mrb[0].mxu0
    %v2557 = vadd.f32 %v2477, %v2556
    %v2558 = vpop.f32.mrb[0].mxu0
    %2559 = vdwg.mxu0
    %2560 = vst [vmem:[#allocation18] sm:$0xff] %v2552
    %2561 = vst [vmem:[#allocation18 + $0x8] sm:$0xff] %v2557
    %2562 = vst.msk [vmem:[#allocation19 - $0x6] sm:$0xc0] %vm1487, %v2464
    // Predicated region
    $region90: #{tpu_custom_call.1} parent=1 // pred_check
      _
    $region91: #{tpu_custom_call.1} parent=1 // pred_check_branch
      %2564 = sbr.rel (0) target = $region93
    $region92: #{tpu_custom_call.1} parent=1 // pred_region
      %s2566 = ssub.s32 256, 256
      %2567 = vsyncadd [#allocation6], %s2566
      %s2568 = sshll.u32 [#allocation18], 4
      %s2569 = int_to_ptr.vmem [resolvable:$true] %s2568
      %2574 = dma.vmem_to_hbm [thread:$0]  %s2569, 256, %s14, [#allocation6], 128, 128, 8
    $region93: #{tpu_custom_call.1} parent=1 // pred_fallthru
      _
    // Predicated region
    $region94: #{tpu_custom_call.1} parent=1 // pred_check
      _
    $region95: #{tpu_custom_call.1} parent=1 // pred_check_branch
      %2576 = sbr.rel (0) target = $region97
    $region96: #{tpu_custom_call.1} parent=1 // pred_region
      %s2578 = ssub.s32 32, 32
      %2579 = vsyncadd [#allocation20], %s2578
      %s2581 = sshll.u32 [#allocation19], 4
      %s2582 = int_to_ptr.vmem [resolvable:$true] %s2581
      %2584 = dma.vmem_to_hbm [thread:$0]  %s2582, 32, %s15, [#allocation20]
    $region97: #{tpu_custom_call.1} parent=1 // pred_fallthru
      _
    // Predicated region
    $region98: #{tpu_custom_call.1} parent=1 // pred_check
      _
    $region99: #{tpu_custom_call.1} parent=1 // pred_check_branch
      %2586 = sbr.rel (0) target = $region101
    $region100: #{tpu_custom_call.1} parent=1 // pred_region
      %2587 = dma.done [#allocation6], 256
    $region101: #{tpu_custom_call.1} parent=1 // pred_fallthru
      _
    // Predicated region
    $region102: #{tpu_custom_call.1} parent=1 // pred_check
      _
    $region103: #{tpu_custom_call.1} parent=1 // pred_check_branch
      %2589 = sbr.rel (0) target = $region105
    $region104: #{tpu_custom_call.1} parent=1 // pred_region
      %2590 = dma.done [#allocation20], 32
    $region105: #{tpu_custom_call.1} parent=1 // pred_fallthru
      _
    %2591 = vsyncpa [#allocation5], 1
    %2592 = vsyncpa [#allocation10], 1
    %2593 = vsyncpa [#allocation13], 1
    %2594 = vsyncpa [#allocation16], 1
    %2595 = vsyncpa [#allocation6], 1
    %2596 = vsyncpa [#allocation20], 1
    %2597 = vsyncpa [#allocation7], 1

</llo_original>
